<compile_context>
chip_gen: v6e
topology: v6e:2x2x1
jax: 0.10.0
libtpu: 0.0.40
codegen_flags: <defaults>
</compile_context>

<pallas_src>
import functools

import jax
import jax.numpy as jnp
from jax.experimental import pallas as pl
from jax.experimental.pallas import tpu as pltpu

CONV_OUT = 128
HIDDEN = 256
OUT_LANES = 128  # lane-dense output slab width (requires 1 + action_dim <= 128)


def _round_up(x, m):
    return ((x + m - 1) // m) * m


# ---------------------------------------------------------------------------
# Fused Pallas kernel
# ---------------------------------------------------------------------------
def _make_fused_kernel(action_dim):
    def kernel(x_ref, w1t_ref, b1_ref, w2_ref, b2_ref, wca_ref, bca_ref,
               whead_ref, bhead_ref, head_ref, probs_ref):
        # x_ref:    (W, TB, C)      input positions, channels on lanes
        # w1t_ref:  (C, 128)        conv1x1 weight (transposed)
        # w2_ref:   (W, 128, 256)   trunk Linear weight, per spatial position
        # wca_ref:  (256, 512)      [critic.L0 | actor.L0] fused first layers
        # whead_ref:(512, 128)      block-diag [critic.L2 -> lane 0 ; actor head -> lanes 1..A]
        # outputs:  head_ref (TB,128)  value@lane0, logits@lanes1..A, 0 elsewhere
        #           probs_ref (TB,128) probs@lanes1..A, 0 elsewhere
        width = x_ref.shape[0]
        b1 = b1_ref[...]                                   # (1, 128)

        # --- conv1x1 + ReLU and trunk contraction, unrolled over W ---------
        acc = None
        for wi in range(width):
            xw = x_ref[wi]                                 # (TB, C)
            h1 = jnp.dot(xw, w1t_ref[...],
                         preferred_element_type=jnp.float32) + b1
            h1 = jnp.maximum(h1, 0.0)                      # (TB, 128)
            part = jnp.dot(h1, w2_ref[wi],
                           preferred_element_type=jnp.float32)  # (TB, 256)
            acc = part if acc is None else acc + part

        feat = jnp.maximum(acc + b2_ref[...], 0.0)         # (TB, 256)

        # --- fused critic/actor first layers --------------------------------
        ca = jnp.dot(feat, wca_ref[...],
                     preferred_element_type=jnp.float32) + bca_ref[...]
        ca = jnp.maximum(ca, 0.0)                          # (TB, 512)

        # --- fused (block-diagonal) second layers: value + logits -----------
        head = jnp.dot(ca, whead_ref[...],
                       preferred_element_type=jnp.float32) + bhead_ref[...]
        head_ref[...] = head                               # dense (TB, 128) store

        # --- masked softmax over the logit lanes (1 .. action_dim) ----------
        lane = jax.lax.broadcasted_iota(jnp.int32, head.shape, 1)
        valid = (lane >= 1) & (lane < 1 + action_dim)
        masked = jnp.where(valid, head, -1e30)
        m = jnp.max(masked, axis=-1, keepdims=True)
        e = jnp.exp(masked - m)                            # 0 on invalid lanes
        s = jnp.sum(e, axis=-1, keepdims=True)
        probs_ref[...] = e * pl.reciprocal(s, approx=True)  # dense (TB, 128) store

    return kernel


# ---------------------------------------------------------------------------
# Forward pass (glue + fused kernel)
# ---------------------------------------------------------------------------
def ppo_aeris_grid_forward(kparams, state, action_dim, sample_key, tile_b=128):
    """state: (B, C, W) float32 (PyTorch NCW). Returns (value, action, probs)."""
    b, c, w = state.shape

    # batch tiling: tile must be a multiple of 8 (sublane); pad batch to tile
    tb = _round_up(max(8, min(tile_b, _round_up(b, 8))), 8)
    pb = _round_up(b, tb)

    # present channels on lanes per (w, b) position; pad batch with zeros
    # TODO(synk): at rollout-scale batches this XLA transpose is an extra HBM
    # pass; it could be folded into the kernel via a manual gather DMA.
    x = jnp.transpose(state, (2, 0, 1)).astype(jnp.float32)   # (W, B, C)
    if pb != b:
        x = jnp.pad(x, ((0, 0), (0, pb - b), (0, 0)))

    head, probs128 = pl.pallas_call(
        _make_fused_kernel(action_dim),
        out_shape=(jax.ShapeDtypeStruct((pb, OUT_LANES), jnp.float32),
                   jax.ShapeDtypeStruct((pb, OUT_LANES), jnp.float32)),
        grid=(pb // tb,),
        in_specs=[
            pl.BlockSpec((w, tb, c), lambda i: (0, i, 0)),              # x
            pl.BlockSpec((c, CONV_OUT), lambda i: (0, 0)),              # w1t
            pl.BlockSpec((1, CONV_OUT), lambda i: (0, 0)),              # b1
            pl.BlockSpec((w, CONV_OUT, HIDDEN), lambda i: (0, 0, 0)),   # w2_3d
            pl.BlockSpec((1, HIDDEN), lambda i: (0, 0)),                # b2
            pl.BlockSpec((HIDDEN, 2 * HIDDEN), lambda i: (0, 0)),       # wca
            pl.BlockSpec((1, 2 * HIDDEN), lambda i: (0, 0)),            # bca
            pl.BlockSpec((2 * HIDDEN, OUT_LANES), lambda i: (0, 0)),    # whead
            pl.BlockSpec((1, OUT_LANES), lambda i: (0, 0)),             # bhead
        ],
        out_specs=(pl.BlockSpec((tb, OUT_LANES), lambda i: (i, 0)),
                   pl.BlockSpec((tb, OUT_LANES), lambda i: (i, 0))),
        compiler_params=pltpu.CompilerParams(
            dimension_semantics=("parallel",),
            vmem_limit_bytes=32 * 1024 * 1024),
    )(x, kparams["w1t"], kparams["b1"], kparams["w2_3d"], kparams["b2"],
      kparams["wca"], kparams["bca"], kparams["whead"], kparams["bhead"])

    value = head[:b, 0:1]
    logits = head[:b, 1:1 + action_dim]
    probs = probs128[:b, 1:1 + action_dim]

    # Actor sampling (Categorical) + one-hot encode_action in plain JAX,
    # fed with raw logits (safer than log(probs)).
    action_idx = jax.random.categorical(sample_key, logits, axis=-1)
    action = jax.nn.one_hot(action_idx, action_dim, dtype=probs.dtype)
    return value, action, probs


# ---------------------------------------------------------------------------
# Parameter init (PyTorch convention shapes, deterministic orthogonal init)
# ---------------------------------------------------------------------------
def _orthogonal(key, shape, gain):
    return jax.nn.initializers.orthogonal(scale=gain)(key, shape, jnp.float32)


def init_params(key, input_shape, action_dim):
    c, w = input_shape
    ks = jax.random.split(key, 6)
    return {
        # features: Conv1d(C,128,k=1), Linear(W*128,256)   gain sqrt(2)
        "w1": _orthogonal(ks[0], (CONV_OUT, c), jnp.sqrt(2.0)),
        "b1": jnp.zeros((CONV_OUT,), jnp.float32),
        "w2": _orthogonal(ks[1], (HIDDEN, CONV_OUT * w), jnp.sqrt(2.0)),
        "b2": jnp.zeros((HIDDEN,), jnp.float32),
        # critic: Linear(256,256) gain sqrt(2); Linear(256,1) gain 0.01
        "wc1": _orthogonal(ks[2], (HIDDEN, HIDDEN), jnp.sqrt(2.0)),
        "bc1": jnp.zeros((HIDDEN,), jnp.float32),
        "wc2": _orthogonal(ks[3], (1, HIDDEN), 0.01),
        "bc2": jnp.zeros((1,), jnp.float32),
        # actor: Linear(256,256) gain 0.01; DiscreteHead Linear(256,A) gain 0.01
        "wa1": _orthogonal(ks[4], (HIDDEN, HIDDEN), 0.01),
        "ba1": jnp.zeros((HIDDEN,), jnp.float32),
        "wa2": _orthogonal(ks[5], (action_dim, HIDDEN), 0.01),
        "ba2": jnp.zeros((action_dim,), jnp.float32),
    }


def kernel_layout_params(params, width, action_dim):
    """Repack PyTorch-layout params into the fused-kernel layout."""
    assert 1 + action_dim <= OUT_LANES
    # Linear(W*128,256) weight: PyTorch flatten order -> col index = o*W + w.
    # Reshape to (W, 128, 256): w2_3d[w, o, h] = w2[h, o*W + w].
    w2_3d = params["w2"].reshape(HIDDEN, CONV_OUT, width).transpose(2, 1, 0)
    # fused critic/actor first layers
    wca = jnp.concatenate([params["wc1"].T, params["wa1"].T], axis=1)   # (256, 512)
    bca = jnp.concatenate([params["bc1"], params["ba1"]]).reshape(1, 2 * HIDDEN)
    # block-diagonal, lane-dense fused second layers
    whead = jnp.zeros((2 * HIDDEN, OUT_LANES), jnp.float32)
    whead = whead.at[:HIDDEN, 0:1].set(params["wc2"].T)                  # value lane
    whead = whead.at[HIDDEN:, 1:1 + action_dim].set(params["wa2"].T)     # logit lanes
    bhead = jnp.zeros((1, OUT_LANES), jnp.float32)
    bhead = bhead.at[0, 0].set(params["bc2"][0])
    bhead = bhead.at[0, 1:1 + action_dim].set(params["ba2"])
    return {
        "w1t": params["w1"].T,                      # (C, 128)
        "b1": params["b1"].reshape(1, CONV_OUT),
        "w2_3d": w2_3d,                             # (W, 128, 256)
        "b2": params["b2"].reshape(1, HIDDEN),
        "wca": wca, "bca": bca,
        "whead": whead, "bhead": bhead,
    }


# ---------------------------------------------------------------------------
# Pure-JAX reference of the PyTorch forward (sanity check)
# ---------------------------------------------------------------------------
def reference_forward(params, state):
    b, c, w = state.shape
    h = jnp.einsum("bcw,oc->bow", state, params["w1"]) + params["b1"][None, :, None]
    h = jnp.maximum(h, 0.0)
    flat = h.reshape(b, CONV_OUT * w)                      # channel-major flatten
    feat = jnp.maximum(flat @ params["w2"].T + params["b2"], 0.0)
    cmid = jnp.maximum(feat @ params["wc1"].T + params["bc1"], 0.0)
    value = cmid @ params["wc2"].T + params["bc2"]
    amid = jnp.maximum(feat @ params["wa1"].T + params["ba1"], 0.0)
    logits = amid @ params["wa2"].T + params["ba2"]
    probs = jax.nn.softmax(logits, axis=-1)
    return value, probs


if __name__ == "__main__":
    # Shapes consistent with the module: input_shape=(C, W)=(4, 16), action_dim=4.
    batch, channels, width, action_dim = 2, 4, 16, 4
    root = jax.random.PRNGKey(0)
    k_param, k_state, k_sample = jax.random.split(root, 3)

    params = init_params(k_param, (channels, width), action_dim)
    kparams = kernel_layout_params(params, width, action_dim)
    state = jax.random.normal(k_state, (batch, channels, width), jnp.float32)

    value, action, probs = ppo_aeris_grid_forward(kparams, state, action_dim, k_sample)
    (value, action, probs) = jax.block_until_ready((value, action, probs))

    v_ref, p_ref = reference_forward(params, state)
    assert value.shape == (batch, 1)
    assert action.shape == (batch, action_dim)
    assert probs.shape == (batch, action_dim)
    assert jnp.allclose(value, v_ref, atol=2e-2, rtol=2e-2)
    assert jnp.allclose(probs, p_ref, atol=2e-2, rtol=2e-2)
    assert jnp.allclose(jnp.sum(probs, axis=-1), 1.0, atol=1e-3)

    # Exercise the multi-tile (pipelined, parallel) grid path with a small tile.
    batch2 = 24
    state2 = jax.random.normal(jax.random.PRNGKey(1),
                               (batch2, channels, width), jnp.float32)
    v2, a2, p2 = ppo_aeris_grid_forward(kparams, state2, action_dim, k_sample,
                                        tile_b=8)
    (v2, a2, p2) = jax.block_until_ready((v2, a2, p2))
    v2_ref, p2_ref = reference_forward(params, state2)
    assert v2.shape == (batch2, 1) and p2.shape == (batch2, action_dim)
    assert jnp.allclose(v2, v2_ref, atol=2e-2, rtol=2e-2)
    assert jnp.allclose(p2, p2_ref, atol=2e-2, rtol=2e-2)

    print("KERNEL_OK")
</pallas_src>

<mosaic_0001>
module attributes {stable_mosaic.version = 11 : i64} {
  func.func @kernel(%arg0: i32, %arg1: memref<16x8x4xf32, #tpu.memory_space<vmem>>, %arg2: memref<4x128xf32, #tpu.memory_space<vmem>>, %arg3: memref<1x128xf32, #tpu.memory_space<vmem>>, %arg4: memref<16x128x256xf32, #tpu.memory_space<vmem>>, %arg5: memref<1x256xf32, #tpu.memory_space<vmem>>, %arg6: memref<256x512xf32, #tpu.memory_space<vmem>>, %arg7: memref<1x512xf32, #tpu.memory_space<vmem>>, %arg8: memref<512x128xf32, #tpu.memory_space<vmem>>, %arg9: memref<1x128xf32, #tpu.memory_space<vmem>>, %arg10: memref<8x128xf32, #tpu.memory_space<vmem>>, %arg11: memref<8x128xf32, #tpu.memory_space<vmem>>) attributes {dimension_semantics = [#tpu.dimension_semantics<parallel>], iteration_bounds = array<i64: 1>, scalar_prefetch = 0 : i64, scratch_operands = 0 : i64, tpu.core_type = #tpu.core_type<tc>, window_params = [{transform_indices = @transform_0, window_bounds = array<i64: 16, 8, 4>}, {pipeline_mode = #tpu.pipeline_mode<synchronous>, transform_indices = @transform_1, window_bounds = array<i64: 4, 128>}, {pipeline_mode = #tpu.pipeline_mode<synchronous>, transform_indices = @transform_2, window_bounds = array<i64: 1, 128>}, {pipeline_mode = #tpu.pipeline_mode<synchronous>, transform_indices = @transform_3, window_bounds = array<i64: 16, 128, 256>}, {pipeline_mode = #tpu.pipeline_mode<synchronous>, transform_indices = @transform_4, window_bounds = array<i64: 1, 256>}, {pipeline_mode = #tpu.pipeline_mode<synchronous>, transform_indices = @transform_5, window_bounds = array<i64: 256, 512>}, {pipeline_mode = #tpu.pipeline_mode<synchronous>, transform_indices = @transform_6, window_bounds = array<i64: 1, 512>}, {pipeline_mode = #tpu.pipeline_mode<synchronous>, transform_indices = @transform_7, window_bounds = array<i64: 512, 128>}, {pipeline_mode = #tpu.pipeline_mode<synchronous>, transform_indices = @transform_8, window_bounds = array<i64: 1, 128>}, {transform_indices = @transform_9, window_bounds = array<i64: 8, 128>}, {transform_indices = @transform_10, window_bounds = array<i64: 8, 128>}]} {
    %c0 = arith.constant 0 : index
    %c0_0 = arith.constant 0 : index
    %0 = vector.load %arg3[%c0, %c0_0] : memref<1x128xf32, #tpu.memory_space<vmem>>, vector<1x128xf32>
    %c0_1 = arith.constant 0 : index
    %c0_2 = arith.constant 0 : index
    %c0_3 = arith.constant 0 : index
    %1 = vector.load %arg1[%c0_1, %c0_2, %c0_3] : memref<16x8x4xf32, #tpu.memory_space<vmem>>, vector<1x8x4xf32>
    %2 = vector.shape_cast %1 : vector<1x8x4xf32> to vector<8x4xf32>
    %c0_4 = arith.constant 0 : index
    %c0_5 = arith.constant 0 : index
    %3 = vector.load %arg2[%c0_4, %c0_5] : memref<4x128xf32, #tpu.memory_space<vmem>>, vector<4x128xf32>
    %cst = arith.constant dense<0.000000e+00> : vector<8x128xf32>
    %4 = tpu.matmul %2, %3, %cst {dimension_numbers = #tpu.dot_dimension_numbers<[1], [0], [0], [1], [0, 0, 1, 1], [], []>} : vector<8x4xf32>, vector<4x128xf32>, vector<8x128xf32> -> vector<8x128xf32>
    %5 = vector.broadcast %0 : vector<1x128xf32> to vector<8x128xf32>
    %6 = arith.addf %4, %5 : vector<8x128xf32>
    %cst_6 = arith.constant 0.000000e+00 : f32
    %7 = vector.broadcast %cst_6 : f32 to vector<8x128xf32>
    %8 = arith.maximumf %6, %7 : vector<8x128xf32>
    %c0_7 = arith.constant 0 : index
    %c0_8 = arith.constant 0 : index
    %c0_9 = arith.constant 0 : index
    %9 = vector.load %arg4[%c0_7, %c0_8, %c0_9] : memref<16x128x256xf32, #tpu.memory_space<vmem>>, vector<1x128x256xf32>
    %10 = vector.shape_cast %9 : vector<1x128x256xf32> to vector<128x256xf32>
    %cst_10 = arith.constant dense<0.000000e+00> : vector<8x256xf32>
    %11 = tpu.matmul %8, %10, %cst_10 {dimension_numbers = #tpu.dot_dimension_numbers<[1], [0], [0], [1], [0, 0, 1, 1], [], []>} : vector<8x128xf32>, vector<128x256xf32>, vector<8x256xf32> -> vector<8x256xf32>
    %c1 = arith.constant 1 : index
    %c0_11 = arith.constant 0 : index
    %c0_12 = arith.constant 0 : index
    %12 = vector.load %arg1[%c1, %c0_11, %c0_12] : memref<16x8x4xf32, #tpu.memory_space<vmem>>, vector<1x8x4xf32>
    %13 = vector.shape_cast %12 : vector<1x8x4xf32> to vector<8x4xf32>
    %c0_13 = arith.constant 0 : index
    %c0_14 = arith.constant 0 : index
    %14 = vector.load %arg2[%c0_13, %c0_14] : memref<4x128xf32, #tpu.memory_space<vmem>>, vector<4x128xf32>
    %cst_15 = arith.constant dense<0.000000e+00> : vector<8x128xf32>
    %15 = tpu.matmul %13, %14, %cst_15 {dimension_numbers = #tpu.dot_dimension_numbers<[1], [0], [0], [1], [0, 0, 1, 1], [], []>} : vector<8x4xf32>, vector<4x128xf32>, vector<8x128xf32> -> vector<8x128xf32>
    %16 = vector.broadcast %0 : vector<1x128xf32> to vector<8x128xf32>
    %17 = arith.addf %15, %16 : vector<8x128xf32>
    %cst_16 = arith.constant 0.000000e+00 : f32
    %18 = vector.broadcast %cst_16 : f32 to vector<8x128xf32>
    %19 = arith.maximumf %17, %18 : vector<8x128xf32>
    %c1_17 = arith.constant 1 : index
    %c0_18 = arith.constant 0 : index
    %c0_19 = arith.constant 0 : index
    %20 = vector.load %arg4[%c1_17, %c0_18, %c0_19] : memref<16x128x256xf32, #tpu.memory_space<vmem>>, vector<1x128x256xf32>
    %21 = vector.shape_cast %20 : vector<1x128x256xf32> to vector<128x256xf32>
    %cst_20 = arith.constant dense<0.000000e+00> : vector<8x256xf32>
    %22 = tpu.matmul %19, %21, %cst_20 {dimension_numbers = #tpu.dot_dimension_numbers<[1], [0], [0], [1], [0, 0, 1, 1], [], []>} : vector<8x128xf32>, vector<128x256xf32>, vector<8x256xf32> -> vector<8x256xf32>
    %23 = arith.addf %11, %22 : vector<8x256xf32>
    %c2 = arith.constant 2 : index
    %c0_21 = arith.constant 0 : index
    %c0_22 = arith.constant 0 : index
    %24 = vector.load %arg1[%c2, %c0_21, %c0_22] : memref<16x8x4xf32, #tpu.memory_space<vmem>>, vector<1x8x4xf32>
    %25 = vector.shape_cast %24 : vector<1x8x4xf32> to vector<8x4xf32>
    %c0_23 = arith.constant 0 : index
    %c0_24 = arith.constant 0 : index
    %26 = vector.load %arg2[%c0_23, %c0_24] : memref<4x128xf32, #tpu.memory_space<vmem>>, vector<4x128xf32>
    %cst_25 = arith.constant dense<0.000000e+00> : vector<8x128xf32>
    %27 = tpu.matmul %25, %26, %cst_25 {dimension_numbers = #tpu.dot_dimension_numbers<[1], [0], [0], [1], [0, 0, 1, 1], [], []>} : vector<8x4xf32>, vector<4x128xf32>, vector<8x128xf32> -> vector<8x128xf32>
    %28 = vector.broadcast %0 : vector<1x128xf32> to vector<8x128xf32>
    %29 = arith.addf %27, %28 : vector<8x128xf32>
    %cst_26 = arith.constant 0.000000e+00 : f32
    %30 = vector.broadcast %cst_26 : f32 to vector<8x128xf32>
    %31 = arith.maximumf %29, %30 : vector<8x128xf32>
    %c2_27 = arith.constant 2 : index
    %c0_28 = arith.constant 0 : index
    %c0_29 = arith.constant 0 : index
    %32 = vector.load %arg4[%c2_27, %c0_28, %c0_29] : memref<16x128x256xf32, #tpu.memory_space<vmem>>, vector<1x128x256xf32>
    %33 = vector.shape_cast %32 : vector<1x128x256xf32> to vector<128x256xf32>
    %cst_30 = arith.constant dense<0.000000e+00> : vector<8x256xf32>
    %34 = tpu.matmul %31, %33, %cst_30 {dimension_numbers = #tpu.dot_dimension_numbers<[1], [0], [0], [1], [0, 0, 1, 1], [], []>} : vector<8x128xf32>, vector<128x256xf32>, vector<8x256xf32> -> vector<8x256xf32>
    %35 = arith.addf %23, %34 : vector<8x256xf32>
    %c3 = arith.constant 3 : index
    %c0_31 = arith.constant 0 : index
    %c0_32 = arith.constant 0 : index
    %36 = vector.load %arg1[%c3, %c0_31, %c0_32] : memref<16x8x4xf32, #tpu.memory_space<vmem>>, vector<1x8x4xf32>
    %37 = vector.shape_cast %36 : vector<1x8x4xf32> to vector<8x4xf32>
    %c0_33 = arith.constant 0 : index
    %c0_34 = arith.constant 0 : index
    %38 = vector.load %arg2[%c0_33, %c0_34] : memref<4x128xf32, #tpu.memory_space<vmem>>, vector<4x128xf32>
    %cst_35 = arith.constant dense<0.000000e+00> : vector<8x128xf32>
    %39 = tpu.matmul %37, %38, %cst_35 {dimension_numbers = #tpu.dot_dimension_numbers<[1], [0], [0], [1], [0, 0, 1, 1], [], []>} : vector<8x4xf32>, vector<4x128xf32>, vector<8x128xf32> -> vector<8x128xf32>
    %40 = vector.broadcast %0 : vector<1x128xf32> to vector<8x128xf32>
    %41 = arith.addf %39, %40 : vector<8x128xf32>
    %cst_36 = arith.constant 0.000000e+00 : f32
    %42 = vector.broadcast %cst_36 : f32 to vector<8x128xf32>
    %43 = arith.maximumf %41, %42 : vector<8x128xf32>
    %c3_37 = arith.constant 3 : index
    %c0_38 = arith.constant 0 : index
    %c0_39 = arith.constant 0 : index
    %44 = vector.load %arg4[%c3_37, %c0_38, %c0_39] : memref<16x128x256xf32, #tpu.memory_space<vmem>>, vector<1x128x256xf32>
    %45 = vector.shape_cast %44 : vector<1x128x256xf32> to vector<128x256xf32>
    %cst_40 = arith.constant dense<0.000000e+00> : vector<8x256xf32>
    %46 = tpu.matmul %43, %45, %cst_40 {dimension_numbers = #tpu.dot_dimension_numbers<[1], [0], [0], [1], [0, 0, 1, 1], [], []>} : vector<8x128xf32>, vector<128x256xf32>, vector<8x256xf32> -> vector<8x256xf32>
    %47 = arith.addf %35, %46 : vector<8x256xf32>
    %c4 = arith.constant 4 : index
    %c0_41 = arith.constant 0 : index
    %c0_42 = arith.constant 0 : index
    %48 = vector.load %arg1[%c4, %c0_41, %c0_42] : memref<16x8x4xf32, #tpu.memory_space<vmem>>, vector<1x8x4xf32>
    %49 = vector.shape_cast %48 : vector<1x8x4xf32> to vector<8x4xf32>
    %c0_43 = arith.constant 0 : index
    %c0_44 = arith.constant 0 : index
    %50 = vector.load %arg2[%c0_43, %c0_44] : memref<4x128xf32, #tpu.memory_space<vmem>>, vector<4x128xf32>
    %cst_45 = arith.constant dense<0.000000e+00> : vector<8x128xf32>
    %51 = tpu.matmul %49, %50, %cst_45 {dimension_numbers = #tpu.dot_dimension_numbers<[1], [0], [0], [1], [0, 0, 1, 1], [], []>} : vector<8x4xf32>, vector<4x128xf32>, vector<8x128xf32> -> vector<8x128xf32>
    %52 = vector.broadcast %0 : vector<1x128xf32> to vector<8x128xf32>
    %53 = arith.addf %51, %52 : vector<8x128xf32>
    %cst_46 = arith.constant 0.000000e+00 : f32
    %54 = vector.broadcast %cst_46 : f32 to vector<8x128xf32>
    %55 = arith.maximumf %53, %54 : vector<8x128xf32>
    %c4_47 = arith.constant 4 : index
    %c0_48 = arith.constant 0 : index
    %c0_49 = arith.constant 0 : index
    %56 = vector.load %arg4[%c4_47, %c0_48, %c0_49] : memref<16x128x256xf32, #tpu.memory_space<vmem>>, vector<1x128x256xf32>
    %57 = vector.shape_cast %56 : vector<1x128x256xf32> to vector<128x256xf32>
    %cst_50 = arith.constant dense<0.000000e+00> : vector<8x256xf32>
    %58 = tpu.matmul %55, %57, %cst_50 {dimension_numbers = #tpu.dot_dimension_numbers<[1], [0], [0], [1], [0, 0, 1, 1], [], []>} : vector<8x128xf32>, vector<128x256xf32>, vector<8x256xf32> -> vector<8x256xf32>
    %59 = arith.addf %47, %58 : vector<8x256xf32>
    %c5 = arith.constant 5 : index
    %c0_51 = arith.constant 0 : index
    %c0_52 = arith.constant 0 : index
    %60 = vector.load %arg1[%c5, %c0_51, %c0_52] : memref<16x8x4xf32, #tpu.memory_space<vmem>>, vector<1x8x4xf32>
    %61 = vector.shape_cast %60 : vector<1x8x4xf32> to vector<8x4xf32>
    %c0_53 = arith.constant 0 : index
    %c0_54 = arith.constant 0 : index
    %62 = vector.load %arg2[%c0_53, %c0_54] : memref<4x128xf32, #tpu.memory_space<vmem>>, vector<4x128xf32>
    %cst_55 = arith.constant dense<0.000000e+00> : vector<8x128xf32>
    %63 = tpu.matmul %61, %62, %cst_55 {dimension_numbers = #tpu.dot_dimension_numbers<[1], [0], [0], [1], [0, 0, 1, 1], [], []>} : vector<8x4xf32>, vector<4x128xf32>, vector<8x128xf32> -> vector<8x128xf32>
    %64 = vector.broadcast %0 : vector<1x128xf32> to vector<8x128xf32>
    %65 = arith.addf %63, %64 : vector<8x128xf32>
    %cst_56 = arith.constant 0.000000e+00 : f32
    %66 = vector.broadcast %cst_56 : f32 to vector<8x128xf32>
    %67 = arith.maximumf %65, %66 : vector<8x128xf32>
    %c5_57 = arith.constant 5 : index
    %c0_58 = arith.constant 0 : index
    %c0_59 = arith.constant 0 : index
    %68 = vector.load %arg4[%c5_57, %c0_58, %c0_59] : memref<16x128x256xf32, #tpu.memory_space<vmem>>, vector<1x128x256xf32>
    %69 = vector.shape_cast %68 : vector<1x128x256xf32> to vector<128x256xf32>
    %cst_60 = arith.constant dense<0.000000e+00> : vector<8x256xf32>
    %70 = tpu.matmul %67, %69, %cst_60 {dimension_numbers = #tpu.dot_dimension_numbers<[1], [0], [0], [1], [0, 0, 1, 1], [], []>} : vector<8x128xf32>, vector<128x256xf32>, vector<8x256xf32> -> vector<8x256xf32>
    %71 = arith.addf %59, %70 : vector<8x256xf32>
    %c6 = arith.constant 6 : index
    %c0_61 = arith.constant 0 : index
    %c0_62 = arith.constant 0 : index
    %72 = vector.load %arg1[%c6, %c0_61, %c0_62] : memref<16x8x4xf32, #tpu.memory_space<vmem>>, vector<1x8x4xf32>
    %73 = vector.shape_cast %72 : vector<1x8x4xf32> to vector<8x4xf32>
    %c0_63 = arith.constant 0 : index
    %c0_64 = arith.constant 0 : index
    %74 = vector.load %arg2[%c0_63, %c0_64] : memref<4x128xf32, #tpu.memory_space<vmem>>, vector<4x128xf32>
    %cst_65 = arith.constant dense<0.000000e+00> : vector<8x128xf32>
    %75 = tpu.matmul %73, %74, %cst_65 {dimension_numbers = #tpu.dot_dimension_numbers<[1], [0], [0], [1], [0, 0, 1, 1], [], []>} : vector<8x4xf32>, vector<4x128xf32>, vector<8x128xf32> -> vector<8x128xf32>
    %76 = vector.broadcast %0 : vector<1x128xf32> to vector<8x128xf32>
    %77 = arith.addf %75, %76 : vector<8x128xf32>
    %cst_66 = arith.constant 0.000000e+00 : f32
    %78 = vector.broadcast %cst_66 : f32 to vector<8x128xf32>
    %79 = arith.maximumf %77, %78 : vector<8x128xf32>
    %c6_67 = arith.constant 6 : index
    %c0_68 = arith.constant 0 : index
    %c0_69 = arith.constant 0 : index
    %80 = vector.load %arg4[%c6_67, %c0_68, %c0_69] : memref<16x128x256xf32, #tpu.memory_space<vmem>>, vector<1x128x256xf32>
    %81 = vector.shape_cast %80 : vector<1x128x256xf32> to vector<128x256xf32>
    %cst_70 = arith.constant dense<0.000000e+00> : vector<8x256xf32>
    %82 = tpu.matmul %79, %81, %cst_70 {dimension_numbers = #tpu.dot_dimension_numbers<[1], [0], [0], [1], [0, 0, 1, 1], [], []>} : vector<8x128xf32>, vector<128x256xf32>, vector<8x256xf32> -> vector<8x256xf32>
    %83 = arith.addf %71, %82 : vector<8x256xf32>
    %c7 = arith.constant 7 : index
    %c0_71 = arith.constant 0 : index
    %c0_72 = arith.constant 0 : index
    %84 = vector.load %arg1[%c7, %c0_71, %c0_72] : memref<16x8x4xf32, #tpu.memory_space<vmem>>, vector<1x8x4xf32>
    %85 = vector.shape_cast %84 : vector<1x8x4xf32> to vector<8x4xf32>
    %c0_73 = arith.constant 0 : index
    %c0_74 = arith.constant 0 : index
    %86 = vector.load %arg2[%c0_73, %c0_74] : memref<4x128xf32, #tpu.memory_space<vmem>>, vector<4x128xf32>
    %cst_75 = arith.constant dense<0.000000e+00> : vector<8x128xf32>
    %87 = tpu.matmul %85, %86, %cst_75 {dimension_numbers = #tpu.dot_dimension_numbers<[1], [0], [0], [1], [0, 0, 1, 1], [], []>} : vector<8x4xf32>, vector<4x128xf32>, vector<8x128xf32> -> vector<8x128xf32>
    %88 = vector.broadcast %0 : vector<1x128xf32> to vector<8x128xf32>
    %89 = arith.addf %87, %88 : vector<8x128xf32>
    %cst_76 = arith.constant 0.000000e+00 : f32
    %90 = vector.broadcast %cst_76 : f32 to vector<8x128xf32>
    %91 = arith.maximumf %89, %90 : vector<8x128xf32>
    %c7_77 = arith.constant 7 : index
    %c0_78 = arith.constant 0 : index
    %c0_79 = arith.constant 0 : index
    %92 = vector.load %arg4[%c7_77, %c0_78, %c0_79] : memref<16x128x256xf32, #tpu.memory_space<vmem>>, vector<1x128x256xf32>
    %93 = vector.shape_cast %92 : vector<1x128x256xf32> to vector<128x256xf32>
    %cst_80 = arith.constant dense<0.000000e+00> : vector<8x256xf32>
    %94 = tpu.matmul %91, %93, %cst_80 {dimension_numbers = #tpu.dot_dimension_numbers<[1], [0], [0], [1], [0, 0, 1, 1], [], []>} : vector<8x128xf32>, vector<128x256xf32>, vector<8x256xf32> -> vector<8x256xf32>
    %95 = arith.addf %83, %94 : vector<8x256xf32>
    %c8 = arith.constant 8 : index
    %c0_81 = arith.constant 0 : index
    %c0_82 = arith.constant 0 : index
    %96 = vector.load %arg1[%c8, %c0_81, %c0_82] : memref<16x8x4xf32, #tpu.memory_space<vmem>>, vector<1x8x4xf32>
    %97 = vector.shape_cast %96 : vector<1x8x4xf32> to vector<8x4xf32>
    %c0_83 = arith.constant 0 : index
    %c0_84 = arith.constant 0 : index
    %98 = vector.load %arg2[%c0_83, %c0_84] : memref<4x128xf32, #tpu.memory_space<vmem>>, vector<4x128xf32>
    %cst_85 = arith.constant dense<0.000000e+00> : vector<8x128xf32>
    %99 = tpu.matmul %97, %98, %cst_85 {dimension_numbers = #tpu.dot_dimension_numbers<[1], [0], [0], [1], [0, 0, 1, 1], [], []>} : vector<8x4xf32>, vector<4x128xf32>, vector<8x128xf32> -> vector<8x128xf32>
    %100 = vector.broadcast %0 : vector<1x128xf32> to vector<8x128xf32>
    %101 = arith.addf %99, %100 : vector<8x128xf32>
    %cst_86 = arith.constant 0.000000e+00 : f32
    %102 = vector.broadcast %cst_86 : f32 to vector<8x128xf32>
    %103 = arith.maximumf %101, %102 : vector<8x128xf32>
    %c8_87 = arith.constant 8 : index
    %c0_88 = arith.constant 0 : index
    %c0_89 = arith.constant 0 : index
    %104 = vector.load %arg4[%c8_87, %c0_88, %c0_89] : memref<16x128x256xf32, #tpu.memory_space<vmem>>, vector<1x128x256xf32>
    %105 = vector.shape_cast %104 : vector<1x128x256xf32> to vector<128x256xf32>
    %cst_90 = arith.constant dense<0.000000e+00> : vector<8x256xf32>
    %106 = tpu.matmul %103, %105, %cst_90 {dimension_numbers = #tpu.dot_dimension_numbers<[1], [0], [0], [1], [0, 0, 1, 1], [], []>} : vector<8x128xf32>, vector<128x256xf32>, vector<8x256xf32> -> vector<8x256xf32>
    %107 = arith.addf %95, %106 : vector<8x256xf32>
    %c9 = arith.constant 9 : index
    %c0_91 = arith.constant 0 : index
    %c0_92 = arith.constant 0 : index
    %108 = vector.load %arg1[%c9, %c0_91, %c0_92] : memref<16x8x4xf32, #tpu.memory_space<vmem>>, vector<1x8x4xf32>
    %109 = vector.shape_cast %108 : vector<1x8x4xf32> to vector<8x4xf32>
    %c0_93 = arith.constant 0 : index
    %c0_94 = arith.constant 0 : index
    %110 = vector.load %arg2[%c0_93, %c0_94] : memref<4x128xf32, #tpu.memory_space<vmem>>, vector<4x128xf32>
    %cst_95 = arith.constant dense<0.000000e+00> : vector<8x128xf32>
    %111 = tpu.matmul %109, %110, %cst_95 {dimension_numbers = #tpu.dot_dimension_numbers<[1], [0], [0], [1], [0, 0, 1, 1], [], []>} : vector<8x4xf32>, vector<4x128xf32>, vector<8x128xf32> -> vector<8x128xf32>
    %112 = vector.broadcast %0 : vector<1x128xf32> to vector<8x128xf32>
    %113 = arith.addf %111, %112 : vector<8x128xf32>
    %cst_96 = arith.constant 0.000000e+00 : f32
    %114 = vector.broadcast %cst_96 : f32 to vector<8x128xf32>
    %115 = arith.maximumf %113, %114 : vector<8x128xf32>
    %c9_97 = arith.constant 9 : index
    %c0_98 = arith.constant 0 : index
    %c0_99 = arith.constant 0 : index
    %116 = vector.load %arg4[%c9_97, %c0_98, %c0_99] : memref<16x128x256xf32, #tpu.memory_space<vmem>>, vector<1x128x256xf32>
    %117 = vector.shape_cast %116 : vector<1x128x256xf32> to vector<128x256xf32>
    %cst_100 = arith.constant dense<0.000000e+00> : vector<8x256xf32>
    %118 = tpu.matmul %115, %117, %cst_100 {dimension_numbers = #tpu.dot_dimension_numbers<[1], [0], [0], [1], [0, 0, 1, 1], [], []>} : vector<8x128xf32>, vector<128x256xf32>, vector<8x256xf32> -> vector<8x256xf32>
    %119 = arith.addf %107, %118 : vector<8x256xf32>
    %c10 = arith.constant 10 : index
    %c0_101 = arith.constant 0 : index
    %c0_102 = arith.constant 0 : index
    %120 = vector.load %arg1[%c10, %c0_101, %c0_102] : memref<16x8x4xf32, #tpu.memory_space<vmem>>, vector<1x8x4xf32>
    %121 = vector.shape_cast %120 : vector<1x8x4xf32> to vector<8x4xf32>
    %c0_103 = arith.constant 0 : index
    %c0_104 = arith.constant 0 : index
    %122 = vector.load %arg2[%c0_103, %c0_104] : memref<4x128xf32, #tpu.memory_space<vmem>>, vector<4x128xf32>
    %cst_105 = arith.constant dense<0.000000e+00> : vector<8x128xf32>
    %123 = tpu.matmul %121, %122, %cst_105 {dimension_numbers = #tpu.dot_dimension_numbers<[1], [0], [0], [1], [0, 0, 1, 1], [], []>} : vector<8x4xf32>, vector<4x128xf32>, vector<8x128xf32> -> vector<8x128xf32>
    %124 = vector.broadcast %0 : vector<1x128xf32> to vector<8x128xf32>
    %125 = arith.addf %123, %124 : vector<8x128xf32>
    %cst_106 = arith.constant 0.000000e+00 : f32
    %126 = vector.broadcast %cst_106 : f32 to vector<8x128xf32>
    %127 = arith.maximumf %125, %126 : vector<8x128xf32>
    %c10_107 = arith.constant 10 : index
    %c0_108 = arith.constant 0 : index
    %c0_109 = arith.constant 0 : index
    %128 = vector.load %arg4[%c10_107, %c0_108, %c0_109] : memref<16x128x256xf32, #tpu.memory_space<vmem>>, vector<1x128x256xf32>
    %129 = vector.shape_cast %128 : vector<1x128x256xf32> to vector<128x256xf32>
    %cst_110 = arith.constant dense<0.000000e+00> : vector<8x256xf32>
    %130 = tpu.matmul %127, %129, %cst_110 {dimension_numbers = #tpu.dot_dimension_numbers<[1], [0], [0], [1], [0, 0, 1, 1], [], []>} : vector<8x128xf32>, vector<128x256xf32>, vector<8x256xf32> -> vector<8x256xf32>
    %131 = arith.addf %119, %130 : vector<8x256xf32>
    %c11 = arith.constant 11 : index
    %c0_111 = arith.constant 0 : index
    %c0_112 = arith.constant 0 : index
    %132 = vector.load %arg1[%c11, %c0_111, %c0_112] : memref<16x8x4xf32, #tpu.memory_space<vmem>>, vector<1x8x4xf32>
    %133 = vector.shape_cast %132 : vector<1x8x4xf32> to vector<8x4xf32>
    %c0_113 = arith.constant 0 : index
    %c0_114 = arith.constant 0 : index
    %134 = vector.load %arg2[%c0_113, %c0_114] : memref<4x128xf32, #tpu.memory_space<vmem>>, vector<4x128xf32>
    %cst_115 = arith.constant dense<0.000000e+00> : vector<8x128xf32>
    %135 = tpu.matmul %133, %134, %cst_115 {dimension_numbers = #tpu.dot_dimension_numbers<[1], [0], [0], [1], [0, 0, 1, 1], [], []>} : vector<8x4xf32>, vector<4x128xf32>, vector<8x128xf32> -> vector<8x128xf32>
    %136 = vector.broadcast %0 : vector<1x128xf32> to vector<8x128xf32>
    %137 = arith.addf %135, %136 : vector<8x128xf32>
    %cst_116 = arith.constant 0.000000e+00 : f32
    %138 = vector.broadcast %cst_116 : f32 to vector<8x128xf32>
    %139 = arith.maximumf %137, %138 : vector<8x128xf32>
    %c11_117 = arith.constant 11 : index
    %c0_118 = arith.constant 0 : index
    %c0_119 = arith.constant 0 : index
    %140 = vector.load %arg4[%c11_117, %c0_118, %c0_119] : memref<16x128x256xf32, #tpu.memory_space<vmem>>, vector<1x128x256xf32>
    %141 = vector.shape_cast %140 : vector<1x128x256xf32> to vector<128x256xf32>
    %cst_120 = arith.constant dense<0.000000e+00> : vector<8x256xf32>
    %142 = tpu.matmul %139, %141, %cst_120 {dimension_numbers = #tpu.dot_dimension_numbers<[1], [0], [0], [1], [0, 0, 1, 1], [], []>} : vector<8x128xf32>, vector<128x256xf32>, vector<8x256xf32> -> vector<8x256xf32>
    %143 = arith.addf %131, %142 : vector<8x256xf32>
    %c12 = arith.constant 12 : index
    %c0_121 = arith.constant 0 : index
    %c0_122 = arith.constant 0 : index
    %144 = vector.load %arg1[%c12, %c0_121, %c0_122] : memref<16x8x4xf32, #tpu.memory_space<vmem>>, vector<1x8x4xf32>
    %145 = vector.shape_cast %144 : vector<1x8x4xf32> to vector<8x4xf32>
    %c0_123 = arith.constant 0 : index
    %c0_124 = arith.constant 0 : index
    %146 = vector.load %arg2[%c0_123, %c0_124] : memref<4x128xf32, #tpu.memory_space<vmem>>, vector<4x128xf32>
    %cst_125 = arith.constant dense<0.000000e+00> : vector<8x128xf32>
    %147 = tpu.matmul %145, %146, %cst_125 {dimension_numbers = #tpu.dot_dimension_numbers<[1], [0], [0], [1], [0, 0, 1, 1], [], []>} : vector<8x4xf32>, vector<4x128xf32>, vector<8x128xf32> -> vector<8x128xf32>
    %148 = vector.broadcast %0 : vector<1x128xf32> to vector<8x128xf32>
    %149 = arith.addf %147, %148 : vector<8x128xf32>
    %cst_126 = arith.constant 0.000000e+00 : f32
    %150 = vector.broadcast %cst_126 : f32 to vector<8x128xf32>
    %151 = arith.maximumf %149, %150 : vector<8x128xf32>
    %c12_127 = arith.constant 12 : index
    %c0_128 = arith.constant 0 : index
    %c0_129 = arith.constant 0 : index
    %152 = vector.load %arg4[%c12_127, %c0_128, %c0_129] : memref<16x128x256xf32, #tpu.memory_space<vmem>>, vector<1x128x256xf32>
    %153 = vector.shape_cast %152 : vector<1x128x256xf32> to vector<128x256xf32>
    %cst_130 = arith.constant dense<0.000000e+00> : vector<8x256xf32>
    %154 = tpu.matmul %151, %153, %cst_130 {dimension_numbers = #tpu.dot_dimension_numbers<[1], [0], [0], [1], [0, 0, 1, 1], [], []>} : vector<8x128xf32>, vector<128x256xf32>, vector<8x256xf32> -> vector<8x256xf32>
    %155 = arith.addf %143, %154 : vector<8x256xf32>
    %c13 = arith.constant 13 : index
    %c0_131 = arith.constant 0 : index
    %c0_132 = arith.constant 0 : index
    %156 = vector.load %arg1[%c13, %c0_131, %c0_132] : memref<16x8x4xf32, #tpu.memory_space<vmem>>, vector<1x8x4xf32>
    %157 = vector.shape_cast %156 : vector<1x8x4xf32> to vector<8x4xf32>
    %c0_133 = arith.constant 0 : index
    %c0_134 = arith.constant 0 : index
    %158 = vector.load %arg2[%c0_133, %c0_134] : memref<4x128xf32, #tpu.memory_space<vmem>>, vector<4x128xf32>
    %cst_135 = arith.constant dense<0.000000e+00> : vector<8x128xf32>
    %159 = tpu.matmul %157, %158, %cst_135 {dimension_numbers = #tpu.dot_dimension_numbers<[1], [0], [0], [1], [0, 0, 1, 1], [], []>} : vector<8x4xf32>, vector<4x128xf32>, vector<8x128xf32> -> vector<8x128xf32>
    %160 = vector.broadcast %0 : vector<1x128xf32> to vector<8x128xf32>
    %161 = arith.addf %159, %160 : vector<8x128xf32>
    %cst_136 = arith.constant 0.000000e+00 : f32
    %162 = vector.broadcast %cst_136 : f32 to vector<8x128xf32>
    %163 = arith.maximumf %161, %162 : vector<8x128xf32>
    %c13_137 = arith.constant 13 : index
    %c0_138 = arith.constant 0 : index
    %c0_139 = arith.constant 0 : index
    %164 = vector.load %arg4[%c13_137, %c0_138, %c0_139] : memref<16x128x256xf32, #tpu.memory_space<vmem>>, vector<1x128x256xf32>
    %165 = vector.shape_cast %164 : vector<1x128x256xf32> to vector<128x256xf32>
    %cst_140 = arith.constant dense<0.000000e+00> : vector<8x256xf32>
    %166 = tpu.matmul %163, %165, %cst_140 {dimension_numbers = #tpu.dot_dimension_numbers<[1], [0], [0], [1], [0, 0, 1, 1], [], []>} : vector<8x128xf32>, vector<128x256xf32>, vector<8x256xf32> -> vector<8x256xf32>
    %167 = arith.addf %155, %166 : vector<8x256xf32>
    %c14 = arith.constant 14 : index
    %c0_141 = arith.constant 0 : index
    %c0_142 = arith.constant 0 : index
    %168 = vector.load %arg1[%c14, %c0_141, %c0_142] : memref<16x8x4xf32, #tpu.memory_space<vmem>>, vector<1x8x4xf32>
    %169 = vector.shape_cast %168 : vector<1x8x4xf32> to vector<8x4xf32>
    %c0_143 = arith.constant 0 : index
    %c0_144 = arith.constant 0 : index
    %170 = vector.load %arg2[%c0_143, %c0_144] : memref<4x128xf32, #tpu.memory_space<vmem>>, vector<4x128xf32>
    %cst_145 = arith.constant dense<0.000000e+00> : vector<8x128xf32>
    %171 = tpu.matmul %169, %170, %cst_145 {dimension_numbers = #tpu.dot_dimension_numbers<[1], [0], [0], [1], [0, 0, 1, 1], [], []>} : vector<8x4xf32>, vector<4x128xf32>, vector<8x128xf32> -> vector<8x128xf32>
    %172 = vector.broadcast %0 : vector<1x128xf32> to vector<8x128xf32>
    %173 = arith.addf %171, %172 : vector<8x128xf32>
    %cst_146 = arith.constant 0.000000e+00 : f32
    %174 = vector.broadcast %cst_146 : f32 to vector<8x128xf32>
    %175 = arith.maximumf %173, %174 : vector<8x128xf32>
    %c14_147 = arith.constant 14 : index
    %c0_148 = arith.constant 0 : index
    %c0_149 = arith.constant 0 : index
    %176 = vector.load %arg4[%c14_147, %c0_148, %c0_149] : memref<16x128x256xf32, #tpu.memory_space<vmem>>, vector<1x128x256xf32>
    %177 = vector.shape_cast %176 : vector<1x128x256xf32> to vector<128x256xf32>
    %cst_150 = arith.constant dense<0.000000e+00> : vector<8x256xf32>
    %178 = tpu.matmul %175, %177, %cst_150 {dimension_numbers = #tpu.dot_dimension_numbers<[1], [0], [0], [1], [0, 0, 1, 1], [], []>} : vector<8x128xf32>, vector<128x256xf32>, vector<8x256xf32> -> vector<8x256xf32>
    %179 = arith.addf %167, %178 : vector<8x256xf32>
    %c15 = arith.constant 15 : index
    %c0_151 = arith.constant 0 : index
    %c0_152 = arith.constant 0 : index
    %180 = vector.load %arg1[%c15, %c0_151, %c0_152] : memref<16x8x4xf32, #tpu.memory_space<vmem>>, vector<1x8x4xf32>
    %181 = vector.shape_cast %180 : vector<1x8x4xf32> to vector<8x4xf32>
    %c0_153 = arith.constant 0 : index
    %c0_154 = arith.constant 0 : index
    %182 = vector.load %arg2[%c0_153, %c0_154] : memref<4x128xf32, #tpu.memory_space<vmem>>, vector<4x128xf32>
    %cst_155 = arith.constant dense<0.000000e+00> : vector<8x128xf32>
    %183 = tpu.matmul %181, %182, %cst_155 {dimension_numbers = #tpu.dot_dimension_numbers<[1], [0], [0], [1], [0, 0, 1, 1], [], []>} : vector<8x4xf32>, vector<4x128xf32>, vector<8x128xf32> -> vector<8x128xf32>
    %184 = vector.broadcast %0 : vector<1x128xf32> to vector<8x128xf32>
    %185 = arith.addf %183, %184 : vector<8x128xf32>
    %cst_156 = arith.constant 0.000000e+00 : f32
    %186 = vector.broadcast %cst_156 : f32 to vector<8x128xf32>
    %187 = arith.maximumf %185, %186 : vector<8x128xf32>
    %c15_157 = arith.constant 15 : index
    %c0_158 = arith.constant 0 : index
    %c0_159 = arith.constant 0 : index
    %188 = vector.load %arg4[%c15_157, %c0_158, %c0_159] : memref<16x128x256xf32, #tpu.memory_space<vmem>>, vector<1x128x256xf32>
    %189 = vector.shape_cast %188 : vector<1x128x256xf32> to vector<128x256xf32>
    %cst_160 = arith.constant dense<0.000000e+00> : vector<8x256xf32>
    %190 = tpu.matmul %187, %189, %cst_160 {dimension_numbers = #tpu.dot_dimension_numbers<[1], [0], [0], [1], [0, 0, 1, 1], [], []>} : vector<8x128xf32>, vector<128x256xf32>, vector<8x256xf32> -> vector<8x256xf32>
    %191 = arith.addf %179, %190 : vector<8x256xf32>
    %c0_161 = arith.constant 0 : index
    %c0_162 = arith.constant 0 : index
    %192 = vector.load %arg5[%c0_161, %c0_162] : memref<1x256xf32, #tpu.memory_space<vmem>>, vector<1x256xf32>
    %193 = vector.broadcast %192 : vector<1x256xf32> to vector<8x256xf32>
    %194 = arith.addf %191, %193 : vector<8x256xf32>
    %cst_163 = arith.constant 0.000000e+00 : f32
    %195 = vector.broadcast %cst_163 : f32 to vector<8x256xf32>
    %196 = arith.maximumf %194, %195 : vector<8x256xf32>
    %c0_164 = arith.constant 0 : index
    %c0_165 = arith.constant 0 : index
    %197 = vector.load %arg6[%c0_164, %c0_165] : memref<256x512xf32, #tpu.memory_space<vmem>>, vector<256x512xf32>
    %cst_166 = arith.constant dense<0.000000e+00> : vector<8x512xf32>
    %198 = tpu.matmul %196, %197, %cst_166 {dimension_numbers = #tpu.dot_dimension_numbers<[1], [0], [0], [1], [0, 0, 1, 1], [], []>} : vector<8x256xf32>, vector<256x512xf32>, vector<8x512xf32> -> vector<8x512xf32>
    %c0_167 = arith.constant 0 : index
    %c0_168 = arith.constant 0 : index
    %199 = vector.load %arg7[%c0_167, %c0_168] : memref<1x512xf32, #tpu.memory_space<vmem>>, vector<1x512xf32>
    %200 = vector.broadcast %199 : vector<1x512xf32> to vector<8x512xf32>
    %201 = arith.addf %198, %200 : vector<8x512xf32>
    %cst_169 = arith.constant 0.000000e+00 : f32
    %202 = vector.broadcast %cst_169 : f32 to vector<8x512xf32>
    %203 = arith.maximumf %201, %202 : vector<8x512xf32>
    %c0_170 = arith.constant 0 : index
    %c0_171 = arith.constant 0 : index
    %204 = vector.load %arg8[%c0_170, %c0_171] : memref<512x128xf32, #tpu.memory_space<vmem>>, vector<512x128xf32>
    %cst_172 = arith.constant dense<0.000000e+00> : vector<8x128xf32>
    %205 = tpu.matmul %203, %204, %cst_172 {dimension_numbers = #tpu.dot_dimension_numbers<[1], [0], [0], [1], [0, 0, 1, 1], [], []>} : vector<8x512xf32>, vector<512x128xf32>, vector<8x128xf32> -> vector<8x128xf32>
    %c0_173 = arith.constant 0 : index
    %c0_174 = arith.constant 0 : index
    %206 = vector.load %arg9[%c0_173, %c0_174] : memref<1x128xf32, #tpu.memory_space<vmem>>, vector<1x128xf32>
    %207 = vector.broadcast %206 : vector<1x128xf32> to vector<8x128xf32>
    %208 = arith.addf %205, %207 : vector<8x128xf32>
    %c0_175 = arith.constant 0 : index
    %c0_176 = arith.constant 0 : index
    %209 = vector.load %arg10[%c0_175, %c0_176] : memref<8x128xf32, #tpu.memory_space<vmem>>, vector<8x128xf32>
    tpu.vector_store %arg10[%c0_175, %c0_176], %208 {strides = array<i32>} : memref<8x128xf32, #tpu.memory_space<vmem>>, vector<8x128xf32>,
    %210 = tpu.iota {dimensions = array<i32: 1>} : vector<8x128xi32>
    %c1_i32 = arith.constant 1 : i32
    %211 = vector.broadcast %c1_i32 : i32 to vector<8x128xi32>
    %212 = arith.cmpi sge, %210, %211 : vector<8x128xi32>
    %c5_i32 = arith.constant 5 : i32
    %213 = vector.broadcast %c5_i32 : i32 to vector<8x128xi32>
    %214 = arith.cmpi slt, %210, %213 : vector<8x128xi32>
    %215 = arith.andi %212, %214 : vector<8x128xi1>
    %cst_177 = arith.constant -1.000000e+30 : f32
    %216 = vector.broadcast %cst_177 : f32 to vector<8x128xf32>
    %217 = arith.select %215, %208, %216 : vector<8x128xi1>, vector<8x128xf32>
    %cst_178 = arith.constant dense<0xFF800000> : vector<8xf32>
    %218 = vector.multi_reduction <maximumf>, %217, %cst_178 [1] : vector<8x128xf32> to vector<8xf32>
    %219 = vector.shape_cast %218 : vector<8xf32> to vector<8x1xf32>
    %220 = vector.broadcast %219 : vector<8x1xf32> to vector<8x128xf32>
    %221 = arith.subf %217, %220 : vector<8x128xf32>
    %222 = math.exp %221 : vector<8x128xf32>
    %cst_179 = arith.constant dense<0.000000e+00> : vector<8xf32>
    %223 = vector.multi_reduction <add>, %222, %cst_179 [1] : vector<8x128xf32> to vector<8xf32>
    %224 = vector.shape_cast %223 : vector<8xf32> to vector<8x1xf32>
    %225 = tpu.reciprocal %224 {approx = true} : vector<8x1xf32> -> vector<8x1xf32>
    %226 = vector.broadcast %225 : vector<8x1xf32> to vector<8x128xf32>
    %227 = arith.mulf %222, %226 : vector<8x128xf32>
    %c0_180 = arith.constant 0 : index
    %c0_181 = arith.constant 0 : index
    %228 = vector.load %arg11[%c0_180, %c0_181] : memref<8x128xf32, #tpu.memory_space<vmem>>, vector<8x128xf32>
    tpu.vector_store %arg11[%c0_180, %c0_181], %227 {strides = array<i32>} : memref<8x128xf32, #tpu.memory_space<vmem>>, vector<8x128xf32>,
    return
  }
  func.func @transform_0(%arg0: i32) -> (i32, i32, i32) {
    %c0_i32 = arith.constant 0 : i32
    %c0_i32_0 = arith.constant 0 : i32
    %c0_i32_1 = arith.constant 0 : i32
    return %c0_i32, %arg0, %c0_i32_0 : i32, i32, i32
  }
  func.func @transform_1(%arg0: i32) -> (i32, i32) {
    %c0_i32 = arith.constant 0 : i32
    %c0_i32_0 = arith.constant 0 : i32
    %c0_i32_1 = arith.constant 0 : i32
    return %c0_i32, %c0_i32_0 : i32, i32
  }
  func.func @transform_2(%arg0: i32) -> (i32, i32) {
    %c0_i32 = arith.constant 0 : i32
    %c0_i32_0 = arith.constant 0 : i32
    %c0_i32_1 = arith.constant 0 : i32
    return %c0_i32, %c0_i32_0 : i32, i32
  }
  func.func @transform_3(%arg0: i32) -> (i32, i32, i32) {
    %c0_i32 = arith.constant 0 : i32
    %c0_i32_0 = arith.constant 0 : i32
    %c0_i32_1 = arith.constant 0 : i32
    %c0_i32_2 = arith.constant 0 : i32
    return %c0_i32, %c0_i32_0, %c0_i32_1 : i32, i32, i32
  }
  func.func @transform_4(%arg0: i32) -> (i32, i32) {
    %c0_i32 = arith.constant 0 : i32
    %c0_i32_0 = arith.constant 0 : i32
    %c0_i32_1 = arith.constant 0 : i32
    return %c0_i32, %c0_i32_0 : i32, i32
  }
  func.func @transform_5(%arg0: i32) -> (i32, i32) {
    %c0_i32 = arith.constant 0 : i32
    %c0_i32_0 = arith.constant 0 : i32
    %c0_i32_1 = arith.constant 0 : i32
    return %c0_i32, %c0_i32_0 : i32, i32
  }
  func.func @transform_6(%arg0: i32) -> (i32, i32) {
    %c0_i32 = arith.constant 0 : i32
    %c0_i32_0 = arith.constant 0 : i32
    %c0_i32_1 = arith.constant 0 : i32
    return %c0_i32, %c0_i32_0 : i32, i32
  }
  func.func @transform_7(%arg0: i32) -> (i32, i32) {
    %c0_i32 = arith.constant 0 : i32
    %c0_i32_0 = arith.constant 0 : i32
    %c0_i32_1 = arith.constant 0 : i32
    return %c0_i32, %c0_i32_0 : i32, i32
  }
  func.func @transform_8(%arg0: i32) -> (i32, i32) {
    %c0_i32 = arith.constant 0 : i32
    %c0_i32_0 = arith.constant 0 : i32
    %c0_i32_1 = arith.constant 0 : i32
    return %c0_i32, %c0_i32_0 : i32, i32
  }
  func.func @transform_9(%arg0: i32) -> (i32, i32) {
    %c0_i32 = arith.constant 0 : i32
    %c0_i32_0 = arith.constant 0 : i32
    return %arg0, %c0_i32 : i32, i32
  }
  func.func @transform_10(%arg0: i32) -> (i32, i32) {
    %c0_i32 = arith.constant 0 : i32
    %c0_i32_0 = arith.constant 0 : i32
    return %arg0, %c0_i32 : i32, i32
  }
}

</mosaic_0001>

<llo_original>
// kernel: tpu_custom_call.1
$region0: #{tpu_custom_call.1}
  #allocation0 [shape = 'u32[]', space=smem, size = 0x4, offset = 0x4, fixed_abs, tag = 'smem constant byte address 0x4 - core index']
  #allocation1 [shape = 'u32[144,128]{1,0:T(1,128)}', space=vmem, size = 0x12000, scoped, tag = 'internal scratch']
  %s0 = inlined_call_operand.vmem [shape: f32[16,8,4], index: 0, kind: input, shape index: {}]
  %s1 = inlined_call_operand.hbm [shape: f32[4,128], index: 1, kind: input, shape index: {}]
  %s2 = inlined_call_operand.hbm [shape: f32[1,128], index: 2, kind: input, shape index: {}]
  %s3 = inlined_call_operand.hbm [shape: f32[16,128,256], index: 3, kind: input, shape index: {}]
  %s4 = inlined_call_operand.hbm [shape: f32[1,256], index: 4, kind: input, shape index: {}]
  %s5 = inlined_call_operand.hbm [shape: f32[256,512], index: 5, kind: input, shape index: {}]
  %s6 = inlined_call_operand.hbm [shape: f32[1,512], index: 6, kind: input, shape index: {}]
  %s7 = inlined_call_operand.hbm [shape: f32[512,128], index: 7, kind: input, shape index: {}]
  %s8 = inlined_call_operand.hbm [shape: f32[1,128], index: 8, kind: input, shape index: {}]
  %s9 = inlined_call_operand.hbm [shape: f32[8,128], index: 9, kind: output, shape index: {0}]
  %s10 = inlined_call_operand.hbm [shape: f32[8,128], index: 10, kind: output, shape index: {1}]
  %11 = xla_tuple %s9, %s10
  %s12 = sld [smem:[#allocation0]]
  $region86: #{tpu_custom_call.1} parent=0
    _
  %s14 = ssub.s32 1, %s12
  %s15 = scalar_select 0, %s14, %s12
  $region1: #{tpu_custom_call.1} parent=0
    #allocation2 [shape = 'u8[2048]{0}', space=vmem, size = 0x800, scoped, tag = 'input window, operand 1, single buffered']
    #allocation3 [shape = 's32[1]{0}', space=sflag, size = 0x4, scoped, tag = 'scoped memory for tpu_custom_call.1']
    #allocation4 [shape = 's32[1]{0}', space=sflag, size = 0x4, scoped, tag = 'scoped memory for tpu_custom_call.1']
    #allocation5 [shape = 'u8[512]{0}', space=vmem, size = 0x400, scoped, tag = 'input window, operand 2, single buffered']
    #allocation6 [shape = 's32[1]{0}', space=sflag, size = 0x4, scoped, tag = 'scoped memory for tpu_custom_call.1']
    #allocation7 [shape = 'u8[2097152]{0}', space=vmem, size = 0x200000, scoped, tag = 'input window, operand 3, single buffered']
    #allocation8 [shape = 'u8[1024]{0}', space=vmem, size = 0x400, scoped, tag = 'input window, operand 4, single buffered']
    #allocation9 [shape = 's32[1]{0}', space=sflag, size = 0x4, scoped, tag = 'scoped memory for tpu_custom_call.1']
    #allocation10 [shape = 'u8[524288]{0}', space=vmem, size = 0x80000, scoped, tag = 'input window, operand 5, single buffered']
    #allocation11 [shape = 'u8[2048]{0}', space=vmem, size = 0x800, scoped, tag = 'input window, operand 6, single buffered']
    #allocation12 [shape = 's32[1]{0}', space=sflag, size = 0x4, scoped, tag = 'scoped memory for tpu_custom_call.1']
    #allocation13 [shape = 'u8[262144]{0}', space=vmem, size = 0x40000, scoped, tag = 'input window, operand 7, single buffered']
    #allocation14 [shape = 'u8[512]{0}', space=vmem, size = 0x400, scoped, tag = 'input window, operand 8, single buffered']
    #allocation15 [shape = 's32[1]{0}', space=sflag, size = 0x4, scoped, tag = 'scoped memory for tpu_custom_call.1']
    #allocation16 [shape = 'u8[4096]{0}', space=vmem, size = 0x1000, scoped, tag = 'output window, operand 0, single buffered']
    #allocation17 [shape = 'u8[4096]{0}', space=vmem, size = 0x1000, scoped, tag = 'output window, operand 1, single buffered']
    #allocation18 [shape = 's32[1]{0}', space=sflag, size = 0x4, scoped, tag = 'scoped memory for tpu_custom_call.1']
    %16 = vsyncpa [#allocation3], 0
    %17 = vsyncpa [#allocation6], 0
    %18 = vsyncpa [#allocation9], 0
    %19 = vsyncpa [#allocation12], 0
    %20 = vsyncpa [#allocation15], 0
    %21 = vsyncpa [#allocation4], 0
    %22 = vsyncpa [#allocation18], 0
    // Predicated region
    $region2: #{tpu_custom_call.1} parent=1 // pred_check
      _
    $region3: #{tpu_custom_call.1} parent=1 // pred_check_branch
      %24 = sbr.rel (0) target = $region5
    $region4: #{tpu_custom_call.1} parent=1 // pred_region
      _
    $region5: #{tpu_custom_call.1} parent=1 // pred_fallthru
      _
    // Predicated region
    $region6: #{tpu_custom_call.1} parent=1 // pred_check
      _
    $region7: #{tpu_custom_call.1} parent=1 // pred_check_branch
      %26 = sbr.rel (0) target = $region9
    $region8: #{tpu_custom_call.1} parent=1 // pred_region
      %s28 = ssub.s32 64, 64
      %29 = vsyncadd [#allocation3], %s28
      %s31 = sshll.u32 [#allocation2], 4
      %s32 = int_to_ptr.vmem [resolvable:$true] %s31
      %34 = dma.hbm_to_vmem [thread:$0]  %s1, 64, %s32, [#allocation3]
    $region9: #{tpu_custom_call.1} parent=1 // pred_fallthru
      _
    // Predicated region
    $region10: #{tpu_custom_call.1} parent=1 // pred_check
      _
    $region11: #{tpu_custom_call.1} parent=1 // pred_check_branch
      %36 = sbr.rel (0) target = $region13
    $region12: #{tpu_custom_call.1} parent=1 // pred_region
      %s38 = ssub.s32 16, 16
      %39 = vsyncadd [#allocation6], %s38
      %s41 = sshll.u32 [#allocation5], 4
      %s42 = int_to_ptr.vmem [resolvable:$true] %s41
      %44 = dma.hbm_to_vmem [thread:$0]  %s2, 16, %s42, [#allocation6]
    $region13: #{tpu_custom_call.1} parent=1 // pred_fallthru
      _
    // Predicated region
    $region14: #{tpu_custom_call.1} parent=1 // pred_check
      _
    $region15: #{tpu_custom_call.1} parent=1 // pred_check_branch
      %46 = sbr.rel (0) target = $region17
    $region16: #{tpu_custom_call.1} parent=1 // pred_region
      %s48 = ssub.s32 65536, 65536
      %49 = vsyncadd [#allocation6], %s48
      %s50 = sshll.u32 [#allocation7], 4
      %s51 = int_to_ptr.vmem [resolvable:$true] %s50
      %56 = dma.hbm_to_vmem [thread:$0]  %s3, 65536, %s51, [#allocation6], 256, 256, 16
    $region17: #{tpu_custom_call.1} parent=1 // pred_fallthru
      _
    // Predicated region
    $region18: #{tpu_custom_call.1} parent=1 // pred_check
      _
    $region19: #{tpu_custom_call.1} parent=1 // pred_check_branch
      %58 = sbr.rel (0) target = $region21
    $region20: #{tpu_custom_call.1} parent=1 // pred_region
      %s60 = ssub.s32 32, 32
      %61 = vsyncadd [#allocation9], %s60
      %s63 = sshll.u32 [#allocation8], 4
      %s64 = int_to_ptr.vmem [resolvable:$true] %s63
      %66 = dma.hbm_to_vmem [thread:$0]  %s4, 32, %s64, [#allocation9]
    $region21: #{tpu_custom_call.1} parent=1 // pred_fallthru
      _
    // Predicated region
    $region22: #{tpu_custom_call.1} parent=1 // pred_check
      _
    $region23: #{tpu_custom_call.1} parent=1 // pred_check_branch
      %68 = sbr.rel (0) target = $region25
    $region24: #{tpu_custom_call.1} parent=1 // pred_region
      %s70 = ssub.s32 16384, 16384
      %71 = vsyncadd [#allocation9], %s70
      %s72 = sshll.u32 [#allocation10], 4
      %s73 = int_to_ptr.vmem [resolvable:$true] %s72
      %78 = dma.hbm_to_vmem [thread:$0]  %s5, 16384, %s73, [#allocation9], 512, 512, 32
    $region25: #{tpu_custom_call.1} parent=1 // pred_fallthru
      _
    // Predicated region
    $region26: #{tpu_custom_call.1} parent=1 // pred_check
      _
    $region27: #{tpu_custom_call.1} parent=1 // pred_check_branch
      %80 = sbr.rel (0) target = $region29
    $region28: #{tpu_custom_call.1} parent=1 // pred_region
      %s82 = ssub.s32 64, 64
      %83 = vsyncadd [#allocation12], %s82
      %s85 = sshll.u32 [#allocation11], 4
      %s86 = int_to_ptr.vmem [resolvable:$true] %s85
      %88 = dma.hbm_to_vmem [thread:$0]  %s6, 64, %s86, [#allocation12]
    $region29: #{tpu_custom_call.1} parent=1 // pred_fallthru
      _
    // Predicated region
    $region30: #{tpu_custom_call.1} parent=1 // pred_check
      _
    $region31: #{tpu_custom_call.1} parent=1 // pred_check_branch
      %90 = sbr.rel (0) target = $region33
    $region32: #{tpu_custom_call.1} parent=1 // pred_region
      %s92 = ssub.s32 8192, 8192
      %93 = vsyncadd [#allocation12], %s92
      %s94 = sshll.u32 [#allocation13], 4
      %s95 = int_to_ptr.vmem [resolvable:$true] %s94
      %100 = dma.hbm_to_vmem [thread:$0]  %s7, 8192, %s95, [#allocation12], 128, 128, 8
    $region33: #{tpu_custom_call.1} parent=1 // pred_fallthru
      _
    // Predicated region
    $region34: #{tpu_custom_call.1} parent=1 // pred_check
      _
    $region35: #{tpu_custom_call.1} parent=1 // pred_check_branch
      %102 = sbr.rel (0) target = $region37
    $region36: #{tpu_custom_call.1} parent=1 // pred_region
      %s104 = ssub.s32 16, 16
      %105 = vsyncadd [#allocation15], %s104
      %s107 = sshll.u32 [#allocation14], 4
      %s108 = int_to_ptr.vmem [resolvable:$true] %s107
      %110 = dma.hbm_to_vmem [thread:$0]  %s8, 16, %s108, [#allocation15]
    $region37: #{tpu_custom_call.1} parent=1 // pred_fallthru
      _
    // Predicated region
    $region38: #{tpu_custom_call.1} parent=1 // pred_check
      _
    $region39: #{tpu_custom_call.1} parent=1 // pred_check_branch
      %112 = sbr.rel (0) target = $region41
    $region40: #{tpu_custom_call.1} parent=1 // pred_region
      %113 = dma.done [#allocation3], 64
    $region41: #{tpu_custom_call.1} parent=1 // pred_fallthru
      _
    // Predicated region
    $region42: #{tpu_custom_call.1} parent=1 // pred_check
      _
    $region43: #{tpu_custom_call.1} parent=1 // pred_check_branch
      %115 = sbr.rel (0) target = $region45
    $region44: #{tpu_custom_call.1} parent=1 // pred_region
      %116 = dma.done [#allocation6], 16
    $region45: #{tpu_custom_call.1} parent=1 // pred_fallthru
      _
    // Predicated region
    $region46: #{tpu_custom_call.1} parent=1 // pred_check
      _
    $region47: #{tpu_custom_call.1} parent=1 // pred_check_branch
      %118 = sbr.rel (0) target = $region49
    $region48: #{tpu_custom_call.1} parent=1 // pred_region
      %119 = dma.done [#allocation6], 65536
    $region49: #{tpu_custom_call.1} parent=1 // pred_fallthru
      _
    // Predicated region
    $region50: #{tpu_custom_call.1} parent=1 // pred_check
      _
    $region51: #{tpu_custom_call.1} parent=1 // pred_check_branch
      %121 = sbr.rel (0) target = $region53
    $region52: #{tpu_custom_call.1} parent=1 // pred_region
      %122 = dma.done [#allocation9], 32
    $region53: #{tpu_custom_call.1} parent=1 // pred_fallthru
      _
    // Predicated region
    $region54: #{tpu_custom_call.1} parent=1 // pred_check
      _
    $region55: #{tpu_custom_call.1} parent=1 // pred_check_branch
      %124 = sbr.rel (0) target = $region57
    $region56: #{tpu_custom_call.1} parent=1 // pred_region
      %125 = dma.done [#allocation9], 16384
    $region57: #{tpu_custom_call.1} parent=1 // pred_fallthru
      _
    // Predicated region
    $region58: #{tpu_custom_call.1} parent=1 // pred_check
      _
    $region59: #{tpu_custom_call.1} parent=1 // pred_check_branch
      %127 = sbr.rel (0) target = $region61
    $region60: #{tpu_custom_call.1} parent=1 // pred_region
      %128 = dma.done [#allocation12], 64
    $region61: #{tpu_custom_call.1} parent=1 // pred_fallthru
      _
    // Predicated region
    $region62: #{tpu_custom_call.1} parent=1 // pred_check
      _
    $region63: #{tpu_custom_call.1} parent=1 // pred_check_branch
      %130 = sbr.rel (0) target = $region65
    $region64: #{tpu_custom_call.1} parent=1 // pred_region
      %131 = dma.done [#allocation12], 8192
    $region65: #{tpu_custom_call.1} parent=1 // pred_fallthru
      _
    // Predicated region
    $region66: #{tpu_custom_call.1} parent=1 // pred_check
      _
    $region67: #{tpu_custom_call.1} parent=1 // pred_check_branch
      %133 = sbr.rel (0) target = $region69
    $region68: #{tpu_custom_call.1} parent=1 // pred_region
      %134 = dma.done [#allocation15], 16
    $region69: #{tpu_custom_call.1} parent=1 // pred_fallthru
      _
    %v135 = vld [vmem:[#allocation5] sm:$0x1]
    %v136 = vld [vmem:[%s0] sm:$0xff]
    %v137 = vld [vmem:[#allocation2] sm:$0xf]
    %v139 = vlaneseq
    %v140 = vshrl.u32 %v139, 7
    %v141 = vsub.s32 0, %v140
    %v142 = vrot.slane %v135, %v141
    %vm144 = vcmask 31744
    %v146 = vsel %vm144, %v136, 0
    %vm148 = vcmask 1043456
    %v150 = vsel %vm148, %v137, 0
    %152 = vmatprep.subr.mxu0 0.0
    %153 = vmatpush1.msra.mxu0 0.0
    %154 = vmatprep.subr.mxu0 0.0
    %155 = vmatpush1.msra.mxu0 0.0
    %156 = vmatprep.subr.mxu0 0.0
    %157 = vmatpush1.msra.mxu0 0.0
    %158 = vmatprep.subr.mxu0 0.0
    %159 = vmatpush1.msra.mxu0 0.0
    %160 = vmatprep.subr.mxu0 0.0
    %161 = vmatpush1.msra.mxu0 0.0
    %162 = vmatprep.subr.mxu0 0.0
    %163 = vmatpush1.msra.mxu0 0.0
    %164 = vmatprep.subr.mxu0 0.0
    %165 = vmatpush1.msra.mxu0 0.0
    %166 = vmatprep.subr.mxu0 0.0
    %167 = vmatpush1.msra.mxu0 0.0
    %168 = vmatprep.subr.mxu0 0.0
    %169 = vmatpush1.msra.mxu0 0.0
    %170 = vmatprep.subr.mxu0 0.0
    %171 = vmatpush1.msra.mxu0 0.0
    %172 = vmatprep.subr.mxu0 0.0
    %173 = vmatpush1.msra.mxu0 0.0
    %174 = vmatprep.subr.mxu0 0.0
    %175 = vmatpush1.msra.mxu0 0.0
    %176 = vmatprep.subr.mxu0 0.0
    %177 = vmatpush1.msra.mxu0 0.0
    %178 = vmatprep.subr.mxu0 0.0
    %179 = vmatpush1.msra.mxu0 0.0
    %180 = vmatprep.subr.mxu0 0.0
    %181 = vmatpush1.msra.mxu0 0.0
    %182 = vmatprep.subr.mxu0 0.0
    %183 = vmatpush1.msra.mxu0 %v150
    %184 = vmatprep.subr.mxu0 0.0
    %185 = vmatpush2.msra.mxu0 0.0
    %186 = vmatprep.subr.mxu0 0.0
    %187 = vmatpush2.msra.mxu0 0.0
    %188 = vmatprep.subr.mxu0 0.0
    %189 = vmatpush2.msra.mxu0 0.0
    %190 = vmatprep.subr.mxu0 0.0
    %191 = vmatpush2.msra.mxu0 0.0
    %192 = vmatprep.subr.mxu0 0.0
    %193 = vmatpush2.msra.mxu0 0.0
    %194 = vmatprep.subr.mxu0 0.0
    %195 = vmatpush2.msra.mxu0 0.0
    %196 = vmatprep.subr.mxu0 0.0
    %197 = vmatpush2.msra.mxu0 0.0
    %198 = vmatprep.subr.mxu0 0.0
    %199 = vmatpush2.msra.mxu0 0.0
    %200 = vmatprep.subr.mxu0 0.0
    %201 = vmatpush2.msra.mxu0 0.0
    %202 = vmatprep.subr.mxu0 0.0
    %203 = vmatpush2.msra.mxu0 0.0
    %204 = vmatprep.subr.mxu0 0.0
    %205 = vmatpush2.msra.mxu0 0.0
    %206 = vmatprep.subr.mxu0 0.0
    %207 = vmatpush2.msra.mxu0 0.0
    %208 = vmatprep.subr.mxu0 0.0
    %209 = vmatpush2.msra.mxu0 0.0
    %210 = vmatprep.subr.mxu0 0.0
    %211 = vmatpush2.msra.mxu0 0.0
    %212 = vmatprep.subr.mxu0 0.0
    %213 = vmatpush2.msra.mxu0 0.0
    %214 = vmatprep.subr.mxu0 0.0
    %215 = vmatpush2.msra.mxu0 0.0
    %216 = vmatprep.mubr.f32.mxu0 0.0
    %217 = vmatmul.mubr.f32.gmra.mxu0 %v146
    %v218 = vpop.f32.mrf.mxu0
    %v219 = vadd.f32 %v142, %v218
    %v220 = vpop.f32.mrf.mxu0
    %221 = vdwg.mxu0
    %v222 = vmax.f32 %v219, 0.0
    %v223 = vld [vmem:[#allocation7] sm:$0xff]
    %v224 = vld [vmem:[#allocation7 + $0x8] sm:$0xff]
    %v225 = vld [vmem:[#allocation7 + $0x10] sm:$0xff]
    %v226 = vld [vmem:[#allocation7 + $0x18] sm:$0xff]
    %v227 = vld [vmem:[#allocation7 + $0x20] sm:$0xff]
    %v228 = vld [vmem:[#allocation7 + $0x28] sm:$0xff]
    %v229 = vld [vmem:[#allocation7 + $0x30] sm:$0xff]
    %v230 = vld [vmem:[#allocation7 + $0x38] sm:$0xff]
    %v231 = vld [vmem:[#allocation7 + $0x40] sm:$0xff]
    %v232 = vld [vmem:[#allocation7 + $0x48] sm:$0xff]
    %v233 = vld [vmem:[#allocation7 + $0x50] sm:$0xff]
    %v234 = vld [vmem:[#allocation7 + $0x58] sm:$0xff]
    %v235 = vld [vmem:[#allocation7 + $0x60] sm:$0xff]
    %v236 = vld [vmem:[#allocation7 + $0x68] sm:$0xff]
    %v237 = vld [vmem:[#allocation7 + $0x70] sm:$0xff]
    %v238 = vld [vmem:[#allocation7 + $0x78] sm:$0xff]
    %v239 = vld [vmem:[#allocation7 + $0x80] sm:$0xff]
    %v240 = vld [vmem:[#allocation7 + $0x88] sm:$0xff]
    %v241 = vld [vmem:[#allocation7 + $0x90] sm:$0xff]
    %v242 = vld [vmem:[#allocation7 + $0x98] sm:$0xff]
    %v243 = vld [vmem:[#allocation7 + $0xa0] sm:$0xff]
    %v244 = vld [vmem:[#allocation7 + $0xa8] sm:$0xff]
    %v245 = vld [vmem:[#allocation7 + $0xb0] sm:$0xff]
    %v246 = vld [vmem:[#allocation7 + $0xb8] sm:$0xff]
    %v247 = vld [vmem:[#allocation7 + $0xc0] sm:$0xff]
    %v248 = vld [vmem:[#allocation7 + $0xc8] sm:$0xff]
    %v249 = vld [vmem:[#allocation7 + $0xd0] sm:$0xff]
    %v250 = vld [vmem:[#allocation7 + $0xd8] sm:$0xff]
    %v251 = vld [vmem:[#allocation7 + $0xe0] sm:$0xff]
    %v252 = vld [vmem:[#allocation7 + $0xe8] sm:$0xff]
    %v253 = vld [vmem:[#allocation7 + $0xf0] sm:$0xff]
    %v254 = vld [vmem:[#allocation7 + $0xf8] sm:$0xff]
    %s255 = scalar_lea.vmem %s0, 8
    %v256 = vld [vmem:[%s255] sm:$0xff]
    %v258 = vsel %vm144, %v256, 0
    %260 = vmatprep.subr.mxu0 0.0
    %261 = vmatpush1.msra.mxu0 0.0
    %262 = vmatprep.subr.mxu0 0.0
    %263 = vmatpush1.msra.mxu0 0.0
    %264 = vmatprep.subr.mxu0 0.0
    %265 = vmatpush1.msra.mxu0 0.0
    %266 = vmatprep.subr.mxu0 0.0
    %267 = vmatpush1.msra.mxu0 0.0
    %268 = vmatprep.subr.mxu0 0.0
    %269 = vmatpush1.msra.mxu0 0.0
    %270 = vmatprep.subr.mxu0 0.0
    %271 = vmatpush1.msra.mxu0 0.0
    %272 = vmatprep.subr.mxu0 0.0
    %273 = vmatpush1.msra.mxu0 0.0
    %274 = vmatprep.subr.mxu0 0.0
    %275 = vmatpush1.msra.mxu0 0.0
    %276 = vmatprep.subr.mxu0 0.0
    %277 = vmatpush1.msra.mxu0 0.0
    %278 = vmatprep.subr.mxu0 0.0
    %279 = vmatpush1.msra.mxu0 0.0
    %280 = vmatprep.subr.mxu0 0.0
    %281 = vmatpush1.msra.mxu0 0.0
    %282 = vmatprep.subr.mxu0 0.0
    %283 = vmatpush1.msra.mxu0 0.0
    %284 = vmatprep.subr.mxu0 0.0
    %285 = vmatpush1.msra.mxu0 0.0
    %286 = vmatprep.subr.mxu0 0.0
    %287 = vmatpush1.msra.mxu0 0.0
    %288 = vmatprep.subr.mxu0 0.0
    %289 = vmatpush1.msra.mxu0 0.0
    %290 = vmatprep.subr.mxu0 0.0
    %291 = vmatpush1.msra.mxu0 %v150
    %292 = vmatprep.subr.mxu0 0.0
    %293 = vmatpush2.msra.mxu0 0.0
    %294 = vmatprep.subr.mxu0 0.0
    %295 = vmatpush2.msra.mxu0 0.0
    %296 = vmatprep.subr.mxu0 0.0
    %297 = vmatpush2.msra.mxu0 0.0
    %298 = vmatprep.subr.mxu0 0.0
    %299 = vmatpush2.msra.mxu0 0.0
    %300 = vmatprep.subr.mxu0 0.0
    %301 = vmatpush2.msra.mxu0 0.0
    %302 = vmatprep.subr.mxu0 0.0
    %303 = vmatpush2.msra.mxu0 0.0
    %304 = vmatprep.subr.mxu0 0.0
    %305 = vmatpush2.msra.mxu0 0.0
    %306 = vmatprep.subr.mxu0 0.0
    %307 = vmatpush2.msra.mxu0 0.0
    %308 = vmatprep.subr.mxu0 0.0
    %309 = vmatpush2.msra.mxu0 0.0
    %310 = vmatprep.subr.mxu0 0.0
    %311 = vmatpush2.msra.mxu0 0.0
    %312 = vmatprep.subr.mxu0 0.0
    %313 = vmatpush2.msra.mxu0 0.0
    %314 = vmatprep.subr.mxu0 0.0
    %315 = vmatpush2.msra.mxu0 0.0
    %316 = vmatprep.subr.mxu0 0.0
    %317 = vmatpush2.msra.mxu0 0.0
    %318 = vmatprep.subr.mxu0 0.0
    %319 = vmatpush2.msra.mxu0 0.0
    %320 = vmatprep.subr.mxu0 0.0
    %321 = vmatpush2.msra.mxu0 0.0
    %322 = vmatprep.subr.mxu0 0.0
    %323 = vmatpush2.msra.mxu0 0.0
    %324 = vmatprep.mubr.f32.mxu0 0.0
    %325 = vmatmul.mubr.f32.gmra.mxu0 %v258
    %v326 = vpop.f32.mrf.mxu0
    %v327 = vadd.f32 %v142, %v326
    %v328 = vpop.f32.mrf.mxu0
    %329 = vdwg.mxu0
    %v330 = vmax.f32 %v327, 0.0
    %s331 = scalar_lea.vmem [#allocation7], 256
    %v332 = vld [vmem:[%s331] sm:$0xff]
    %v333 = vld [vmem:[%s331 + $0x8] sm:$0xff]
    %v334 = vld [vmem:[%s331 + $0x10] sm:$0xff]
    %v335 = vld [vmem:[%s331 + $0x18] sm:$0xff]
    %v336 = vld [vmem:[%s331 + $0x20] sm:$0xff]
    %v337 = vld [vmem:[%s331 + $0x28] sm:$0xff]
    %v338 = vld [vmem:[%s331 + $0x30] sm:$0xff]
    %v339 = vld [vmem:[%s331 + $0x38] sm:$0xff]
    %v340 = vld [vmem:[%s331 + $0x40] sm:$0xff]
    %v341 = vld [vmem:[%s331 + $0x48] sm:$0xff]
    %v342 = vld [vmem:[%s331 + $0x50] sm:$0xff]
    %v343 = vld [vmem:[%s331 + $0x58] sm:$0xff]
    %v344 = vld [vmem:[%s331 + $0x60] sm:$0xff]
    %v345 = vld [vmem:[%s331 + $0x68] sm:$0xff]
    %v346 = vld [vmem:[%s331 + $0x70] sm:$0xff]
    %v347 = vld [vmem:[%s331 + $0x78] sm:$0xff]
    %v348 = vld [vmem:[%s331 + $0x80] sm:$0xff]
    %v349 = vld [vmem:[%s331 + $0x88] sm:$0xff]
    %v350 = vld [vmem:[%s331 + $0x90] sm:$0xff]
    %v351 = vld [vmem:[%s331 + $0x98] sm:$0xff]
    %v352 = vld [vmem:[%s331 + $0xa0] sm:$0xff]
    %v353 = vld [vmem:[%s331 + $0xa8] sm:$0xff]
    %v354 = vld [vmem:[%s331 + $0xb0] sm:$0xff]
    %v355 = vld [vmem:[%s331 + $0xb8] sm:$0xff]
    %v356 = vld [vmem:[%s331 + $0xc0] sm:$0xff]
    %v357 = vld [vmem:[%s331 + $0xc8] sm:$0xff]
    %v358 = vld [vmem:[%s331 + $0xd0] sm:$0xff]
    %v359 = vld [vmem:[%s331 + $0xd8] sm:$0xff]
    %v360 = vld [vmem:[%s331 + $0xe0] sm:$0xff]
    %v361 = vld [vmem:[%s331 + $0xe8] sm:$0xff]
    %v362 = vld [vmem:[%s331 + $0xf0] sm:$0xff]
    %v363 = vld [vmem:[%s331 + $0xf8] sm:$0xff]
    %364 = vmatprep.subr.mxu0 %v363
    %365 = vmatpush1.msra.mxu0 %v362
    %366 = vmatprep.subr.mxu0 %v361
    %367 = vmatpush1.msra.mxu0 %v360
    %368 = vmatprep.subr.mxu0 %v359
    %369 = vmatpush1.msra.mxu0 %v358
    %370 = vmatprep.subr.mxu0 %v357
    %371 = vmatpush1.msra.mxu0 %v356
    %372 = vmatprep.subr.mxu0 %v355
    %373 = vmatpush1.msra.mxu0 %v354
    %374 = vmatprep.subr.mxu0 %v353
    %375 = vmatpush1.msra.mxu0 %v352
    %376 = vmatprep.subr.mxu0 %v351
    %377 = vmatpush1.msra.mxu0 %v350
    %378 = vmatprep.subr.mxu0 %v349
    %379 = vmatpush1.msra.mxu0 %v348
    %380 = vmatprep.subr.mxu0 %v347
    %381 = vmatpush1.msra.mxu0 %v346
    %382 = vmatprep.subr.mxu0 %v345
    %383 = vmatpush1.msra.mxu0 %v344
    %384 = vmatprep.subr.mxu0 %v343
    %385 = vmatpush1.msra.mxu0 %v342
    %386 = vmatprep.subr.mxu0 %v341
    %387 = vmatpush1.msra.mxu0 %v340
    %388 = vmatprep.subr.mxu0 %v339
    %389 = vmatpush1.msra.mxu0 %v338
    %390 = vmatprep.subr.mxu0 %v337
    %391 = vmatpush1.msra.mxu0 %v336
    %392 = vmatprep.subr.mxu0 %v335
    %393 = vmatpush1.msra.mxu0 %v334
    %394 = vmatprep.subr.mxu0 %v333
    %395 = vmatpush1.msra.mxu0 %v332
    %396 = vmatprep.subr.mxu0 0.0
    %397 = vmatpush2.msra.mxu0 0.0
    %398 = vmatprep.subr.mxu0 0.0
    %399 = vmatpush2.msra.mxu0 0.0
    %400 = vmatprep.subr.mxu0 0.0
    %401 = vmatpush2.msra.mxu0 0.0
    %402 = vmatprep.subr.mxu0 0.0
    %403 = vmatpush2.msra.mxu0 0.0
    %404 = vmatprep.subr.mxu0 0.0
    %405 = vmatpush2.msra.mxu0 0.0
    %406 = vmatprep.subr.mxu0 0.0
    %407 = vmatpush2.msra.mxu0 0.0
    %408 = vmatprep.subr.mxu0 0.0
    %409 = vmatpush2.msra.mxu0 0.0
    %410 = vmatprep.subr.mxu0 0.0
    %411 = vmatpush2.msra.mxu0 0.0
    %412 = vmatprep.subr.mxu0 0.0
    %413 = vmatpush2.msra.mxu0 0.0
    %414 = vmatprep.subr.mxu0 0.0
    %415 = vmatpush2.msra.mxu0 0.0
    %416 = vmatprep.subr.mxu0 0.0
    %417 = vmatpush2.msra.mxu0 0.0
    %418 = vmatprep.subr.mxu0 0.0
    %419 = vmatpush2.msra.mxu0 0.0
    %420 = vmatprep.subr.mxu0 0.0
    %421 = vmatpush2.msra.mxu0 0.0
    %422 = vmatprep.subr.mxu0 0.0
    %423 = vmatpush2.msra.mxu0 0.0
    %424 = vmatprep.subr.mxu0 0.0
    %425 = vmatpush2.msra.mxu0 0.0
    %426 = vmatprep.subr.mxu0 0.0
    %427 = vmatpush2.msra.mxu0 0.0
    %428 = vmatprep.mubr.f32.mxu0 0.0
    %429 = vmatmul.mubr.f32.gmra.mxu0 %v330
    %v430 = vpop.f32.mrf.mxu0
    %v431 = vadd.f32 0.0, %v430
    %v432 = vpop.f32.mrf.mxu0
    %v433 = vadd.f32 0.0, %v432
    %434 = vdwg.mxu0
    %435 = vmatprep.subr.mxu0 %v254
    %436 = vmatpush1.msra.mxu0 %v253
    %437 = vmatprep.subr.mxu0 %v252
    %438 = vmatpush1.msra.mxu0 %v251
    %439 = vmatprep.subr.mxu0 %v250
    %440 = vmatpush1.msra.mxu0 %v249
    %441 = vmatprep.subr.mxu0 %v248
    %442 = vmatpush1.msra.mxu0 %v247
    %443 = vmatprep.subr.mxu0 %v246
    %444 = vmatpush1.msra.mxu0 %v245
    %445 = vmatprep.subr.mxu0 %v244
    %446 = vmatpush1.msra.mxu0 %v243
    %447 = vmatprep.subr.mxu0 %v242
    %448 = vmatpush1.msra.mxu0 %v241
    %449 = vmatprep.subr.mxu0 %v240
    %450 = vmatpush1.msra.mxu0 %v239
    %451 = vmatprep.subr.mxu0 %v238
    %452 = vmatpush1.msra.mxu0 %v237
    %453 = vmatprep.subr.mxu0 %v236
    %454 = vmatpush1.msra.mxu0 %v235
    %455 = vmatprep.subr.mxu0 %v234
    %456 = vmatpush1.msra.mxu0 %v233
    %457 = vmatprep.subr.mxu0 %v232
    %458 = vmatpush1.msra.mxu0 %v231
    %459 = vmatprep.subr.mxu0 %v230
    %460 = vmatpush1.msra.mxu0 %v229
    %461 = vmatprep.subr.mxu0 %v228
    %462 = vmatpush1.msra.mxu0 %v227
    %463 = vmatprep.subr.mxu0 %v226
    %464 = vmatpush1.msra.mxu0 %v225
    %465 = vmatprep.subr.mxu0 %v224
    %466 = vmatpush1.msra.mxu0 %v223
    %467 = vmatprep.subr.mxu0 0.0
    %468 = vmatpush2.msra.mxu0 0.0
    %469 = vmatprep.subr.mxu0 0.0
    %470 = vmatpush2.msra.mxu0 0.0
    %471 = vmatprep.subr.mxu0 0.0
    %472 = vmatpush2.msra.mxu0 0.0
    %473 = vmatprep.subr.mxu0 0.0
    %474 = vmatpush2.msra.mxu0 0.0
    %475 = vmatprep.subr.mxu0 0.0
    %476 = vmatpush2.msra.mxu0 0.0
    %477 = vmatprep.subr.mxu0 0.0
    %478 = vmatpush2.msra.mxu0 0.0
    %479 = vmatprep.subr.mxu0 0.0
    %480 = vmatpush2.msra.mxu0 0.0
    %481 = vmatprep.subr.mxu0 0.0
    %482 = vmatpush2.msra.mxu0 0.0
    %483 = vmatprep.subr.mxu0 0.0
    %484 = vmatpush2.msra.mxu0 0.0
    %485 = vmatprep.subr.mxu0 0.0
    %486 = vmatpush2.msra.mxu0 0.0
    %487 = vmatprep.subr.mxu0 0.0
    %488 = vmatpush2.msra.mxu0 0.0
    %489 = vmatprep.subr.mxu0 0.0
    %490 = vmatpush2.msra.mxu0 0.0
    %491 = vmatprep.subr.mxu0 0.0
    %492 = vmatpush2.msra.mxu0 0.0
    %493 = vmatprep.subr.mxu0 0.0
    %494 = vmatpush2.msra.mxu0 0.0
    %495 = vmatprep.subr.mxu0 0.0
    %496 = vmatpush2.msra.mxu0 0.0
    %497 = vmatprep.subr.mxu0 0.0
    %498 = vmatpush2.msra.mxu0 0.0
    %499 = vmatprep.mubr.f32.mxu0 0.0
    %500 = vmatmul.mubr.f32.gmra.mxu0 %v222
    %v501 = vpop.f32.mrf.mxu0
    %v502 = vadd.f32 %v431, %v501
    %v503 = vpop.f32.mrf.mxu0
    %v504 = vadd.f32 %v433, %v503
    %505 = vdwg.mxu0
    %s506 = scalar_lea.vmem %s0, 16
    %v507 = vld [vmem:[%s506] sm:$0xff]
    %v509 = vsel %vm144, %v507, 0
    %511 = vmatprep.subr.mxu0 0.0
    %512 = vmatpush1.msra.mxu0 0.0
    %513 = vmatprep.subr.mxu0 0.0
    %514 = vmatpush1.msra.mxu0 0.0
    %515 = vmatprep.subr.mxu0 0.0
    %516 = vmatpush1.msra.mxu0 0.0
    %517 = vmatprep.subr.mxu0 0.0
    %518 = vmatpush1.msra.mxu0 0.0
    %519 = vmatprep.subr.mxu0 0.0
    %520 = vmatpush1.msra.mxu0 0.0
    %521 = vmatprep.subr.mxu0 0.0
    %522 = vmatpush1.msra.mxu0 0.0
    %523 = vmatprep.subr.mxu0 0.0
    %524 = vmatpush1.msra.mxu0 0.0
    %525 = vmatprep.subr.mxu0 0.0
    %526 = vmatpush1.msra.mxu0 0.0
    %527 = vmatprep.subr.mxu0 0.0
    %528 = vmatpush1.msra.mxu0 0.0
    %529 = vmatprep.subr.mxu0 0.0
    %530 = vmatpush1.msra.mxu0 0.0
    %531 = vmatprep.subr.mxu0 0.0
    %532 = vmatpush1.msra.mxu0 0.0
    %533 = vmatprep.subr.mxu0 0.0
    %534 = vmatpush1.msra.mxu0 0.0
    %535 = vmatprep.subr.mxu0 0.0
    %536 = vmatpush1.msra.mxu0 0.0
    %537 = vmatprep.subr.mxu0 0.0
    %538 = vmatpush1.msra.mxu0 0.0
    %539 = vmatprep.subr.mxu0 0.0
    %540 = vmatpush1.msra.mxu0 0.0
    %541 = vmatprep.subr.mxu0 0.0
    %542 = vmatpush1.msra.mxu0 %v150
    %543 = vmatprep.subr.mxu0 0.0
    %544 = vmatpush2.msra.mxu0 0.0
    %545 = vmatprep.subr.mxu0 0.0
    %546 = vmatpush2.msra.mxu0 0.0
    %547 = vmatprep.subr.mxu0 0.0
    %548 = vmatpush2.msra.mxu0 0.0
    %549 = vmatprep.subr.mxu0 0.0
    %550 = vmatpush2.msra.mxu0 0.0
    %551 = vmatprep.subr.mxu0 0.0
    %552 = vmatpush2.msra.mxu0 0.0
    %553 = vmatprep.subr.mxu0 0.0
    %554 = vmatpush2.msra.mxu0 0.0
    %555 = vmatprep.subr.mxu0 0.0
    %556 = vmatpush2.msra.mxu0 0.0
    %557 = vmatprep.subr.mxu0 0.0
    %558 = vmatpush2.msra.mxu0 0.0
    %559 = vmatprep.subr.mxu0 0.0
    %560 = vmatpush2.msra.mxu0 0.0
    %561 = vmatprep.subr.mxu0 0.0
    %562 = vmatpush2.msra.mxu0 0.0
    %563 = vmatprep.subr.mxu0 0.0
    %564 = vmatpush2.msra.mxu0 0.0
    %565 = vmatprep.subr.mxu0 0.0
    %566 = vmatpush2.msra.mxu0 0.0
    %567 = vmatprep.subr.mxu0 0.0
    %568 = vmatpush2.msra.mxu0 0.0
    %569 = vmatprep.subr.mxu0 0.0
    %570 = vmatpush2.msra.mxu0 0.0
    %571 = vmatprep.subr.mxu0 0.0
    %572 = vmatpush2.msra.mxu0 0.0
    %573 = vmatprep.subr.mxu0 0.0
    %574 = vmatpush2.msra.mxu0 0.0
    %575 = vmatprep.mubr.f32.mxu0 0.0
    %576 = vmatmul.mubr.f32.gmra.mxu0 %v509
    %v577 = vpop.f32.mrf.mxu0
    %v578 = vadd.f32 %v142, %v577
    %v579 = vpop.f32.mrf.mxu0
    %580 = vdwg.mxu0
    %v581 = vmax.f32 %v578, 0.0
    %s582 = scalar_lea.vmem [#allocation7], 512
    %v583 = vld [vmem:[%s582] sm:$0xff]
    %v584 = vld [vmem:[%s582 + $0x8] sm:$0xff]
    %v585 = vld [vmem:[%s582 + $0x10] sm:$0xff]
    %v586 = vld [vmem:[%s582 + $0x18] sm:$0xff]
    %v587 = vld [vmem:[%s582 + $0x20] sm:$0xff]
    %v588 = vld [vmem:[%s582 + $0x28] sm:$0xff]
    %v589 = vld [vmem:[%s582 + $0x30] sm:$0xff]
    %v590 = vld [vmem:[%s582 + $0x38] sm:$0xff]
    %v591 = vld [vmem:[%s582 + $0x40] sm:$0xff]
    %v592 = vld [vmem:[%s582 + $0x48] sm:$0xff]
    %v593 = vld [vmem:[%s582 + $0x50] sm:$0xff]
    %v594 = vld [vmem:[%s582 + $0x58] sm:$0xff]
    %v595 = vld [vmem:[%s582 + $0x60] sm:$0xff]
    %v596 = vld [vmem:[%s582 + $0x68] sm:$0xff]
    %v597 = vld [vmem:[%s582 + $0x70] sm:$0xff]
    %v598 = vld [vmem:[%s582 + $0x78] sm:$0xff]
    %v599 = vld [vmem:[%s582 + $0x80] sm:$0xff]
    %v600 = vld [vmem:[%s582 + $0x88] sm:$0xff]
    %v601 = vld [vmem:[%s582 + $0x90] sm:$0xff]
    %v602 = vld [vmem:[%s582 + $0x98] sm:$0xff]
    %v603 = vld [vmem:[%s582 + $0xa0] sm:$0xff]
    %v604 = vld [vmem:[%s582 + $0xa8] sm:$0xff]
    %v605 = vld [vmem:[%s582 + $0xb0] sm:$0xff]
    %v606 = vld [vmem:[%s582 + $0xb8] sm:$0xff]
    %v607 = vld [vmem:[%s582 + $0xc0] sm:$0xff]
    %v608 = vld [vmem:[%s582 + $0xc8] sm:$0xff]
    %v609 = vld [vmem:[%s582 + $0xd0] sm:$0xff]
    %v610 = vld [vmem:[%s582 + $0xd8] sm:$0xff]
    %v611 = vld [vmem:[%s582 + $0xe0] sm:$0xff]
    %v612 = vld [vmem:[%s582 + $0xe8] sm:$0xff]
    %v613 = vld [vmem:[%s582 + $0xf0] sm:$0xff]
    %v614 = vld [vmem:[%s582 + $0xf8] sm:$0xff]
    %615 = vmatprep.subr.mxu0 %v614
    %616 = vmatpush1.msra.mxu0 %v613
    %617 = vmatprep.subr.mxu0 %v612
    %618 = vmatpush1.msra.mxu0 %v611
    %619 = vmatprep.subr.mxu0 %v610
    %620 = vmatpush1.msra.mxu0 %v609
    %621 = vmatprep.subr.mxu0 %v608
    %622 = vmatpush1.msra.mxu0 %v607
    %623 = vmatprep.subr.mxu0 %v606
    %624 = vmatpush1.msra.mxu0 %v605
    %625 = vmatprep.subr.mxu0 %v604
    %626 = vmatpush1.msra.mxu0 %v603
    %627 = vmatprep.subr.mxu0 %v602
    %628 = vmatpush1.msra.mxu0 %v601
    %629 = vmatprep.subr.mxu0 %v600
    %630 = vmatpush1.msra.mxu0 %v599
    %631 = vmatprep.subr.mxu0 %v598
    %632 = vmatpush1.msra.mxu0 %v597
    %633 = vmatprep.subr.mxu0 %v596
    %634 = vmatpush1.msra.mxu0 %v595
    %635 = vmatprep.subr.mxu0 %v594
    %636 = vmatpush1.msra.mxu0 %v593
    %637 = vmatprep.subr.mxu0 %v592
    %638 = vmatpush1.msra.mxu0 %v591
    %639 = vmatprep.subr.mxu0 %v590
    %640 = vmatpush1.msra.mxu0 %v589
    %641 = vmatprep.subr.mxu0 %v588
    %642 = vmatpush1.msra.mxu0 %v587
    %643 = vmatprep.subr.mxu0 %v586
    %644 = vmatpush1.msra.mxu0 %v585
    %645 = vmatprep.subr.mxu0 %v584
    %646 = vmatpush1.msra.mxu0 %v583
    %647 = vmatprep.subr.mxu0 0.0
    %648 = vmatpush2.msra.mxu0 0.0
    %649 = vmatprep.subr.mxu0 0.0
    %650 = vmatpush2.msra.mxu0 0.0
    %651 = vmatprep.subr.mxu0 0.0
    %652 = vmatpush2.msra.mxu0 0.0
    %653 = vmatprep.subr.mxu0 0.0
    %654 = vmatpush2.msra.mxu0 0.0
    %655 = vmatprep.subr.mxu0 0.0
    %656 = vmatpush2.msra.mxu0 0.0
    %657 = vmatprep.subr.mxu0 0.0
    %658 = vmatpush2.msra.mxu0 0.0
    %659 = vmatprep.subr.mxu0 0.0
    %660 = vmatpush2.msra.mxu0 0.0
    %661 = vmatprep.subr.mxu0 0.0
    %662 = vmatpush2.msra.mxu0 0.0
    %663 = vmatprep.subr.mxu0 0.0
    %664 = vmatpush2.msra.mxu0 0.0
    %665 = vmatprep.subr.mxu0 0.0
    %666 = vmatpush2.msra.mxu0 0.0
    %667 = vmatprep.subr.mxu0 0.0
    %668 = vmatpush2.msra.mxu0 0.0
    %669 = vmatprep.subr.mxu0 0.0
    %670 = vmatpush2.msra.mxu0 0.0
    %671 = vmatprep.subr.mxu0 0.0
    %672 = vmatpush2.msra.mxu0 0.0
    %673 = vmatprep.subr.mxu0 0.0
    %674 = vmatpush2.msra.mxu0 0.0
    %675 = vmatprep.subr.mxu0 0.0
    %676 = vmatpush2.msra.mxu0 0.0
    %677 = vmatprep.subr.mxu0 0.0
    %678 = vmatpush2.msra.mxu0 0.0
    %679 = vmatprep.mubr.f32.mxu0 0.0
    %680 = vmatmul.mubr.f32.gmra.mxu0 %v581
    %v681 = vpop.f32.mrf.mxu0
    %v682 = vadd.f32 0.0, %v681
    %v683 = vpop.f32.mrf.mxu0
    %v684 = vadd.f32 0.0, %v683
    %685 = vdwg.mxu0
    %v686 = vadd.f32 %v502, %v682
    %v687 = vadd.f32 %v504, %v684
    %s688 = scalar_lea.vmem %s0, 24
    %v689 = vld [vmem:[%s688] sm:$0xff]
    %v691 = vsel %vm144, %v689, 0
    %693 = vmatprep.subr.mxu0 0.0
    %694 = vmatpush1.msra.mxu0 0.0
    %695 = vmatprep.subr.mxu0 0.0
    %696 = vmatpush1.msra.mxu0 0.0
    %697 = vmatprep.subr.mxu0 0.0
    %698 = vmatpush1.msra.mxu0 0.0
    %699 = vmatprep.subr.mxu0 0.0
    %700 = vmatpush1.msra.mxu0 0.0
    %701 = vmatprep.subr.mxu0 0.0
    %702 = vmatpush1.msra.mxu0 0.0
    %703 = vmatprep.subr.mxu0 0.0
    %704 = vmatpush1.msra.mxu0 0.0
    %705 = vmatprep.subr.mxu0 0.0
    %706 = vmatpush1.msra.mxu0 0.0
    %707 = vmatprep.subr.mxu0 0.0
    %708 = vmatpush1.msra.mxu0 0.0
    %709 = vmatprep.subr.mxu0 0.0
    %710 = vmatpush1.msra.mxu0 0.0
    %711 = vmatprep.subr.mxu0 0.0
    %712 = vmatpush1.msra.mxu0 0.0
    %713 = vmatprep.subr.mxu0 0.0
    %714 = vmatpush1.msra.mxu0 0.0
    %715 = vmatprep.subr.mxu0 0.0
    %716 = vmatpush1.msra.mxu0 0.0
    %717 = vmatprep.subr.mxu0 0.0
    %718 = vmatpush1.msra.mxu0 0.0
    %719 = vmatprep.subr.mxu0 0.0
    %720 = vmatpush1.msra.mxu0 0.0
    %721 = vmatprep.subr.mxu0 0.0
    %722 = vmatpush1.msra.mxu0 0.0
    %723 = vmatprep.subr.mxu0 0.0
    %724 = vmatpush1.msra.mxu0 %v150
    %725 = vmatprep.subr.mxu0 0.0
    %726 = vmatpush2.msra.mxu0 0.0
    %727 = vmatprep.subr.mxu0 0.0
    %728 = vmatpush2.msra.mxu0 0.0
    %729 = vmatprep.subr.mxu0 0.0
    %730 = vmatpush2.msra.mxu0 0.0
    %731 = vmatprep.subr.mxu0 0.0
    %732 = vmatpush2.msra.mxu0 0.0
    %733 = vmatprep.subr.mxu0 0.0
    %734 = vmatpush2.msra.mxu0 0.0
    %735 = vmatprep.subr.mxu0 0.0
    %736 = vmatpush2.msra.mxu0 0.0
    %737 = vmatprep.subr.mxu0 0.0
    %738 = vmatpush2.msra.mxu0 0.0
    %739 = vmatprep.subr.mxu0 0.0
    %740 = vmatpush2.msra.mxu0 0.0
    %741 = vmatprep.subr.mxu0 0.0
    %742 = vmatpush2.msra.mxu0 0.0
    %743 = vmatprep.subr.mxu0 0.0
    %744 = vmatpush2.msra.mxu0 0.0
    %745 = vmatprep.subr.mxu0 0.0
    %746 = vmatpush2.msra.mxu0 0.0
    %747 = vmatprep.subr.mxu0 0.0
    %748 = vmatpush2.msra.mxu0 0.0
    %749 = vmatprep.subr.mxu0 0.0
    %750 = vmatpush2.msra.mxu0 0.0
    %751 = vmatprep.subr.mxu0 0.0
    %752 = vmatpush2.msra.mxu0 0.0
    %753 = vmatprep.subr.mxu0 0.0
    %754 = vmatpush2.msra.mxu0 0.0
    %755 = vmatprep.subr.mxu0 0.0
    %756 = vmatpush2.msra.mxu0 0.0
    %757 = vmatprep.mubr.f32.mxu0 0.0
    %758 = vmatmul.mubr.f32.gmra.mxu0 %v691
    %v759 = vpop.f32.mrf.mxu0
    %v760 = vadd.f32 %v142, %v759
    %v761 = vpop.f32.mrf.mxu0
    %762 = vdwg.mxu0
    %v763 = vmax.f32 %v760, 0.0
    %s764 = scalar_lea.vmem [#allocation7], 768
    %v765 = vld [vmem:[%s764] sm:$0xff]
    %v766 = vld [vmem:[%s764 + $0x8] sm:$0xff]
    %v767 = vld [vmem:[%s764 + $0x10] sm:$0xff]
    %v768 = vld [vmem:[%s764 + $0x18] sm:$0xff]
    %v769 = vld [vmem:[%s764 + $0x20] sm:$0xff]
    %v770 = vld [vmem:[%s764 + $0x28] sm:$0xff]
    %v771 = vld [vmem:[%s764 + $0x30] sm:$0xff]
    %v772 = vld [vmem:[%s764 + $0x38] sm:$0xff]
    %v773 = vld [vmem:[%s764 + $0x40] sm:$0xff]
    %v774 = vld [vmem:[%s764 + $0x48] sm:$0xff]
    %v775 = vld [vmem:[%s764 + $0x50] sm:$0xff]
    %v776 = vld [vmem:[%s764 + $0x58] sm:$0xff]
    %v777 = vld [vmem:[%s764 + $0x60] sm:$0xff]
    %v778 = vld [vmem:[%s764 + $0x68] sm:$0xff]
    %v779 = vld [vmem:[%s764 + $0x70] sm:$0xff]
    %v780 = vld [vmem:[%s764 + $0x78] sm:$0xff]
    %v781 = vld [vmem:[%s764 + $0x80] sm:$0xff]
    %v782 = vld [vmem:[%s764 + $0x88] sm:$0xff]
    %v783 = vld [vmem:[%s764 + $0x90] sm:$0xff]
    %v784 = vld [vmem:[%s764 + $0x98] sm:$0xff]
    %v785 = vld [vmem:[%s764 + $0xa0] sm:$0xff]
    %v786 = vld [vmem:[%s764 + $0xa8] sm:$0xff]
    %v787 = vld [vmem:[%s764 + $0xb0] sm:$0xff]
    %v788 = vld [vmem:[%s764 + $0xb8] sm:$0xff]
    %v789 = vld [vmem:[%s764 + $0xc0] sm:$0xff]
    %v790 = vld [vmem:[%s764 + $0xc8] sm:$0xff]
    %v791 = vld [vmem:[%s764 + $0xd0] sm:$0xff]
    %v792 = vld [vmem:[%s764 + $0xd8] sm:$0xff]
    %v793 = vld [vmem:[%s764 + $0xe0] sm:$0xff]
    %v794 = vld [vmem:[%s764 + $0xe8] sm:$0xff]
    %v795 = vld [vmem:[%s764 + $0xf0] sm:$0xff]
    %v796 = vld [vmem:[%s764 + $0xf8] sm:$0xff]
    %797 = vmatprep.subr.mxu0 %v796
    %798 = vmatpush1.msra.mxu0 %v795
    %799 = vmatprep.subr.mxu0 %v794
    %800 = vmatpush1.msra.mxu0 %v793
    %801 = vmatprep.subr.mxu0 %v792
    %802 = vmatpush1.msra.mxu0 %v791
    %803 = vmatprep.subr.mxu0 %v790
    %804 = vmatpush1.msra.mxu0 %v789
    %805 = vmatprep.subr.mxu0 %v788
    %806 = vmatpush1.msra.mxu0 %v787
    %807 = vmatprep.subr.mxu0 %v786
    %808 = vmatpush1.msra.mxu0 %v785
    %809 = vmatprep.subr.mxu0 %v784
    %810 = vmatpush1.msra.mxu0 %v783
    %811 = vmatprep.subr.mxu0 %v782
    %812 = vmatpush1.msra.mxu0 %v781
    %813 = vmatprep.subr.mxu0 %v780
    %814 = vmatpush1.msra.mxu0 %v779
    %815 = vmatprep.subr.mxu0 %v778
    %816 = vmatpush1.msra.mxu0 %v777
    %817 = vmatprep.subr.mxu0 %v776
    %818 = vmatpush1.msra.mxu0 %v775
    %819 = vmatprep.subr.mxu0 %v774
    %820 = vmatpush1.msra.mxu0 %v773
    %821 = vmatprep.subr.mxu0 %v772
    %822 = vmatpush1.msra.mxu0 %v771
    %823 = vmatprep.subr.mxu0 %v770
    %824 = vmatpush1.msra.mxu0 %v769
    %825 = vmatprep.subr.mxu0 %v768
    %826 = vmatpush1.msra.mxu0 %v767
    %827 = vmatprep.subr.mxu0 %v766
    %828 = vmatpush1.msra.mxu0 %v765
    %829 = vmatprep.subr.mxu0 0.0
    %830 = vmatpush2.msra.mxu0 0.0
    %831 = vmatprep.subr.mxu0 0.0
    %832 = vmatpush2.msra.mxu0 0.0
    %833 = vmatprep.subr.mxu0 0.0
    %834 = vmatpush2.msra.mxu0 0.0
    %835 = vmatprep.subr.mxu0 0.0
    %836 = vmatpush2.msra.mxu0 0.0
    %837 = vmatprep.subr.mxu0 0.0
    %838 = vmatpush2.msra.mxu0 0.0
    %839 = vmatprep.subr.mxu0 0.0
    %840 = vmatpush2.msra.mxu0 0.0
    %841 = vmatprep.subr.mxu0 0.0
    %842 = vmatpush2.msra.mxu0 0.0
    %843 = vmatprep.subr.mxu0 0.0
    %844 = vmatpush2.msra.mxu0 0.0
    %845 = vmatprep.subr.mxu0 0.0
    %846 = vmatpush2.msra.mxu0 0.0
    %847 = vmatprep.subr.mxu0 0.0
    %848 = vmatpush2.msra.mxu0 0.0
    %849 = vmatprep.subr.mxu0 0.0
    %850 = vmatpush2.msra.mxu0 0.0
    %851 = vmatprep.subr.mxu0 0.0
    %852 = vmatpush2.msra.mxu0 0.0
    %853 = vmatprep.subr.mxu0 0.0
    %854 = vmatpush2.msra.mxu0 0.0
    %855 = vmatprep.subr.mxu0 0.0
    %856 = vmatpush2.msra.mxu0 0.0
    %857 = vmatprep.subr.mxu0 0.0
    %858 = vmatpush2.msra.mxu0 0.0
    %859 = vmatprep.subr.mxu0 0.0
    %860 = vmatpush2.msra.mxu0 0.0
    %861 = vmatprep.mubr.f32.mxu0 0.0
    %862 = vmatmul.mubr.f32.gmra.mxu0 %v763
    %v863 = vpop.f32.mrf.mxu0
    %v864 = vadd.f32 0.0, %v863
    %v865 = vpop.f32.mrf.mxu0
    %v866 = vadd.f32 0.0, %v865
    %867 = vdwg.mxu0
    %v868 = vadd.f32 %v686, %v864
    %v869 = vadd.f32 %v687, %v866
    %s870 = scalar_lea.vmem %s0, 32
    %v871 = vld [vmem:[%s870] sm:$0xff]
    %v873 = vsel %vm144, %v871, 0
    %875 = vmatprep.subr.mxu0 0.0
    %876 = vmatpush1.msra.mxu0 0.0
    %877 = vmatprep.subr.mxu0 0.0
    %878 = vmatpush1.msra.mxu0 0.0
    %879 = vmatprep.subr.mxu0 0.0
    %880 = vmatpush1.msra.mxu0 0.0
    %881 = vmatprep.subr.mxu0 0.0
    %882 = vmatpush1.msra.mxu0 0.0
    %883 = vmatprep.subr.mxu0 0.0
    %884 = vmatpush1.msra.mxu0 0.0
    %885 = vmatprep.subr.mxu0 0.0
    %886 = vmatpush1.msra.mxu0 0.0
    %887 = vmatprep.subr.mxu0 0.0
    %888 = vmatpush1.msra.mxu0 0.0
    %889 = vmatprep.subr.mxu0 0.0
    %890 = vmatpush1.msra.mxu0 0.0
    %891 = vmatprep.subr.mxu0 0.0
    %892 = vmatpush1.msra.mxu0 0.0
    %893 = vmatprep.subr.mxu0 0.0
    %894 = vmatpush1.msra.mxu0 0.0
    %895 = vmatprep.subr.mxu0 0.0
    %896 = vmatpush1.msra.mxu0 0.0
    %897 = vmatprep.subr.mxu0 0.0
    %898 = vmatpush1.msra.mxu0 0.0
    %899 = vmatprep.subr.mxu0 0.0
    %900 = vmatpush1.msra.mxu0 0.0
    %901 = vmatprep.subr.mxu0 0.0
    %902 = vmatpush1.msra.mxu0 0.0
    %903 = vmatprep.subr.mxu0 0.0
    %904 = vmatpush1.msra.mxu0 0.0
    %905 = vmatprep.subr.mxu0 0.0
    %906 = vmatpush1.msra.mxu0 %v150
    %907 = vmatprep.subr.mxu0 0.0
    %908 = vmatpush2.msra.mxu0 0.0
    %909 = vmatprep.subr.mxu0 0.0
    %910 = vmatpush2.msra.mxu0 0.0
    %911 = vmatprep.subr.mxu0 0.0
    %912 = vmatpush2.msra.mxu0 0.0
    %913 = vmatprep.subr.mxu0 0.0
    %914 = vmatpush2.msra.mxu0 0.0
    %915 = vmatprep.subr.mxu0 0.0
    %916 = vmatpush2.msra.mxu0 0.0
    %917 = vmatprep.subr.mxu0 0.0
    %918 = vmatpush2.msra.mxu0 0.0
    %919 = vmatprep.subr.mxu0 0.0
    %920 = vmatpush2.msra.mxu0 0.0
    %921 = vmatprep.subr.mxu0 0.0
    %922 = vmatpush2.msra.mxu0 0.0
    %923 = vmatprep.subr.mxu0 0.0
    %924 = vmatpush2.msra.mxu0 0.0
    %925 = vmatprep.subr.mxu0 0.0
    %926 = vmatpush2.msra.mxu0 0.0
    %927 = vmatprep.subr.mxu0 0.0
    %928 = vmatpush2.msra.mxu0 0.0
    %929 = vmatprep.subr.mxu0 0.0
    %930 = vmatpush2.msra.mxu0 0.0
    %931 = vmatprep.subr.mxu0 0.0
    %932 = vmatpush2.msra.mxu0 0.0
    %933 = vmatprep.subr.mxu0 0.0
    %934 = vmatpush2.msra.mxu0 0.0
    %935 = vmatprep.subr.mxu0 0.0
    %936 = vmatpush2.msra.mxu0 0.0
    %937 = vmatprep.subr.mxu0 0.0
    %938 = vmatpush2.msra.mxu0 0.0
    %939 = vmatprep.mubr.f32.mxu0 0.0
    %940 = vmatmul.mubr.f32.gmra.mxu0 %v873
    %v941 = vpop.f32.mrf.mxu0
    %v942 = vadd.f32 %v142, %v941
    %v943 = vpop.f32.mrf.mxu0
    %944 = vdwg.mxu0
    %v945 = vmax.f32 %v942, 0.0
    %s946 = scalar_lea.vmem [#allocation7], 1024
    %v947 = vld [vmem:[%s946] sm:$0xff]
    %v948 = vld [vmem:[%s946 + $0x8] sm:$0xff]
    %v949 = vld [vmem:[%s946 + $0x10] sm:$0xff]
    %v950 = vld [vmem:[%s946 + $0x18] sm:$0xff]
    %v951 = vld [vmem:[%s946 + $0x20] sm:$0xff]
    %v952 = vld [vmem:[%s946 + $0x28] sm:$0xff]
    %v953 = vld [vmem:[%s946 + $0x30] sm:$0xff]
    %v954 = vld [vmem:[%s946 + $0x38] sm:$0xff]
    %v955 = vld [vmem:[%s946 + $0x40] sm:$0xff]
    %v956 = vld [vmem:[%s946 + $0x48] sm:$0xff]
    %v957 = vld [vmem:[%s946 + $0x50] sm:$0xff]
    %v958 = vld [vmem:[%s946 + $0x58] sm:$0xff]
    %v959 = vld [vmem:[%s946 + $0x60] sm:$0xff]
    %v960 = vld [vmem:[%s946 + $0x68] sm:$0xff]
    %v961 = vld [vmem:[%s946 + $0x70] sm:$0xff]
    %v962 = vld [vmem:[%s946 + $0x78] sm:$0xff]
    %v963 = vld [vmem:[%s946 + $0x80] sm:$0xff]
    %v964 = vld [vmem:[%s946 + $0x88] sm:$0xff]
    %v965 = vld [vmem:[%s946 + $0x90] sm:$0xff]
    %v966 = vld [vmem:[%s946 + $0x98] sm:$0xff]
    %v967 = vld [vmem:[%s946 + $0xa0] sm:$0xff]
    %v968 = vld [vmem:[%s946 + $0xa8] sm:$0xff]
    %v969 = vld [vmem:[%s946 + $0xb0] sm:$0xff]
    %v970 = vld [vmem:[%s946 + $0xb8] sm:$0xff]
    %v971 = vld [vmem:[%s946 + $0xc0] sm:$0xff]
    %v972 = vld [vmem:[%s946 + $0xc8] sm:$0xff]
    %v973 = vld [vmem:[%s946 + $0xd0] sm:$0xff]
    %v974 = vld [vmem:[%s946 + $0xd8] sm:$0xff]
    %v975 = vld [vmem:[%s946 + $0xe0] sm:$0xff]
    %v976 = vld [vmem:[%s946 + $0xe8] sm:$0xff]
    %v977 = vld [vmem:[%s946 + $0xf0] sm:$0xff]
    %v978 = vld [vmem:[%s946 + $0xf8] sm:$0xff]
    %979 = vmatprep.subr.mxu0 %v978
    %980 = vmatpush1.msra.mxu0 %v977
    %981 = vmatprep.subr.mxu0 %v976
    %982 = vmatpush1.msra.mxu0 %v975
    %983 = vmatprep.subr.mxu0 %v974
    %984 = vmatpush1.msra.mxu0 %v973
    %985 = vmatprep.subr.mxu0 %v972
    %986 = vmatpush1.msra.mxu0 %v971
    %987 = vmatprep.subr.mxu0 %v970
    %988 = vmatpush1.msra.mxu0 %v969
    %989 = vmatprep.subr.mxu0 %v968
    %990 = vmatpush1.msra.mxu0 %v967
    %991 = vmatprep.subr.mxu0 %v966
    %992 = vmatpush1.msra.mxu0 %v965
    %993 = vmatprep.subr.mxu0 %v964
    %994 = vmatpush1.msra.mxu0 %v963
    %995 = vmatprep.subr.mxu0 %v962
    %996 = vmatpush1.msra.mxu0 %v961
    %997 = vmatprep.subr.mxu0 %v960
    %998 = vmatpush1.msra.mxu0 %v959
    %999 = vmatprep.subr.mxu0 %v958
    %1000 = vmatpush1.msra.mxu0 %v957
    %1001 = vmatprep.subr.mxu0 %v956
    %1002 = vmatpush1.msra.mxu0 %v955
    %1003 = vmatprep.subr.mxu0 %v954
    %1004 = vmatpush1.msra.mxu0 %v953
    %1005 = vmatprep.subr.mxu0 %v952
    %1006 = vmatpush1.msra.mxu0 %v951
    %1007 = vmatprep.subr.mxu0 %v950
    %1008 = vmatpush1.msra.mxu0 %v949
    %1009 = vmatprep.subr.mxu0 %v948
    %1010 = vmatpush1.msra.mxu0 %v947
    %1011 = vmatprep.subr.mxu0 0.0
    %1012 = vmatpush2.msra.mxu0 0.0
    %1013 = vmatprep.subr.mxu0 0.0
    %1014 = vmatpush2.msra.mxu0 0.0
    %1015 = vmatprep.subr.mxu0 0.0
    %1016 = vmatpush2.msra.mxu0 0.0
    %1017 = vmatprep.subr.mxu0 0.0
    %1018 = vmatpush2.msra.mxu0 0.0
    %1019 = vmatprep.subr.mxu0 0.0
    %1020 = vmatpush2.msra.mxu0 0.0
    %1021 = vmatprep.subr.mxu0 0.0
    %1022 = vmatpush2.msra.mxu0 0.0
    %1023 = vmatprep.subr.mxu0 0.0
    %1024 = vmatpush2.msra.mxu0 0.0
    %1025 = vmatprep.subr.mxu0 0.0
    %1026 = vmatpush2.msra.mxu0 0.0
    %1027 = vmatprep.subr.mxu0 0.0
    %1028 = vmatpush2.msra.mxu0 0.0
    %1029 = vmatprep.subr.mxu0 0.0
    %1030 = vmatpush2.msra.mxu0 0.0
    %1031 = vmatprep.subr.mxu0 0.0
    %1032 = vmatpush2.msra.mxu0 0.0
    %1033 = vmatprep.subr.mxu0 0.0
    %1034 = vmatpush2.msra.mxu0 0.0
    %1035 = vmatprep.subr.mxu0 0.0
    %1036 = vmatpush2.msra.mxu0 0.0
    %1037 = vmatprep.subr.mxu0 0.0
    %1038 = vmatpush2.msra.mxu0 0.0
    %1039 = vmatprep.subr.mxu0 0.0
    %1040 = vmatpush2.msra.mxu0 0.0
    %1041 = vmatprep.subr.mxu0 0.0
    %1042 = vmatpush2.msra.mxu0 0.0
    %1043 = vmatprep.mubr.f32.mxu0 0.0
    %1044 = vmatmul.mubr.f32.gmra.mxu0 %v945
    %v1045 = vpop.f32.mrf.mxu0
    %v1046 = vadd.f32 0.0, %v1045
    %v1047 = vpop.f32.mrf.mxu0
    %v1048 = vadd.f32 0.0, %v1047
    %1049 = vdwg.mxu0
    %v1050 = vadd.f32 %v868, %v1046
    %v1051 = vadd.f32 %v869, %v1048
    %s1052 = scalar_lea.vmem %s0, 40
    %v1053 = vld [vmem:[%s1052] sm:$0xff]
    %v1055 = vsel %vm144, %v1053, 0
    %1057 = vmatprep.subr.mxu0 0.0
    %1058 = vmatpush1.msra.mxu0 0.0
    %1059 = vmatprep.subr.mxu0 0.0
    %1060 = vmatpush1.msra.mxu0 0.0
    %1061 = vmatprep.subr.mxu0 0.0
    %1062 = vmatpush1.msra.mxu0 0.0
    %1063 = vmatprep.subr.mxu0 0.0
    %1064 = vmatpush1.msra.mxu0 0.0
    %1065 = vmatprep.subr.mxu0 0.0
    %1066 = vmatpush1.msra.mxu0 0.0
    %1067 = vmatprep.subr.mxu0 0.0
    %1068 = vmatpush1.msra.mxu0 0.0
    %1069 = vmatprep.subr.mxu0 0.0
    %1070 = vmatpush1.msra.mxu0 0.0
    %1071 = vmatprep.subr.mxu0 0.0
    %1072 = vmatpush1.msra.mxu0 0.0
    %1073 = vmatprep.subr.mxu0 0.0
    %1074 = vmatpush1.msra.mxu0 0.0
    %1075 = vmatprep.subr.mxu0 0.0
    %1076 = vmatpush1.msra.mxu0 0.0
    %1077 = vmatprep.subr.mxu0 0.0
    %1078 = vmatpush1.msra.mxu0 0.0
    %1079 = vmatprep.subr.mxu0 0.0
    %1080 = vmatpush1.msra.mxu0 0.0
    %1081 = vmatprep.subr.mxu0 0.0
    %1082 = vmatpush1.msra.mxu0 0.0
    %1083 = vmatprep.subr.mxu0 0.0
    %1084 = vmatpush1.msra.mxu0 0.0
    %1085 = vmatprep.subr.mxu0 0.0
    %1086 = vmatpush1.msra.mxu0 0.0
    %1087 = vmatprep.subr.mxu0 0.0
    %1088 = vmatpush1.msra.mxu0 %v150
    %1089 = vmatprep.subr.mxu0 0.0
    %1090 = vmatpush2.msra.mxu0 0.0
    %1091 = vmatprep.subr.mxu0 0.0
    %1092 = vmatpush2.msra.mxu0 0.0
    %1093 = vmatprep.subr.mxu0 0.0
    %1094 = vmatpush2.msra.mxu0 0.0
    %1095 = vmatprep.subr.mxu0 0.0
    %1096 = vmatpush2.msra.mxu0 0.0
    %1097 = vmatprep.subr.mxu0 0.0
    %1098 = vmatpush2.msra.mxu0 0.0
    %1099 = vmatprep.subr.mxu0 0.0
    %1100 = vmatpush2.msra.mxu0 0.0
    %1101 = vmatprep.subr.mxu0 0.0
    %1102 = vmatpush2.msra.mxu0 0.0
    %1103 = vmatprep.subr.mxu0 0.0
    %1104 = vmatpush2.msra.mxu0 0.0
    %1105 = vmatprep.subr.mxu0 0.0
    %1106 = vmatpush2.msra.mxu0 0.0
    %1107 = vmatprep.subr.mxu0 0.0
    %1108 = vmatpush2.msra.mxu0 0.0
    %1109 = vmatprep.subr.mxu0 0.0
    %1110 = vmatpush2.msra.mxu0 0.0
    %1111 = vmatprep.subr.mxu0 0.0
    %1112 = vmatpush2.msra.mxu0 0.0
    %1113 = vmatprep.subr.mxu0 0.0
    %1114 = vmatpush2.msra.mxu0 0.0
    %1115 = vmatprep.subr.mxu0 0.0
    %1116 = vmatpush2.msra.mxu0 0.0
    %1117 = vmatprep.subr.mxu0 0.0
    %1118 = vmatpush2.msra.mxu0 0.0
    %1119 = vmatprep.subr.mxu0 0.0
    %1120 = vmatpush2.msra.mxu0 0.0
    %1121 = vmatprep.mubr.f32.mxu0 0.0
    %1122 = vmatmul.mubr.f32.gmra.mxu0 %v1055
    %v1123 = vpop.f32.mrf.mxu0
    %v1124 = vadd.f32 %v142, %v1123
    %v1125 = vpop.f32.mrf.mxu0
    %1126 = vdwg.mxu0
    %v1127 = vmax.f32 %v1124, 0.0
    %s1128 = scalar_lea.vmem [#allocation7], 1280
    %v1129 = vld [vmem:[%s1128] sm:$0xff]
    %v1130 = vld [vmem:[%s1128 + $0x8] sm:$0xff]
    %v1131 = vld [vmem:[%s1128 + $0x10] sm:$0xff]
    %v1132 = vld [vmem:[%s1128 + $0x18] sm:$0xff]
    %v1133 = vld [vmem:[%s1128 + $0x20] sm:$0xff]
    %v1134 = vld [vmem:[%s1128 + $0x28] sm:$0xff]
    %v1135 = vld [vmem:[%s1128 + $0x30] sm:$0xff]
    %v1136 = vld [vmem:[%s1128 + $0x38] sm:$0xff]
    %v1137 = vld [vmem:[%s1128 + $0x40] sm:$0xff]
    %v1138 = vld [vmem:[%s1128 + $0x48] sm:$0xff]
    %v1139 = vld [vmem:[%s1128 + $0x50] sm:$0xff]
    %v1140 = vld [vmem:[%s1128 + $0x58] sm:$0xff]
    %v1141 = vld [vmem:[%s1128 + $0x60] sm:$0xff]
    %v1142 = vld [vmem:[%s1128 + $0x68] sm:$0xff]
    %v1143 = vld [vmem:[%s1128 + $0x70] sm:$0xff]
    %v1144 = vld [vmem:[%s1128 + $0x78] sm:$0xff]
    %v1145 = vld [vmem:[%s1128 + $0x80] sm:$0xff]
    %v1146 = vld [vmem:[%s1128 + $0x88] sm:$0xff]
    %v1147 = vld [vmem:[%s1128 + $0x90] sm:$0xff]
    %v1148 = vld [vmem:[%s1128 + $0x98] sm:$0xff]
    %v1149 = vld [vmem:[%s1128 + $0xa0] sm:$0xff]
    %v1150 = vld [vmem:[%s1128 + $0xa8] sm:$0xff]
    %v1151 = vld [vmem:[%s1128 + $0xb0] sm:$0xff]
    %v1152 = vld [vmem:[%s1128 + $0xb8] sm:$0xff]
    %v1153 = vld [vmem:[%s1128 + $0xc0] sm:$0xff]
    %v1154 = vld [vmem:[%s1128 + $0xc8] sm:$0xff]
    %v1155 = vld [vmem:[%s1128 + $0xd0] sm:$0xff]
    %v1156 = vld [vmem:[%s1128 + $0xd8] sm:$0xff]
    %v1157 = vld [vmem:[%s1128 + $0xe0] sm:$0xff]
    %v1158 = vld [vmem:[%s1128 + $0xe8] sm:$0xff]
    %v1159 = vld [vmem:[%s1128 + $0xf0] sm:$0xff]
    %v1160 = vld [vmem:[%s1128 + $0xf8] sm:$0xff]
    %1161 = vmatprep.subr.mxu0 %v1160
    %1162 = vmatpush1.msra.mxu0 %v1159
    %1163 = vmatprep.subr.mxu0 %v1158
    %1164 = vmatpush1.msra.mxu0 %v1157
    %1165 = vmatprep.subr.mxu0 %v1156
    %1166 = vmatpush1.msra.mxu0 %v1155
    %1167 = vmatprep.subr.mxu0 %v1154
    %1168 = vmatpush1.msra.mxu0 %v1153
    %1169 = vmatprep.subr.mxu0 %v1152
    %1170 = vmatpush1.msra.mxu0 %v1151
    %1171 = vmatprep.subr.mxu0 %v1150
    %1172 = vmatpush1.msra.mxu0 %v1149
    %1173 = vmatprep.subr.mxu0 %v1148
    %1174 = vmatpush1.msra.mxu0 %v1147
    %1175 = vmatprep.subr.mxu0 %v1146
    %1176 = vmatpush1.msra.mxu0 %v1145
    %1177 = vmatprep.subr.mxu0 %v1144
    %1178 = vmatpush1.msra.mxu0 %v1143
    %1179 = vmatprep.subr.mxu0 %v1142
    %1180 = vmatpush1.msra.mxu0 %v1141
    %1181 = vmatprep.subr.mxu0 %v1140
    %1182 = vmatpush1.msra.mxu0 %v1139
    %1183 = vmatprep.subr.mxu0 %v1138
    %1184 = vmatpush1.msra.mxu0 %v1137
    %1185 = vmatprep.subr.mxu0 %v1136
    %1186 = vmatpush1.msra.mxu0 %v1135
    %1187 = vmatprep.subr.mxu0 %v1134
    %1188 = vmatpush1.msra.mxu0 %v1133
    %1189 = vmatprep.subr.mxu0 %v1132
    %1190 = vmatpush1.msra.mxu0 %v1131
    %1191 = vmatprep.subr.mxu0 %v1130
    %1192 = vmatpush1.msra.mxu0 %v1129
    %1193 = vmatprep.subr.mxu0 0.0
    %1194 = vmatpush2.msra.mxu0 0.0
    %1195 = vmatprep.subr.mxu0 0.0
    %1196 = vmatpush2.msra.mxu0 0.0
    %1197 = vmatprep.subr.mxu0 0.0
    %1198 = vmatpush2.msra.mxu0 0.0
    %1199 = vmatprep.subr.mxu0 0.0
    %1200 = vmatpush2.msra.mxu0 0.0
    %1201 = vmatprep.subr.mxu0 0.0
    %1202 = vmatpush2.msra.mxu0 0.0
    %1203 = vmatprep.subr.mxu0 0.0
    %1204 = vmatpush2.msra.mxu0 0.0
    %1205 = vmatprep.subr.mxu0 0.0
    %1206 = vmatpush2.msra.mxu0 0.0
    %1207 = vmatprep.subr.mxu0 0.0
    %1208 = vmatpush2.msra.mxu0 0.0
    %1209 = vmatprep.subr.mxu0 0.0
    %1210 = vmatpush2.msra.mxu0 0.0
    %1211 = vmatprep.subr.mxu0 0.0
    %1212 = vmatpush2.msra.mxu0 0.0
    %1213 = vmatprep.subr.mxu0 0.0
    %1214 = vmatpush2.msra.mxu0 0.0
    %1215 = vmatprep.subr.mxu0 0.0
    %1216 = vmatpush2.msra.mxu0 0.0
    %1217 = vmatprep.subr.mxu0 0.0
    %1218 = vmatpush2.msra.mxu0 0.0
    %1219 = vmatprep.subr.mxu0 0.0
    %1220 = vmatpush2.msra.mxu0 0.0
    %1221 = vmatprep.subr.mxu0 0.0
    %1222 = vmatpush2.msra.mxu0 0.0
    %1223 = vmatprep.subr.mxu0 0.0
    %1224 = vmatpush2.msra.mxu0 0.0
    %1225 = vmatprep.mubr.f32.mxu0 0.0
    %1226 = vmatmul.mubr.f32.gmra.mxu0 %v1127
    %v1227 = vpop.f32.mrf.mxu0
    %v1228 = vadd.f32 0.0, %v1227
    %v1229 = vpop.f32.mrf.mxu0
    %v1230 = vadd.f32 0.0, %v1229
    %1231 = vdwg.mxu0
    %v1232 = vadd.f32 %v1050, %v1228
    %v1233 = vadd.f32 %v1051, %v1230
    %s1234 = scalar_lea.vmem %s0, 48
    %v1235 = vld [vmem:[%s1234] sm:$0xff]
    %v1237 = vsel %vm144, %v1235, 0
    %1239 = vmatprep.subr.mxu0 0.0
    %1240 = vmatpush1.msra.mxu0 0.0
    %1241 = vmatprep.subr.mxu0 0.0
    %1242 = vmatpush1.msra.mxu0 0.0
    %1243 = vmatprep.subr.mxu0 0.0
    %1244 = vmatpush1.msra.mxu0 0.0
    %1245 = vmatprep.subr.mxu0 0.0
    %1246 = vmatpush1.msra.mxu0 0.0
    %1247 = vmatprep.subr.mxu0 0.0
    %1248 = vmatpush1.msra.mxu0 0.0
    %1249 = vmatprep.subr.mxu0 0.0
    %1250 = vmatpush1.msra.mxu0 0.0
    %1251 = vmatprep.subr.mxu0 0.0
    %1252 = vmatpush1.msra.mxu0 0.0
    %1253 = vmatprep.subr.mxu0 0.0
    %1254 = vmatpush1.msra.mxu0 0.0
    %1255 = vmatprep.subr.mxu0 0.0
    %1256 = vmatpush1.msra.mxu0 0.0
    %1257 = vmatprep.subr.mxu0 0.0
    %1258 = vmatpush1.msra.mxu0 0.0
    %1259 = vmatprep.subr.mxu0 0.0
    %1260 = vmatpush1.msra.mxu0 0.0
    %1261 = vmatprep.subr.mxu0 0.0
    %1262 = vmatpush1.msra.mxu0 0.0
    %1263 = vmatprep.subr.mxu0 0.0
    %1264 = vmatpush1.msra.mxu0 0.0
    %1265 = vmatprep.subr.mxu0 0.0
    %1266 = vmatpush1.msra.mxu0 0.0
    %1267 = vmatprep.subr.mxu0 0.0
    %1268 = vmatpush1.msra.mxu0 0.0
    %1269 = vmatprep.subr.mxu0 0.0
    %1270 = vmatpush1.msra.mxu0 %v150
    %1271 = vmatprep.subr.mxu0 0.0
    %1272 = vmatpush2.msra.mxu0 0.0
    %1273 = vmatprep.subr.mxu0 0.0
    %1274 = vmatpush2.msra.mxu0 0.0
    %1275 = vmatprep.subr.mxu0 0.0
    %1276 = vmatpush2.msra.mxu0 0.0
    %1277 = vmatprep.subr.mxu0 0.0
    %1278 = vmatpush2.msra.mxu0 0.0
    %1279 = vmatprep.subr.mxu0 0.0
    %1280 = vmatpush2.msra.mxu0 0.0
    %1281 = vmatprep.subr.mxu0 0.0
    %1282 = vmatpush2.msra.mxu0 0.0
    %1283 = vmatprep.subr.mxu0 0.0
    %1284 = vmatpush2.msra.mxu0 0.0
    %1285 = vmatprep.subr.mxu0 0.0
    %1286 = vmatpush2.msra.mxu0 0.0
    %1287 = vmatprep.subr.mxu0 0.0
    %1288 = vmatpush2.msra.mxu0 0.0
    %1289 = vmatprep.subr.mxu0 0.0
    %1290 = vmatpush2.msra.mxu0 0.0
    %1291 = vmatprep.subr.mxu0 0.0
    %1292 = vmatpush2.msra.mxu0 0.0
    %1293 = vmatprep.subr.mxu0 0.0
    %1294 = vmatpush2.msra.mxu0 0.0
    %1295 = vmatprep.subr.mxu0 0.0
    %1296 = vmatpush2.msra.mxu0 0.0
    %1297 = vmatprep.subr.mxu0 0.0
    %1298 = vmatpush2.msra.mxu0 0.0
    %1299 = vmatprep.subr.mxu0 0.0
    %1300 = vmatpush2.msra.mxu0 0.0
    %1301 = vmatprep.subr.mxu0 0.0
    %1302 = vmatpush2.msra.mxu0 0.0
    %1303 = vmatprep.mubr.f32.mxu0 0.0
    %1304 = vmatmul.mubr.f32.gmra.mxu0 %v1237
    %v1305 = vpop.f32.mrf.mxu0
    %v1306 = vadd.f32 %v142, %v1305
    %v1307 = vpop.f32.mrf.mxu0
    %1308 = vdwg.mxu0
    %v1309 = vmax.f32 %v1306, 0.0
    %s1310 = scalar_lea.vmem [#allocation7], 1536
    %v1311 = vld [vmem:[%s1310] sm:$0xff]
    %v1312 = vld [vmem:[%s1310 + $0x8] sm:$0xff]
    %v1313 = vld [vmem:[%s1310 + $0x10] sm:$0xff]
    %v1314 = vld [vmem:[%s1310 + $0x18] sm:$0xff]
    %v1315 = vld [vmem:[%s1310 + $0x20] sm:$0xff]
    %v1316 = vld [vmem:[%s1310 + $0x28] sm:$0xff]
    %v1317 = vld [vmem:[%s1310 + $0x30] sm:$0xff]
    %v1318 = vld [vmem:[%s1310 + $0x38] sm:$0xff]
    %v1319 = vld [vmem:[%s1310 + $0x40] sm:$0xff]
    %v1320 = vld [vmem:[%s1310 + $0x48] sm:$0xff]
    %v1321 = vld [vmem:[%s1310 + $0x50] sm:$0xff]
    %v1322 = vld [vmem:[%s1310 + $0x58] sm:$0xff]
    %v1323 = vld [vmem:[%s1310 + $0x60] sm:$0xff]
    %v1324 = vld [vmem:[%s1310 + $0x68] sm:$0xff]
    %v1325 = vld [vmem:[%s1310 + $0x70] sm:$0xff]
    %v1326 = vld [vmem:[%s1310 + $0x78] sm:$0xff]
    %v1327 = vld [vmem:[%s1310 + $0x80] sm:$0xff]
    %v1328 = vld [vmem:[%s1310 + $0x88] sm:$0xff]
    %v1329 = vld [vmem:[%s1310 + $0x90] sm:$0xff]
    %v1330 = vld [vmem:[%s1310 + $0x98] sm:$0xff]
    %v1331 = vld [vmem:[%s1310 + $0xa0] sm:$0xff]
    %v1332 = vld [vmem:[%s1310 + $0xa8] sm:$0xff]
    %v1333 = vld [vmem:[%s1310 + $0xb0] sm:$0xff]
    %v1334 = vld [vmem:[%s1310 + $0xb8] sm:$0xff]
    %v1335 = vld [vmem:[%s1310 + $0xc0] sm:$0xff]
    %v1336 = vld [vmem:[%s1310 + $0xc8] sm:$0xff]
    %v1337 = vld [vmem:[%s1310 + $0xd0] sm:$0xff]
    %v1338 = vld [vmem:[%s1310 + $0xd8] sm:$0xff]
    %v1339 = vld [vmem:[%s1310 + $0xe0] sm:$0xff]
    %v1340 = vld [vmem:[%s1310 + $0xe8] sm:$0xff]
    %v1341 = vld [vmem:[%s1310 + $0xf0] sm:$0xff]
    %v1342 = vld [vmem:[%s1310 + $0xf8] sm:$0xff]
    %1343 = vmatprep.subr.mxu0 %v1342
    %1344 = vmatpush1.msra.mxu0 %v1341
    %1345 = vmatprep.subr.mxu0 %v1340
    %1346 = vmatpush1.msra.mxu0 %v1339
    %1347 = vmatprep.subr.mxu0 %v1338
    %1348 = vmatpush1.msra.mxu0 %v1337
    %1349 = vmatprep.subr.mxu0 %v1336
    %1350 = vmatpush1.msra.mxu0 %v1335
    %1351 = vmatprep.subr.mxu0 %v1334
    %1352 = vmatpush1.msra.mxu0 %v1333
    %1353 = vmatprep.subr.mxu0 %v1332
    %1354 = vmatpush1.msra.mxu0 %v1331
    %1355 = vmatprep.subr.mxu0 %v1330
    %1356 = vmatpush1.msra.mxu0 %v1329
    %1357 = vmatprep.subr.mxu0 %v1328
    %1358 = vmatpush1.msra.mxu0 %v1327
    %1359 = vmatprep.subr.mxu0 %v1326
    %1360 = vmatpush1.msra.mxu0 %v1325
    %1361 = vmatprep.subr.mxu0 %v1324
    %1362 = vmatpush1.msra.mxu0 %v1323
    %1363 = vmatprep.subr.mxu0 %v1322
    %1364 = vmatpush1.msra.mxu0 %v1321
    %1365 = vmatprep.subr.mxu0 %v1320
    %1366 = vmatpush1.msra.mxu0 %v1319
    %1367 = vmatprep.subr.mxu0 %v1318
    %1368 = vmatpush1.msra.mxu0 %v1317
    %1369 = vmatprep.subr.mxu0 %v1316
    %1370 = vmatpush1.msra.mxu0 %v1315
    %1371 = vmatprep.subr.mxu0 %v1314
    %1372 = vmatpush1.msra.mxu0 %v1313
    %1373 = vmatprep.subr.mxu0 %v1312
    %1374 = vmatpush1.msra.mxu0 %v1311
    %1375 = vmatprep.subr.mxu0 0.0
    %1376 = vmatpush2.msra.mxu0 0.0
    %1377 = vmatprep.subr.mxu0 0.0
    %1378 = vmatpush2.msra.mxu0 0.0
    %1379 = vmatprep.subr.mxu0 0.0
    %1380 = vmatpush2.msra.mxu0 0.0
    %1381 = vmatprep.subr.mxu0 0.0
    %1382 = vmatpush2.msra.mxu0 0.0
    %1383 = vmatprep.subr.mxu0 0.0
    %1384 = vmatpush2.msra.mxu0 0.0
    %1385 = vmatprep.subr.mxu0 0.0
    %1386 = vmatpush2.msra.mxu0 0.0
    %1387 = vmatprep.subr.mxu0 0.0
    %1388 = vmatpush2.msra.mxu0 0.0
    %1389 = vmatprep.subr.mxu0 0.0
    %1390 = vmatpush2.msra.mxu0 0.0
    %1391 = vmatprep.subr.mxu0 0.0
    %1392 = vmatpush2.msra.mxu0 0.0
    %1393 = vmatprep.subr.mxu0 0.0
    %1394 = vmatpush2.msra.mxu0 0.0
    %1395 = vmatprep.subr.mxu0 0.0
    %1396 = vmatpush2.msra.mxu0 0.0
    %1397 = vmatprep.subr.mxu0 0.0
    %1398 = vmatpush2.msra.mxu0 0.0
    %1399 = vmatprep.subr.mxu0 0.0
    %1400 = vmatpush2.msra.mxu0 0.0
    %1401 = vmatprep.subr.mxu0 0.0
    %1402 = vmatpush2.msra.mxu0 0.0
    %1403 = vmatprep.subr.mxu0 0.0
    %1404 = vmatpush2.msra.mxu0 0.0
    %1405 = vmatprep.subr.mxu0 0.0
    %1406 = vmatpush2.msra.mxu0 0.0
    %1407 = vmatprep.mubr.f32.mxu0 0.0
    %1408 = vmatmul.mubr.f32.gmra.mxu0 %v1309
    %v1409 = vpop.f32.mrf.mxu0
    %v1410 = vadd.f32 0.0, %v1409
    %v1411 = vpop.f32.mrf.mxu0
    %v1412 = vadd.f32 0.0, %v1411
    %1413 = vdwg.mxu0
    %v1414 = vadd.f32 %v1232, %v1410
    %v1415 = vadd.f32 %v1233, %v1412
    %s1416 = scalar_lea.vmem %s0, 56
    %v1417 = vld [vmem:[%s1416] sm:$0xff]
    %v1419 = vsel %vm144, %v1417, 0
    %1421 = vmatprep.subr.mxu0 0.0
    %1422 = vmatpush1.msra.mxu0 0.0
    %1423 = vmatprep.subr.mxu0 0.0
    %1424 = vmatpush1.msra.mxu0 0.0
    %1425 = vmatprep.subr.mxu0 0.0
    %1426 = vmatpush1.msra.mxu0 0.0
    %1427 = vmatprep.subr.mxu0 0.0
    %1428 = vmatpush1.msra.mxu0 0.0
    %1429 = vmatprep.subr.mxu0 0.0
    %1430 = vmatpush1.msra.mxu0 0.0
    %1431 = vmatprep.subr.mxu0 0.0
    %1432 = vmatpush1.msra.mxu0 0.0
    %1433 = vmatprep.subr.mxu0 0.0
    %1434 = vmatpush1.msra.mxu0 0.0
    %1435 = vmatprep.subr.mxu0 0.0
    %1436 = vmatpush1.msra.mxu0 0.0
    %1437 = vmatprep.subr.mxu0 0.0
    %1438 = vmatpush1.msra.mxu0 0.0
    %1439 = vmatprep.subr.mxu0 0.0
    %1440 = vmatpush1.msra.mxu0 0.0
    %1441 = vmatprep.subr.mxu0 0.0
    %1442 = vmatpush1.msra.mxu0 0.0
    %1443 = vmatprep.subr.mxu0 0.0
    %1444 = vmatpush1.msra.mxu0 0.0
    %1445 = vmatprep.subr.mxu0 0.0
    %1446 = vmatpush1.msra.mxu0 0.0
    %1447 = vmatprep.subr.mxu0 0.0
    %1448 = vmatpush1.msra.mxu0 0.0
    %1449 = vmatprep.subr.mxu0 0.0
    %1450 = vmatpush1.msra.mxu0 0.0
    %1451 = vmatprep.subr.mxu0 0.0
    %1452 = vmatpush1.msra.mxu0 %v150
    %1453 = vmatprep.subr.mxu0 0.0
    %1454 = vmatpush2.msra.mxu0 0.0
    %1455 = vmatprep.subr.mxu0 0.0
    %1456 = vmatpush2.msra.mxu0 0.0
    %1457 = vmatprep.subr.mxu0 0.0
    %1458 = vmatpush2.msra.mxu0 0.0
    %1459 = vmatprep.subr.mxu0 0.0
    %1460 = vmatpush2.msra.mxu0 0.0
    %1461 = vmatprep.subr.mxu0 0.0
    %1462 = vmatpush2.msra.mxu0 0.0
    %1463 = vmatprep.subr.mxu0 0.0
    %1464 = vmatpush2.msra.mxu0 0.0
    %1465 = vmatprep.subr.mxu0 0.0
    %1466 = vmatpush2.msra.mxu0 0.0
    %1467 = vmatprep.subr.mxu0 0.0
    %1468 = vmatpush2.msra.mxu0 0.0
    %1469 = vmatprep.subr.mxu0 0.0
    %1470 = vmatpush2.msra.mxu0 0.0
    %1471 = vmatprep.subr.mxu0 0.0
    %1472 = vmatpush2.msra.mxu0 0.0
    %1473 = vmatprep.subr.mxu0 0.0
    %1474 = vmatpush2.msra.mxu0 0.0
    %1475 = vmatprep.subr.mxu0 0.0
    %1476 = vmatpush2.msra.mxu0 0.0
    %1477 = vmatprep.subr.mxu0 0.0
    %1478 = vmatpush2.msra.mxu0 0.0
    %1479 = vmatprep.subr.mxu0 0.0
    %1480 = vmatpush2.msra.mxu0 0.0
    %1481 = vmatprep.subr.mxu0 0.0
    %1482 = vmatpush2.msra.mxu0 0.0
    %1483 = vmatprep.subr.mxu0 0.0
    %1484 = vmatpush2.msra.mxu0 0.0
    %1485 = vmatprep.mubr.f32.mxu0 0.0
    %1486 = vmatmul.mubr.f32.gmra.mxu0 %v1419
    %v1487 = vpop.f32.mrf.mxu0
    %v1488 = vadd.f32 %v142, %v1487
    %v1489 = vpop.f32.mrf.mxu0
    %1490 = vdwg.mxu0
    %v1491 = vmax.f32 %v1488, 0.0
    %s1492 = scalar_lea.vmem [#allocation7], 1792
    %v1493 = vld [vmem:[%s1492] sm:$0xff]
    %v1494 = vld [vmem:[%s1492 + $0x8] sm:$0xff]
    %v1495 = vld [vmem:[%s1492 + $0x10] sm:$0xff]
    %v1496 = vld [vmem:[%s1492 + $0x18] sm:$0xff]
    %v1497 = vld [vmem:[%s1492 + $0x20] sm:$0xff]
    %v1498 = vld [vmem:[%s1492 + $0x28] sm:$0xff]
    %v1499 = vld [vmem:[%s1492 + $0x30] sm:$0xff]
    %v1500 = vld [vmem:[%s1492 + $0x38] sm:$0xff]
    %v1501 = vld [vmem:[%s1492 + $0x40] sm:$0xff]
    %v1502 = vld [vmem:[%s1492 + $0x48] sm:$0xff]
    %v1503 = vld [vmem:[%s1492 + $0x50] sm:$0xff]
    %v1504 = vld [vmem:[%s1492 + $0x58] sm:$0xff]
    %v1505 = vld [vmem:[%s1492 + $0x60] sm:$0xff]
    %v1506 = vld [vmem:[%s1492 + $0x68] sm:$0xff]
    %v1507 = vld [vmem:[%s1492 + $0x70] sm:$0xff]
    %v1508 = vld [vmem:[%s1492 + $0x78] sm:$0xff]
    %v1509 = vld [vmem:[%s1492 + $0x80] sm:$0xff]
    %v1510 = vld [vmem:[%s1492 + $0x88] sm:$0xff]
    %v1511 = vld [vmem:[%s1492 + $0x90] sm:$0xff]
    %v1512 = vld [vmem:[%s1492 + $0x98] sm:$0xff]
    %v1513 = vld [vmem:[%s1492 + $0xa0] sm:$0xff]
    %v1514 = vld [vmem:[%s1492 + $0xa8] sm:$0xff]
    %v1515 = vld [vmem:[%s1492 + $0xb0] sm:$0xff]
    %v1516 = vld [vmem:[%s1492 + $0xb8] sm:$0xff]
    %v1517 = vld [vmem:[%s1492 + $0xc0] sm:$0xff]
    %v1518 = vld [vmem:[%s1492 + $0xc8] sm:$0xff]
    %v1519 = vld [vmem:[%s1492 + $0xd0] sm:$0xff]
    %v1520 = vld [vmem:[%s1492 + $0xd8] sm:$0xff]
    %v1521 = vld [vmem:[%s1492 + $0xe0] sm:$0xff]
    %v1522 = vld [vmem:[%s1492 + $0xe8] sm:$0xff]
    %v1523 = vld [vmem:[%s1492 + $0xf0] sm:$0xff]
    %v1524 = vld [vmem:[%s1492 + $0xf8] sm:$0xff]
    %1525 = vmatprep.subr.mxu0 %v1524
    %1526 = vmatpush1.msra.mxu0 %v1523
    %1527 = vmatprep.subr.mxu0 %v1522
    %1528 = vmatpush1.msra.mxu0 %v1521
    %1529 = vmatprep.subr.mxu0 %v1520
    %1530 = vmatpush1.msra.mxu0 %v1519
    %1531 = vmatprep.subr.mxu0 %v1518
    %1532 = vmatpush1.msra.mxu0 %v1517
    %1533 = vmatprep.subr.mxu0 %v1516
    %1534 = vmatpush1.msra.mxu0 %v1515
    %1535 = vmatprep.subr.mxu0 %v1514
    %1536 = vmatpush1.msra.mxu0 %v1513
    %1537 = vmatprep.subr.mxu0 %v1512
    %1538 = vmatpush1.msra.mxu0 %v1511
    %1539 = vmatprep.subr.mxu0 %v1510
    %1540 = vmatpush1.msra.mxu0 %v1509
    %1541 = vmatprep.subr.mxu0 %v1508
    %1542 = vmatpush1.msra.mxu0 %v1507
    %1543 = vmatprep.subr.mxu0 %v1506
    %1544 = vmatpush1.msra.mxu0 %v1505
    %1545 = vmatprep.subr.mxu0 %v1504
    %1546 = vmatpush1.msra.mxu0 %v1503
    %1547 = vmatprep.subr.mxu0 %v1502
    %1548 = vmatpush1.msra.mxu0 %v1501
    %1549 = vmatprep.subr.mxu0 %v1500
    %1550 = vmatpush1.msra.mxu0 %v1499
    %1551 = vmatprep.subr.mxu0 %v1498
    %1552 = vmatpush1.msra.mxu0 %v1497
    %1553 = vmatprep.subr.mxu0 %v1496
    %1554 = vmatpush1.msra.mxu0 %v1495
    %1555 = vmatprep.subr.mxu0 %v1494
    %1556 = vmatpush1.msra.mxu0 %v1493
    %1557 = vmatprep.subr.mxu0 0.0
    %1558 = vmatpush2.msra.mxu0 0.0
    %1559 = vmatprep.subr.mxu0 0.0
    %1560 = vmatpush2.msra.mxu0 0.0
    %1561 = vmatprep.subr.mxu0 0.0
    %1562 = vmatpush2.msra.mxu0 0.0
    %1563 = vmatprep.subr.mxu0 0.0
    %1564 = vmatpush2.msra.mxu0 0.0
    %1565 = vmatprep.subr.mxu0 0.0
    %1566 = vmatpush2.msra.mxu0 0.0
    %1567 = vmatprep.subr.mxu0 0.0
    %1568 = vmatpush2.msra.mxu0 0.0
    %1569 = vmatprep.subr.mxu0 0.0
    %1570 = vmatpush2.msra.mxu0 0.0
    %1571 = vmatprep.subr.mxu0 0.0
    %1572 = vmatpush2.msra.mxu0 0.0
    %1573 = vmatprep.subr.mxu0 0.0
    %1574 = vmatpush2.msra.mxu0 0.0
    %1575 = vmatprep.subr.mxu0 0.0
    %1576 = vmatpush2.msra.mxu0 0.0
    %1577 = vmatprep.subr.mxu0 0.0
    %1578 = vmatpush2.msra.mxu0 0.0
    %1579 = vmatprep.subr.mxu0 0.0
    %1580 = vmatpush2.msra.mxu0 0.0
    %1581 = vmatprep.subr.mxu0 0.0
    %1582 = vmatpush2.msra.mxu0 0.0
    %1583 = vmatprep.subr.mxu0 0.0
    %1584 = vmatpush2.msra.mxu0 0.0
    %1585 = vmatprep.subr.mxu0 0.0
    %1586 = vmatpush2.msra.mxu0 0.0
    %1587 = vmatprep.subr.mxu0 0.0
    %1588 = vmatpush2.msra.mxu0 0.0
    %1589 = vmatprep.mubr.f32.mxu0 0.0
    %1590 = vmatmul.mubr.f32.gmra.mxu0 %v1491
    %v1591 = vpop.f32.mrf.mxu0
    %v1592 = vadd.f32 0.0, %v1591
    %v1593 = vpop.f32.mrf.mxu0
    %v1594 = vadd.f32 0.0, %v1593
    %1595 = vdwg.mxu0
    %v1596 = vadd.f32 %v1414, %v1592
    %v1597 = vadd.f32 %v1415, %v1594
    %s1598 = scalar_lea.vmem %s0, 64
    %v1599 = vld [vmem:[%s1598] sm:$0xff]
    %v1601 = vsel %vm144, %v1599, 0
    %1603 = vmatprep.subr.mxu0 0.0
    %1604 = vmatpush1.msra.mxu0 0.0
    %1605 = vmatprep.subr.mxu0 0.0
    %1606 = vmatpush1.msra.mxu0 0.0
    %1607 = vmatprep.subr.mxu0 0.0
    %1608 = vmatpush1.msra.mxu0 0.0
    %1609 = vmatprep.subr.mxu0 0.0
    %1610 = vmatpush1.msra.mxu0 0.0
    %1611 = vmatprep.subr.mxu0 0.0
    %1612 = vmatpush1.msra.mxu0 0.0
    %1613 = vmatprep.subr.mxu0 0.0
    %1614 = vmatpush1.msra.mxu0 0.0
    %1615 = vmatprep.subr.mxu0 0.0
    %1616 = vmatpush1.msra.mxu0 0.0
    %1617 = vmatprep.subr.mxu0 0.0
    %1618 = vmatpush1.msra.mxu0 0.0
    %1619 = vmatprep.subr.mxu0 0.0
    %1620 = vmatpush1.msra.mxu0 0.0
    %1621 = vmatprep.subr.mxu0 0.0
    %1622 = vmatpush1.msra.mxu0 0.0
    %1623 = vmatprep.subr.mxu0 0.0
    %1624 = vmatpush1.msra.mxu0 0.0
    %1625 = vmatprep.subr.mxu0 0.0
    %1626 = vmatpush1.msra.mxu0 0.0
    %1627 = vmatprep.subr.mxu0 0.0
    %1628 = vmatpush1.msra.mxu0 0.0
    %1629 = vmatprep.subr.mxu0 0.0
    %1630 = vmatpush1.msra.mxu0 0.0
    %1631 = vmatprep.subr.mxu0 0.0
    %1632 = vmatpush1.msra.mxu0 0.0
    %1633 = vmatprep.subr.mxu0 0.0
    %1634 = vmatpush1.msra.mxu0 %v150
    %1635 = vmatprep.subr.mxu0 0.0
    %1636 = vmatpush2.msra.mxu0 0.0
    %1637 = vmatprep.subr.mxu0 0.0
    %1638 = vmatpush2.msra.mxu0 0.0
    %1639 = vmatprep.subr.mxu0 0.0
    %1640 = vmatpush2.msra.mxu0 0.0
    %1641 = vmatprep.subr.mxu0 0.0
    %1642 = vmatpush2.msra.mxu0 0.0
    %1643 = vmatprep.subr.mxu0 0.0
    %1644 = vmatpush2.msra.mxu0 0.0
    %1645 = vmatprep.subr.mxu0 0.0
    %1646 = vmatpush2.msra.mxu0 0.0
    %1647 = vmatprep.subr.mxu0 0.0
    %1648 = vmatpush2.msra.mxu0 0.0
    %1649 = vmatprep.subr.mxu0 0.0
    %1650 = vmatpush2.msra.mxu0 0.0
    %1651 = vmatprep.subr.mxu0 0.0
    %1652 = vmatpush2.msra.mxu0 0.0
    %1653 = vmatprep.subr.mxu0 0.0
    %1654 = vmatpush2.msra.mxu0 0.0
    %1655 = vmatprep.subr.mxu0 0.0
    %1656 = vmatpush2.msra.mxu0 0.0
    %1657 = vmatprep.subr.mxu0 0.0
    %1658 = vmatpush2.msra.mxu0 0.0
    %1659 = vmatprep.subr.mxu0 0.0
    %1660 = vmatpush2.msra.mxu0 0.0
    %1661 = vmatprep.subr.mxu0 0.0
    %1662 = vmatpush2.msra.mxu0 0.0
    %1663 = vmatprep.subr.mxu0 0.0
    %1664 = vmatpush2.msra.mxu0 0.0
    %1665 = vmatprep.subr.mxu0 0.0
    %1666 = vmatpush2.msra.mxu0 0.0
    %1667 = vmatprep.mubr.f32.mxu0 0.0
    %1668 = vmatmul.mubr.f32.gmra.mxu0 %v1601
    %v1669 = vpop.f32.mrf.mxu0
    %v1670 = vadd.f32 %v142, %v1669
    %v1671 = vpop.f32.mrf.mxu0
    %1672 = vdwg.mxu0
    %v1673 = vmax.f32 %v1670, 0.0
    %s1674 = scalar_lea.vmem [#allocation7], 2048
    %v1675 = vld [vmem:[%s1674] sm:$0xff]
    %v1676 = vld [vmem:[%s1674 + $0x8] sm:$0xff]
    %v1677 = vld [vmem:[%s1674 + $0x10] sm:$0xff]
    %v1678 = vld [vmem:[%s1674 + $0x18] sm:$0xff]
    %v1679 = vld [vmem:[%s1674 + $0x20] sm:$0xff]
    %v1680 = vld [vmem:[%s1674 + $0x28] sm:$0xff]
    %v1681 = vld [vmem:[%s1674 + $0x30] sm:$0xff]
    %v1682 = vld [vmem:[%s1674 + $0x38] sm:$0xff]
    %v1683 = vld [vmem:[%s1674 + $0x40] sm:$0xff]
    %v1684 = vld [vmem:[%s1674 + $0x48] sm:$0xff]
    %v1685 = vld [vmem:[%s1674 + $0x50] sm:$0xff]
    %v1686 = vld [vmem:[%s1674 + $0x58] sm:$0xff]
    %v1687 = vld [vmem:[%s1674 + $0x60] sm:$0xff]
    %v1688 = vld [vmem:[%s1674 + $0x68] sm:$0xff]
    %v1689 = vld [vmem:[%s1674 + $0x70] sm:$0xff]
    %v1690 = vld [vmem:[%s1674 + $0x78] sm:$0xff]
    %v1691 = vld [vmem:[%s1674 + $0x80] sm:$0xff]
    %v1692 = vld [vmem:[%s1674 + $0x88] sm:$0xff]
    %v1693 = vld [vmem:[%s1674 + $0x90] sm:$0xff]
    %v1694 = vld [vmem:[%s1674 + $0x98] sm:$0xff]
    %v1695 = vld [vmem:[%s1674 + $0xa0] sm:$0xff]
    %v1696 = vld [vmem:[%s1674 + $0xa8] sm:$0xff]
    %v1697 = vld [vmem:[%s1674 + $0xb0] sm:$0xff]
    %v1698 = vld [vmem:[%s1674 + $0xb8] sm:$0xff]
    %v1699 = vld [vmem:[%s1674 + $0xc0] sm:$0xff]
    %v1700 = vld [vmem:[%s1674 + $0xc8] sm:$0xff]
    %v1701 = vld [vmem:[%s1674 + $0xd0] sm:$0xff]
    %v1702 = vld [vmem:[%s1674 + $0xd8] sm:$0xff]
    %v1703 = vld [vmem:[%s1674 + $0xe0] sm:$0xff]
    %v1704 = vld [vmem:[%s1674 + $0xe8] sm:$0xff]
    %v1705 = vld [vmem:[%s1674 + $0xf0] sm:$0xff]
    %v1706 = vld [vmem:[%s1674 + $0xf8] sm:$0xff]
    %1707 = vmatprep.subr.mxu0 %v1706
    %1708 = vmatpush1.msra.mxu0 %v1705
    %1709 = vmatprep.subr.mxu0 %v1704
    %1710 = vmatpush1.msra.mxu0 %v1703
    %1711 = vmatprep.subr.mxu0 %v1702
    %1712 = vmatpush1.msra.mxu0 %v1701
    %1713 = vmatprep.subr.mxu0 %v1700
    %1714 = vmatpush1.msra.mxu0 %v1699
    %1715 = vmatprep.subr.mxu0 %v1698
    %1716 = vmatpush1.msra.mxu0 %v1697
    %1717 = vmatprep.subr.mxu0 %v1696
    %1718 = vmatpush1.msra.mxu0 %v1695
    %1719 = vmatprep.subr.mxu0 %v1694
    %1720 = vmatpush1.msra.mxu0 %v1693
    %1721 = vmatprep.subr.mxu0 %v1692
    %1722 = vmatpush1.msra.mxu0 %v1691
    %1723 = vmatprep.subr.mxu0 %v1690
    %1724 = vmatpush1.msra.mxu0 %v1689
    %1725 = vmatprep.subr.mxu0 %v1688
    %1726 = vmatpush1.msra.mxu0 %v1687
    %1727 = vmatprep.subr.mxu0 %v1686
    %1728 = vmatpush1.msra.mxu0 %v1685
    %1729 = vmatprep.subr.mxu0 %v1684
    %1730 = vmatpush1.msra.mxu0 %v1683
    %1731 = vmatprep.subr.mxu0 %v1682
    %1732 = vmatpush1.msra.mxu0 %v1681
    %1733 = vmatprep.subr.mxu0 %v1680
    %1734 = vmatpush1.msra.mxu0 %v1679
    %1735 = vmatprep.subr.mxu0 %v1678
    %1736 = vmatpush1.msra.mxu0 %v1677
    %1737 = vmatprep.subr.mxu0 %v1676
    %1738 = vmatpush1.msra.mxu0 %v1675
    %1739 = vmatprep.subr.mxu0 0.0
    %1740 = vmatpush2.msra.mxu0 0.0
    %1741 = vmatprep.subr.mxu0 0.0
    %1742 = vmatpush2.msra.mxu0 0.0
    %1743 = vmatprep.subr.mxu0 0.0
    %1744 = vmatpush2.msra.mxu0 0.0
    %1745 = vmatprep.subr.mxu0 0.0
    %1746 = vmatpush2.msra.mxu0 0.0
    %1747 = vmatprep.subr.mxu0 0.0
    %1748 = vmatpush2.msra.mxu0 0.0
    %1749 = vmatprep.subr.mxu0 0.0
    %1750 = vmatpush2.msra.mxu0 0.0
    %1751 = vmatprep.subr.mxu0 0.0
    %1752 = vmatpush2.msra.mxu0 0.0
    %1753 = vmatprep.subr.mxu0 0.0
    %1754 = vmatpush2.msra.mxu0 0.0
    %1755 = vmatprep.subr.mxu0 0.0
    %1756 = vmatpush2.msra.mxu0 0.0
    %1757 = vmatprep.subr.mxu0 0.0
    %1758 = vmatpush2.msra.mxu0 0.0
    %1759 = vmatprep.subr.mxu0 0.0
    %1760 = vmatpush2.msra.mxu0 0.0
    %1761 = vmatprep.subr.mxu0 0.0
    %1762 = vmatpush2.msra.mxu0 0.0
    %1763 = vmatprep.subr.mxu0 0.0
    %1764 = vmatpush2.msra.mxu0 0.0
    %1765 = vmatprep.subr.mxu0 0.0
    %1766 = vmatpush2.msra.mxu0 0.0
    %1767 = vmatprep.subr.mxu0 0.0
    %1768 = vmatpush2.msra.mxu0 0.0
    %1769 = vmatprep.subr.mxu0 0.0
    %1770 = vmatpush2.msra.mxu0 0.0
    %1771 = vmatprep.mubr.f32.mxu0 0.0
    %1772 = vmatmul.mubr.f32.gmra.mxu0 %v1673
    %v1773 = vpop.f32.mrf.mxu0
    %v1774 = vadd.f32 0.0, %v1773
    %v1775 = vpop.f32.mrf.mxu0
    %v1776 = vadd.f32 0.0, %v1775
    %1777 = vdwg.mxu0
    %v1778 = vadd.f32 %v1596, %v1774
    %v1779 = vadd.f32 %v1597, %v1776
    %s1780 = scalar_lea.vmem %s0, 72
    %v1781 = vld [vmem:[%s1780] sm:$0xff]
    %v1783 = vsel %vm144, %v1781, 0
    %1785 = vmatprep.subr.mxu0 0.0
    %1786 = vmatpush1.msra.mxu0 0.0
    %1787 = vmatprep.subr.mxu0 0.0
    %1788 = vmatpush1.msra.mxu0 0.0
    %1789 = vmatprep.subr.mxu0 0.0
    %1790 = vmatpush1.msra.mxu0 0.0
    %1791 = vmatprep.subr.mxu0 0.0
    %1792 = vmatpush1.msra.mxu0 0.0
    %1793 = vmatprep.subr.mxu0 0.0
    %1794 = vmatpush1.msra.mxu0 0.0
    %1795 = vmatprep.subr.mxu0 0.0
    %1796 = vmatpush1.msra.mxu0 0.0
    %1797 = vmatprep.subr.mxu0 0.0
    %1798 = vmatpush1.msra.mxu0 0.0
    %1799 = vmatprep.subr.mxu0 0.0
    %1800 = vmatpush1.msra.mxu0 0.0
    %1801 = vmatprep.subr.mxu0 0.0
    %1802 = vmatpush1.msra.mxu0 0.0
    %1803 = vmatprep.subr.mxu0 0.0
    %1804 = vmatpush1.msra.mxu0 0.0
    %1805 = vmatprep.subr.mxu0 0.0
    %1806 = vmatpush1.msra.mxu0 0.0
    %1807 = vmatprep.subr.mxu0 0.0
    %1808 = vmatpush1.msra.mxu0 0.0
    %1809 = vmatprep.subr.mxu0 0.0
    %1810 = vmatpush1.msra.mxu0 0.0
    %1811 = vmatprep.subr.mxu0 0.0
    %1812 = vmatpush1.msra.mxu0 0.0
    %1813 = vmatprep.subr.mxu0 0.0
    %1814 = vmatpush1.msra.mxu0 0.0
    %1815 = vmatprep.subr.mxu0 0.0
    %1816 = vmatpush1.msra.mxu0 %v150
    %1817 = vmatprep.subr.mxu0 0.0
    %1818 = vmatpush2.msra.mxu0 0.0
    %1819 = vmatprep.subr.mxu0 0.0
    %1820 = vmatpush2.msra.mxu0 0.0
    %1821 = vmatprep.subr.mxu0 0.0
    %1822 = vmatpush2.msra.mxu0 0.0
    %1823 = vmatprep.subr.mxu0 0.0
    %1824 = vmatpush2.msra.mxu0 0.0
    %1825 = vmatprep.subr.mxu0 0.0
    %1826 = vmatpush2.msra.mxu0 0.0
    %1827 = vmatprep.subr.mxu0 0.0
    %1828 = vmatpush2.msra.mxu0 0.0
    %1829 = vmatprep.subr.mxu0 0.0
    %1830 = vmatpush2.msra.mxu0 0.0
    %1831 = vmatprep.subr.mxu0 0.0
    %1832 = vmatpush2.msra.mxu0 0.0
    %1833 = vmatprep.subr.mxu0 0.0
    %1834 = vmatpush2.msra.mxu0 0.0
    %1835 = vmatprep.subr.mxu0 0.0
    %1836 = vmatpush2.msra.mxu0 0.0
    %1837 = vmatprep.subr.mxu0 0.0
    %1838 = vmatpush2.msra.mxu0 0.0
    %1839 = vmatprep.subr.mxu0 0.0
    %1840 = vmatpush2.msra.mxu0 0.0
    %1841 = vmatprep.subr.mxu0 0.0
    %1842 = vmatpush2.msra.mxu0 0.0
    %1843 = vmatprep.subr.mxu0 0.0
    %1844 = vmatpush2.msra.mxu0 0.0
    %1845 = vmatprep.subr.mxu0 0.0
    %1846 = vmatpush2.msra.mxu0 0.0
    %1847 = vmatprep.subr.mxu0 0.0
    %1848 = vmatpush2.msra.mxu0 0.0
    %1849 = vmatprep.mubr.f32.mxu0 0.0
    %1850 = vmatmul.mubr.f32.gmra.mxu0 %v1783
    %v1851 = vpop.f32.mrf.mxu0
    %v1852 = vadd.f32 %v142, %v1851
    %v1853 = vpop.f32.mrf.mxu0
    %1854 = vdwg.mxu0
    %v1855 = vmax.f32 %v1852, 0.0
    %s1856 = scalar_lea.vmem [#allocation7], 2304
    %v1857 = vld [vmem:[%s1856] sm:$0xff]
    %v1858 = vld [vmem:[%s1856 + $0x8] sm:$0xff]
    %v1859 = vld [vmem:[%s1856 + $0x10] sm:$0xff]
    %v1860 = vld [vmem:[%s1856 + $0x18] sm:$0xff]
    %v1861 = vld [vmem:[%s1856 + $0x20] sm:$0xff]
    %v1862 = vld [vmem:[%s1856 + $0x28] sm:$0xff]
    %v1863 = vld [vmem:[%s1856 + $0x30] sm:$0xff]
    %v1864 = vld [vmem:[%s1856 + $0x38] sm:$0xff]
    %v1865 = vld [vmem:[%s1856 + $0x40] sm:$0xff]
    %v1866 = vld [vmem:[%s1856 + $0x48] sm:$0xff]
    %v1867 = vld [vmem:[%s1856 + $0x50] sm:$0xff]
    %v1868 = vld [vmem:[%s1856 + $0x58] sm:$0xff]
    %v1869 = vld [vmem:[%s1856 + $0x60] sm:$0xff]
    %v1870 = vld [vmem:[%s1856 + $0x68] sm:$0xff]
    %v1871 = vld [vmem:[%s1856 + $0x70] sm:$0xff]
    %v1872 = vld [vmem:[%s1856 + $0x78] sm:$0xff]
    %v1873 = vld [vmem:[%s1856 + $0x80] sm:$0xff]
    %v1874 = vld [vmem:[%s1856 + $0x88] sm:$0xff]
    %v1875 = vld [vmem:[%s1856 + $0x90] sm:$0xff]
    %v1876 = vld [vmem:[%s1856 + $0x98] sm:$0xff]
    %v1877 = vld [vmem:[%s1856 + $0xa0] sm:$0xff]
    %v1878 = vld [vmem:[%s1856 + $0xa8] sm:$0xff]
    %v1879 = vld [vmem:[%s1856 + $0xb0] sm:$0xff]
    %v1880 = vld [vmem:[%s1856 + $0xb8] sm:$0xff]
    %v1881 = vld [vmem:[%s1856 + $0xc0] sm:$0xff]
    %v1882 = vld [vmem:[%s1856 + $0xc8] sm:$0xff]
    %v1883 = vld [vmem:[%s1856 + $0xd0] sm:$0xff]
    %v1884 = vld [vmem:[%s1856 + $0xd8] sm:$0xff]
    %v1885 = vld [vmem:[%s1856 + $0xe0] sm:$0xff]
    %v1886 = vld [vmem:[%s1856 + $0xe8] sm:$0xff]
    %v1887 = vld [vmem:[%s1856 + $0xf0] sm:$0xff]
    %v1888 = vld [vmem:[%s1856 + $0xf8] sm:$0xff]
    %1889 = vmatprep.subr.mxu0 %v1888
    %1890 = vmatpush1.msra.mxu0 %v1887
    %1891 = vmatprep.subr.mxu0 %v1886
    %1892 = vmatpush1.msra.mxu0 %v1885
    %1893 = vmatprep.subr.mxu0 %v1884
    %1894 = vmatpush1.msra.mxu0 %v1883
    %1895 = vmatprep.subr.mxu0 %v1882
    %1896 = vmatpush1.msra.mxu0 %v1881
    %1897 = vmatprep.subr.mxu0 %v1880
    %1898 = vmatpush1.msra.mxu0 %v1879
    %1899 = vmatprep.subr.mxu0 %v1878
    %1900 = vmatpush1.msra.mxu0 %v1877
    %1901 = vmatprep.subr.mxu0 %v1876
    %1902 = vmatpush1.msra.mxu0 %v1875
    %1903 = vmatprep.subr.mxu0 %v1874
    %1904 = vmatpush1.msra.mxu0 %v1873
    %1905 = vmatprep.subr.mxu0 %v1872
    %1906 = vmatpush1.msra.mxu0 %v1871
    %1907 = vmatprep.subr.mxu0 %v1870
    %1908 = vmatpush1.msra.mxu0 %v1869
    %1909 = vmatprep.subr.mxu0 %v1868
    %1910 = vmatpush1.msra.mxu0 %v1867
    %1911 = vmatprep.subr.mxu0 %v1866
    %1912 = vmatpush1.msra.mxu0 %v1865
    %1913 = vmatprep.subr.mxu0 %v1864
    %1914 = vmatpush1.msra.mxu0 %v1863
    %1915 = vmatprep.subr.mxu0 %v1862
    %1916 = vmatpush1.msra.mxu0 %v1861
    %1917 = vmatprep.subr.mxu0 %v1860
    %1918 = vmatpush1.msra.mxu0 %v1859
    %1919 = vmatprep.subr.mxu0 %v1858
    %1920 = vmatpush1.msra.mxu0 %v1857
    %1921 = vmatprep.subr.mxu0 0.0
    %1922 = vmatpush2.msra.mxu0 0.0
    %1923 = vmatprep.subr.mxu0 0.0
    %1924 = vmatpush2.msra.mxu0 0.0
    %1925 = vmatprep.subr.mxu0 0.0
    %1926 = vmatpush2.msra.mxu0 0.0
    %1927 = vmatprep.subr.mxu0 0.0
    %1928 = vmatpush2.msra.mxu0 0.0
    %1929 = vmatprep.subr.mxu0 0.0
    %1930 = vmatpush2.msra.mxu0 0.0
    %1931 = vmatprep.subr.mxu0 0.0
    %1932 = vmatpush2.msra.mxu0 0.0
    %1933 = vmatprep.subr.mxu0 0.0
    %1934 = vmatpush2.msra.mxu0 0.0
    %1935 = vmatprep.subr.mxu0 0.0
    %1936 = vmatpush2.msra.mxu0 0.0
    %1937 = vmatprep.subr.mxu0 0.0
    %1938 = vmatpush2.msra.mxu0 0.0
    %1939 = vmatprep.subr.mxu0 0.0
    %1940 = vmatpush2.msra.mxu0 0.0
    %1941 = vmatprep.subr.mxu0 0.0
    %1942 = vmatpush2.msra.mxu0 0.0
    %1943 = vmatprep.subr.mxu0 0.0
    %1944 = vmatpush2.msra.mxu0 0.0
    %1945 = vmatprep.subr.mxu0 0.0
    %1946 = vmatpush2.msra.mxu0 0.0
    %1947 = vmatprep.subr.mxu0 0.0
    %1948 = vmatpush2.msra.mxu0 0.0
    %1949 = vmatprep.subr.mxu0 0.0
    %1950 = vmatpush2.msra.mxu0 0.0
    %1951 = vmatprep.subr.mxu0 0.0
    %1952 = vmatpush2.msra.mxu0 0.0
    %1953 = vmatprep.mubr.f32.mxu0 0.0
    %1954 = vmatmul.mubr.f32.gmra.mxu0 %v1855
    %v1955 = vpop.f32.mrf.mxu0
    %v1956 = vadd.f32 0.0, %v1955
    %v1957 = vpop.f32.mrf.mxu0
    %v1958 = vadd.f32 0.0, %v1957
    %1959 = vdwg.mxu0
    %v1960 = vadd.f32 %v1778, %v1956
    %v1961 = vadd.f32 %v1779, %v1958
    %s1962 = scalar_lea.vmem %s0, 80
    %v1963 = vld [vmem:[%s1962] sm:$0xff]
    %v1965 = vsel %vm144, %v1963, 0
    %1967 = vmatprep.subr.mxu0 0.0
    %1968 = vmatpush1.msra.mxu0 0.0
    %1969 = vmatprep.subr.mxu0 0.0
    %1970 = vmatpush1.msra.mxu0 0.0
    %1971 = vmatprep.subr.mxu0 0.0
    %1972 = vmatpush1.msra.mxu0 0.0
    %1973 = vmatprep.subr.mxu0 0.0
    %1974 = vmatpush1.msra.mxu0 0.0
    %1975 = vmatprep.subr.mxu0 0.0
    %1976 = vmatpush1.msra.mxu0 0.0
    %1977 = vmatprep.subr.mxu0 0.0
    %1978 = vmatpush1.msra.mxu0 0.0
    %1979 = vmatprep.subr.mxu0 0.0
    %1980 = vmatpush1.msra.mxu0 0.0
    %1981 = vmatprep.subr.mxu0 0.0
    %1982 = vmatpush1.msra.mxu0 0.0
    %1983 = vmatprep.subr.mxu0 0.0
    %1984 = vmatpush1.msra.mxu0 0.0
    %1985 = vmatprep.subr.mxu0 0.0
    %1986 = vmatpush1.msra.mxu0 0.0
    %1987 = vmatprep.subr.mxu0 0.0
    %1988 = vmatpush1.msra.mxu0 0.0
    %1989 = vmatprep.subr.mxu0 0.0
    %1990 = vmatpush1.msra.mxu0 0.0
    %1991 = vmatprep.subr.mxu0 0.0
    %1992 = vmatpush1.msra.mxu0 0.0
    %1993 = vmatprep.subr.mxu0 0.0
    %1994 = vmatpush1.msra.mxu0 0.0
    %1995 = vmatprep.subr.mxu0 0.0
    %1996 = vmatpush1.msra.mxu0 0.0
    %1997 = vmatprep.subr.mxu0 0.0
    %1998 = vmatpush1.msra.mxu0 %v150
    %1999 = vmatprep.subr.mxu0 0.0
    %2000 = vmatpush2.msra.mxu0 0.0
    %2001 = vmatprep.subr.mxu0 0.0
    %2002 = vmatpush2.msra.mxu0 0.0
    %2003 = vmatprep.subr.mxu0 0.0
    %2004 = vmatpush2.msra.mxu0 0.0
    %2005 = vmatprep.subr.mxu0 0.0
    %2006 = vmatpush2.msra.mxu0 0.0
    %2007 = vmatprep.subr.mxu0 0.0
    %2008 = vmatpush2.msra.mxu0 0.0
    %2009 = vmatprep.subr.mxu0 0.0
    %2010 = vmatpush2.msra.mxu0 0.0
    %2011 = vmatprep.subr.mxu0 0.0
    %2012 = vmatpush2.msra.mxu0 0.0
    %2013 = vmatprep.subr.mxu0 0.0
    %2014 = vmatpush2.msra.mxu0 0.0
    %2015 = vmatprep.subr.mxu0 0.0
    %2016 = vmatpush2.msra.mxu0 0.0
    %2017 = vmatprep.subr.mxu0 0.0
    %2018 = vmatpush2.msra.mxu0 0.0
    %2019 = vmatprep.subr.mxu0 0.0
    %2020 = vmatpush2.msra.mxu0 0.0
    %2021 = vmatprep.subr.mxu0 0.0
    %2022 = vmatpush2.msra.mxu0 0.0
    %2023 = vmatprep.subr.mxu0 0.0
    %2024 = vmatpush2.msra.mxu0 0.0
    %2025 = vmatprep.subr.mxu0 0.0
    %2026 = vmatpush2.msra.mxu0 0.0
    %2027 = vmatprep.subr.mxu0 0.0
    %2028 = vmatpush2.msra.mxu0 0.0
    %2029 = vmatprep.subr.mxu0 0.0
    %2030 = vmatpush2.msra.mxu0 0.0
    %2031 = vmatprep.mubr.f32.mxu0 0.0
    %2032 = vmatmul.mubr.f32.gmra.mxu0 %v1965
    %v2033 = vpop.f32.mrf.mxu0
    %v2034 = vadd.f32 %v142, %v2033
    %v2035 = vpop.f32.mrf.mxu0
    %2036 = vdwg.mxu0
    %v2037 = vmax.f32 %v2034, 0.0
    %s2038 = scalar_lea.vmem [#allocation7], 2560
    %v2039 = vld [vmem:[%s2038] sm:$0xff]
    %v2040 = vld [vmem:[%s2038 + $0x8] sm:$0xff]
    %v2041 = vld [vmem:[%s2038 + $0x10] sm:$0xff]
    %v2042 = vld [vmem:[%s2038 + $0x18] sm:$0xff]
    %v2043 = vld [vmem:[%s2038 + $0x20] sm:$0xff]
    %v2044 = vld [vmem:[%s2038 + $0x28] sm:$0xff]
    %v2045 = vld [vmem:[%s2038 + $0x30] sm:$0xff]
    %v2046 = vld [vmem:[%s2038 + $0x38] sm:$0xff]
    %v2047 = vld [vmem:[%s2038 + $0x40] sm:$0xff]
    %v2048 = vld [vmem:[%s2038 + $0x48] sm:$0xff]
    %v2049 = vld [vmem:[%s2038 + $0x50] sm:$0xff]
    %v2050 = vld [vmem:[%s2038 + $0x58] sm:$0xff]
    %v2051 = vld [vmem:[%s2038 + $0x60] sm:$0xff]
    %v2052 = vld [vmem:[%s2038 + $0x68] sm:$0xff]
    %v2053 = vld [vmem:[%s2038 + $0x70] sm:$0xff]
    %v2054 = vld [vmem:[%s2038 + $0x78] sm:$0xff]
    %v2055 = vld [vmem:[%s2038 + $0x80] sm:$0xff]
    %v2056 = vld [vmem:[%s2038 + $0x88] sm:$0xff]
    %v2057 = vld [vmem:[%s2038 + $0x90] sm:$0xff]
    %v2058 = vld [vmem:[%s2038 + $0x98] sm:$0xff]
    %v2059 = vld [vmem:[%s2038 + $0xa0] sm:$0xff]
    %v2060 = vld [vmem:[%s2038 + $0xa8] sm:$0xff]
    %v2061 = vld [vmem:[%s2038 + $0xb0] sm:$0xff]
    %v2062 = vld [vmem:[%s2038 + $0xb8] sm:$0xff]
    %v2063 = vld [vmem:[%s2038 + $0xc0] sm:$0xff]
    %v2064 = vld [vmem:[%s2038 + $0xc8] sm:$0xff]
    %v2065 = vld [vmem:[%s2038 + $0xd0] sm:$0xff]
    %v2066 = vld [vmem:[%s2038 + $0xd8] sm:$0xff]
    %v2067 = vld [vmem:[%s2038 + $0xe0] sm:$0xff]
    %v2068 = vld [vmem:[%s2038 + $0xe8] sm:$0xff]
    %v2069 = vld [vmem:[%s2038 + $0xf0] sm:$0xff]
    %v2070 = vld [vmem:[%s2038 + $0xf8] sm:$0xff]
    %2071 = vmatprep.subr.mxu0 %v2070
    %2072 = vmatpush1.msra.mxu0 %v2069
    %2073 = vmatprep.subr.mxu0 %v2068
    %2074 = vmatpush1.msra.mxu0 %v2067
    %2075 = vmatprep.subr.mxu0 %v2066
    %2076 = vmatpush1.msra.mxu0 %v2065
    %2077 = vmatprep.subr.mxu0 %v2064
    %2078 = vmatpush1.msra.mxu0 %v2063
    %2079 = vmatprep.subr.mxu0 %v2062
    %2080 = vmatpush1.msra.mxu0 %v2061
    %2081 = vmatprep.subr.mxu0 %v2060
    %2082 = vmatpush1.msra.mxu0 %v2059
    %2083 = vmatprep.subr.mxu0 %v2058
    %2084 = vmatpush1.msra.mxu0 %v2057
    %2085 = vmatprep.subr.mxu0 %v2056
    %2086 = vmatpush1.msra.mxu0 %v2055
    %2087 = vmatprep.subr.mxu0 %v2054
    %2088 = vmatpush1.msra.mxu0 %v2053
    %2089 = vmatprep.subr.mxu0 %v2052
    %2090 = vmatpush1.msra.mxu0 %v2051
    %2091 = vmatprep.subr.mxu0 %v2050
    %2092 = vmatpush1.msra.mxu0 %v2049
    %2093 = vmatprep.subr.mxu0 %v2048
    %2094 = vmatpush1.msra.mxu0 %v2047
    %2095 = vmatprep.subr.mxu0 %v2046
    %2096 = vmatpush1.msra.mxu0 %v2045
    %2097 = vmatprep.subr.mxu0 %v2044
    %2098 = vmatpush1.msra.mxu0 %v2043
    %2099 = vmatprep.subr.mxu0 %v2042
    %2100 = vmatpush1.msra.mxu0 %v2041
    %2101 = vmatprep.subr.mxu0 %v2040
    %2102 = vmatpush1.msra.mxu0 %v2039
    %2103 = vmatprep.subr.mxu0 0.0
    %2104 = vmatpush2.msra.mxu0 0.0
    %2105 = vmatprep.subr.mxu0 0.0
    %2106 = vmatpush2.msra.mxu0 0.0
    %2107 = vmatprep.subr.mxu0 0.0
    %2108 = vmatpush2.msra.mxu0 0.0
    %2109 = vmatprep.subr.mxu0 0.0
    %2110 = vmatpush2.msra.mxu0 0.0
    %2111 = vmatprep.subr.mxu0 0.0
    %2112 = vmatpush2.msra.mxu0 0.0
    %2113 = vmatprep.subr.mxu0 0.0
    %2114 = vmatpush2.msra.mxu0 0.0
    %2115 = vmatprep.subr.mxu0 0.0
    %2116 = vmatpush2.msra.mxu0 0.0
    %2117 = vmatprep.subr.mxu0 0.0
    %2118 = vmatpush2.msra.mxu0 0.0
    %2119 = vmatprep.subr.mxu0 0.0
    %2120 = vmatpush2.msra.mxu0 0.0
    %2121 = vmatprep.subr.mxu0 0.0
    %2122 = vmatpush2.msra.mxu0 0.0
    %2123 = vmatprep.subr.mxu0 0.0
    %2124 = vmatpush2.msra.mxu0 0.0
    %2125 = vmatprep.subr.mxu0 0.0
    %2126 = vmatpush2.msra.mxu0 0.0
    %2127 = vmatprep.subr.mxu0 0.0
    %2128 = vmatpush2.msra.mxu0 0.0
    %2129 = vmatprep.subr.mxu0 0.0
    %2130 = vmatpush2.msra.mxu0 0.0
    %2131 = vmatprep.subr.mxu0 0.0
    %2132 = vmatpush2.msra.mxu0 0.0
    %2133 = vmatprep.subr.mxu0 0.0
    %2134 = vmatpush2.msra.mxu0 0.0
    %2135 = vmatprep.mubr.f32.mxu0 0.0
    %2136 = vmatmul.mubr.f32.gmra.mxu0 %v2037
    %v2137 = vpop.f32.mrf.mxu0
    %v2138 = vadd.f32 0.0, %v2137
    %v2139 = vpop.f32.mrf.mxu0
    %v2140 = vadd.f32 0.0, %v2139
    %2141 = vdwg.mxu0
    %v2142 = vadd.f32 %v1960, %v2138
    %v2143 = vadd.f32 %v1961, %v2140
    %s2144 = scalar_lea.vmem %s0, 88
    %v2145 = vld [vmem:[%s2144] sm:$0xff]
    %v2147 = vsel %vm144, %v2145, 0
    %2149 = vmatprep.subr.mxu0 0.0
    %2150 = vmatpush1.msra.mxu0 0.0
    %2151 = vmatprep.subr.mxu0 0.0
    %2152 = vmatpush1.msra.mxu0 0.0
    %2153 = vmatprep.subr.mxu0 0.0
    %2154 = vmatpush1.msra.mxu0 0.0
    %2155 = vmatprep.subr.mxu0 0.0
    %2156 = vmatpush1.msra.mxu0 0.0
    %2157 = vmatprep.subr.mxu0 0.0
    %2158 = vmatpush1.msra.mxu0 0.0
    %2159 = vmatprep.subr.mxu0 0.0
    %2160 = vmatpush1.msra.mxu0 0.0
    %2161 = vmatprep.subr.mxu0 0.0
    %2162 = vmatpush1.msra.mxu0 0.0
    %2163 = vmatprep.subr.mxu0 0.0
    %2164 = vmatpush1.msra.mxu0 0.0
    %2165 = vmatprep.subr.mxu0 0.0
    %2166 = vmatpush1.msra.mxu0 0.0
    %2167 = vmatprep.subr.mxu0 0.0
    %2168 = vmatpush1.msra.mxu0 0.0
    %2169 = vmatprep.subr.mxu0 0.0
    %2170 = vmatpush1.msra.mxu0 0.0
    %2171 = vmatprep.subr.mxu0 0.0
    %2172 = vmatpush1.msra.mxu0 0.0
    %2173 = vmatprep.subr.mxu0 0.0
    %2174 = vmatpush1.msra.mxu0 0.0
    %2175 = vmatprep.subr.mxu0 0.0
    %2176 = vmatpush1.msra.mxu0 0.0
    %2177 = vmatprep.subr.mxu0 0.0
    %2178 = vmatpush1.msra.mxu0 0.0
    %2179 = vmatprep.subr.mxu0 0.0
    %2180 = vmatpush1.msra.mxu0 %v150
    %2181 = vmatprep.subr.mxu0 0.0
    %2182 = vmatpush2.msra.mxu0 0.0
    %2183 = vmatprep.subr.mxu0 0.0
    %2184 = vmatpush2.msra.mxu0 0.0
    %2185 = vmatprep.subr.mxu0 0.0
    %2186 = vmatpush2.msra.mxu0 0.0
    %2187 = vmatprep.subr.mxu0 0.0
    %2188 = vmatpush2.msra.mxu0 0.0
    %2189 = vmatprep.subr.mxu0 0.0
    %2190 = vmatpush2.msra.mxu0 0.0
    %2191 = vmatprep.subr.mxu0 0.0
    %2192 = vmatpush2.msra.mxu0 0.0
    %2193 = vmatprep.subr.mxu0 0.0
    %2194 = vmatpush2.msra.mxu0 0.0
    %2195 = vmatprep.subr.mxu0 0.0
    %2196 = vmatpush2.msra.mxu0 0.0
    %2197 = vmatprep.subr.mxu0 0.0
    %2198 = vmatpush2.msra.mxu0 0.0
    %2199 = vmatprep.subr.mxu0 0.0
    %2200 = vmatpush2.msra.mxu0 0.0
    %2201 = vmatprep.subr.mxu0 0.0
    %2202 = vmatpush2.msra.mxu0 0.0
    %2203 = vmatprep.subr.mxu0 0.0
    %2204 = vmatpush2.msra.mxu0 0.0
    %2205 = vmatprep.subr.mxu0 0.0
    %2206 = vmatpush2.msra.mxu0 0.0
    %2207 = vmatprep.subr.mxu0 0.0
    %2208 = vmatpush2.msra.mxu0 0.0
    %2209 = vmatprep.subr.mxu0 0.0
    %2210 = vmatpush2.msra.mxu0 0.0
    %2211 = vmatprep.subr.mxu0 0.0
    %2212 = vmatpush2.msra.mxu0 0.0
    %2213 = vmatprep.mubr.f32.mxu0 0.0
    %2214 = vmatmul.mubr.f32.gmra.mxu0 %v2147
    %v2215 = vpop.f32.mrf.mxu0
    %v2216 = vadd.f32 %v142, %v2215
    %v2217 = vpop.f32.mrf.mxu0
    %2218 = vdwg.mxu0
    %v2219 = vmax.f32 %v2216, 0.0
    %s2220 = scalar_lea.vmem [#allocation7], 2816
    %v2221 = vld [vmem:[%s2220] sm:$0xff]
    %v2222 = vld [vmem:[%s2220 + $0x8] sm:$0xff]
    %v2223 = vld [vmem:[%s2220 + $0x10] sm:$0xff]
    %v2224 = vld [vmem:[%s2220 + $0x18] sm:$0xff]
    %v2225 = vld [vmem:[%s2220 + $0x20] sm:$0xff]
    %v2226 = vld [vmem:[%s2220 + $0x28] sm:$0xff]
    %v2227 = vld [vmem:[%s2220 + $0x30] sm:$0xff]
    %v2228 = vld [vmem:[%s2220 + $0x38] sm:$0xff]
    %v2229 = vld [vmem:[%s2220 + $0x40] sm:$0xff]
    %v2230 = vld [vmem:[%s2220 + $0x48] sm:$0xff]
    %v2231 = vld [vmem:[%s2220 + $0x50] sm:$0xff]
    %v2232 = vld [vmem:[%s2220 + $0x58] sm:$0xff]
    %v2233 = vld [vmem:[%s2220 + $0x60] sm:$0xff]
    %v2234 = vld [vmem:[%s2220 + $0x68] sm:$0xff]
    %v2235 = vld [vmem:[%s2220 + $0x70] sm:$0xff]
    %v2236 = vld [vmem:[%s2220 + $0x78] sm:$0xff]
    %v2237 = vld [vmem:[%s2220 + $0x80] sm:$0xff]
    %v2238 = vld [vmem:[%s2220 + $0x88] sm:$0xff]
    %v2239 = vld [vmem:[%s2220 + $0x90] sm:$0xff]
    %v2240 = vld [vmem:[%s2220 + $0x98] sm:$0xff]
    %v2241 = vld [vmem:[%s2220 + $0xa0] sm:$0xff]
    %v2242 = vld [vmem:[%s2220 + $0xa8] sm:$0xff]
    %v2243 = vld [vmem:[%s2220 + $0xb0] sm:$0xff]
    %v2244 = vld [vmem:[%s2220 + $0xb8] sm:$0xff]
    %v2245 = vld [vmem:[%s2220 + $0xc0] sm:$0xff]
    %v2246 = vld [vmem:[%s2220 + $0xc8] sm:$0xff]
    %v2247 = vld [vmem:[%s2220 + $0xd0] sm:$0xff]
    %v2248 = vld [vmem:[%s2220 + $0xd8] sm:$0xff]
    %v2249 = vld [vmem:[%s2220 + $0xe0] sm:$0xff]
    %v2250 = vld [vmem:[%s2220 + $0xe8] sm:$0xff]
    %v2251 = vld [vmem:[%s2220 + $0xf0] sm:$0xff]
    %v2252 = vld [vmem:[%s2220 + $0xf8] sm:$0xff]
    %2253 = vmatprep.subr.mxu0 %v2252
    %2254 = vmatpush1.msra.mxu0 %v2251
    %2255 = vmatprep.subr.mxu0 %v2250
    %2256 = vmatpush1.msra.mxu0 %v2249
    %2257 = vmatprep.subr.mxu0 %v2248
    %2258 = vmatpush1.msra.mxu0 %v2247
    %2259 = vmatprep.subr.mxu0 %v2246
    %2260 = vmatpush1.msra.mxu0 %v2245
    %2261 = vmatprep.subr.mxu0 %v2244
    %2262 = vmatpush1.msra.mxu0 %v2243
    %2263 = vmatprep.subr.mxu0 %v2242
    %2264 = vmatpush1.msra.mxu0 %v2241
    %2265 = vmatprep.subr.mxu0 %v2240
    %2266 = vmatpush1.msra.mxu0 %v2239
    %2267 = vmatprep.subr.mxu0 %v2238
    %2268 = vmatpush1.msra.mxu0 %v2237
    %2269 = vmatprep.subr.mxu0 %v2236
    %2270 = vmatpush1.msra.mxu0 %v2235
    %2271 = vmatprep.subr.mxu0 %v2234
    %2272 = vmatpush1.msra.mxu0 %v2233
    %2273 = vmatprep.subr.mxu0 %v2232
    %2274 = vmatpush1.msra.mxu0 %v2231
    %2275 = vmatprep.subr.mxu0 %v2230
    %2276 = vmatpush1.msra.mxu0 %v2229
    %2277 = vmatprep.subr.mxu0 %v2228
    %2278 = vmatpush1.msra.mxu0 %v2227
    %2279 = vmatprep.subr.mxu0 %v2226
    %2280 = vmatpush1.msra.mxu0 %v2225
    %2281 = vmatprep.subr.mxu0 %v2224
    %2282 = vmatpush1.msra.mxu0 %v2223
    %2283 = vmatprep.subr.mxu0 %v2222
    %2284 = vmatpush1.msra.mxu0 %v2221
    %2285 = vmatprep.subr.mxu0 0.0
    %2286 = vmatpush2.msra.mxu0 0.0
    %2287 = vmatprep.subr.mxu0 0.0
    %2288 = vmatpush2.msra.mxu0 0.0
    %2289 = vmatprep.subr.mxu0 0.0
    %2290 = vmatpush2.msra.mxu0 0.0
    %2291 = vmatprep.subr.mxu0 0.0
    %2292 = vmatpush2.msra.mxu0 0.0
    %2293 = vmatprep.subr.mxu0 0.0
    %2294 = vmatpush2.msra.mxu0 0.0
    %2295 = vmatprep.subr.mxu0 0.0
    %2296 = vmatpush2.msra.mxu0 0.0
    %2297 = vmatprep.subr.mxu0 0.0
    %2298 = vmatpush2.msra.mxu0 0.0
    %2299 = vmatprep.subr.mxu0 0.0
    %2300 = vmatpush2.msra.mxu0 0.0
    %2301 = vmatprep.subr.mxu0 0.0
    %2302 = vmatpush2.msra.mxu0 0.0
    %2303 = vmatprep.subr.mxu0 0.0
    %2304 = vmatpush2.msra.mxu0 0.0
    %2305 = vmatprep.subr.mxu0 0.0
    %2306 = vmatpush2.msra.mxu0 0.0
    %2307 = vmatprep.subr.mxu0 0.0
    %2308 = vmatpush2.msra.mxu0 0.0
    %2309 = vmatprep.subr.mxu0 0.0
    %2310 = vmatpush2.msra.mxu0 0.0
    %2311 = vmatprep.subr.mxu0 0.0
    %2312 = vmatpush2.msra.mxu0 0.0
    %2313 = vmatprep.subr.mxu0 0.0
    %2314 = vmatpush2.msra.mxu0 0.0
    %2315 = vmatprep.subr.mxu0 0.0
    %2316 = vmatpush2.msra.mxu0 0.0
    %2317 = vmatprep.mubr.f32.mxu0 0.0
    %2318 = vmatmul.mubr.f32.gmra.mxu0 %v2219
    %v2319 = vpop.f32.mrf.mxu0
    %v2320 = vadd.f32 0.0, %v2319
    %v2321 = vpop.f32.mrf.mxu0
    %v2322 = vadd.f32 0.0, %v2321
    %2323 = vdwg.mxu0
    %v2324 = vadd.f32 %v2142, %v2320
    %v2325 = vadd.f32 %v2143, %v2322
    %s2326 = scalar_lea.vmem %s0, 96
    %v2327 = vld [vmem:[%s2326] sm:$0xff]
    %v2329 = vsel %vm144, %v2327, 0
    %2331 = vmatprep.subr.mxu0 0.0
    %2332 = vmatpush1.msra.mxu0 0.0
    %2333 = vmatprep.subr.mxu0 0.0
    %2334 = vmatpush1.msra.mxu0 0.0
    %2335 = vmatprep.subr.mxu0 0.0
    %2336 = vmatpush1.msra.mxu0 0.0
    %2337 = vmatprep.subr.mxu0 0.0
    %2338 = vmatpush1.msra.mxu0 0.0
    %2339 = vmatprep.subr.mxu0 0.0
    %2340 = vmatpush1.msra.mxu0 0.0
    %2341 = vmatprep.subr.mxu0 0.0
    %2342 = vmatpush1.msra.mxu0 0.0
    %2343 = vmatprep.subr.mxu0 0.0
    %2344 = vmatpush1.msra.mxu0 0.0
    %2345 = vmatprep.subr.mxu0 0.0
    %2346 = vmatpush1.msra.mxu0 0.0
    %2347 = vmatprep.subr.mxu0 0.0
    %2348 = vmatpush1.msra.mxu0 0.0
    %2349 = vmatprep.subr.mxu0 0.0
    %2350 = vmatpush1.msra.mxu0 0.0
    %2351 = vmatprep.subr.mxu0 0.0
    %2352 = vmatpush1.msra.mxu0 0.0
    %2353 = vmatprep.subr.mxu0 0.0
    %2354 = vmatpush1.msra.mxu0 0.0
    %2355 = vmatprep.subr.mxu0 0.0
    %2356 = vmatpush1.msra.mxu0 0.0
    %2357 = vmatprep.subr.mxu0 0.0
    %2358 = vmatpush1.msra.mxu0 0.0
    %2359 = vmatprep.subr.mxu0 0.0
    %2360 = vmatpush1.msra.mxu0 0.0
    %2361 = vmatprep.subr.mxu0 0.0
    %2362 = vmatpush1.msra.mxu0 %v150
    %2363 = vmatprep.subr.mxu0 0.0
    %2364 = vmatpush2.msra.mxu0 0.0
    %2365 = vmatprep.subr.mxu0 0.0
    %2366 = vmatpush2.msra.mxu0 0.0
    %2367 = vmatprep.subr.mxu0 0.0
    %2368 = vmatpush2.msra.mxu0 0.0
    %2369 = vmatprep.subr.mxu0 0.0
    %2370 = vmatpush2.msra.mxu0 0.0
    %2371 = vmatprep.subr.mxu0 0.0
    %2372 = vmatpush2.msra.mxu0 0.0
    %2373 = vmatprep.subr.mxu0 0.0
    %2374 = vmatpush2.msra.mxu0 0.0
    %2375 = vmatprep.subr.mxu0 0.0
    %2376 = vmatpush2.msra.mxu0 0.0
    %2377 = vmatprep.subr.mxu0 0.0
    %2378 = vmatpush2.msra.mxu0 0.0
    %2379 = vmatprep.subr.mxu0 0.0
    %2380 = vmatpush2.msra.mxu0 0.0
    %2381 = vmatprep.subr.mxu0 0.0
    %2382 = vmatpush2.msra.mxu0 0.0
    %2383 = vmatprep.subr.mxu0 0.0
    %2384 = vmatpush2.msra.mxu0 0.0
    %2385 = vmatprep.subr.mxu0 0.0
    %2386 = vmatpush2.msra.mxu0 0.0
    %2387 = vmatprep.subr.mxu0 0.0
    %2388 = vmatpush2.msra.mxu0 0.0
    %2389 = vmatprep.subr.mxu0 0.0
    %2390 = vmatpush2.msra.mxu0 0.0
    %2391 = vmatprep.subr.mxu0 0.0
    %2392 = vmatpush2.msra.mxu0 0.0
    %2393 = vmatprep.subr.mxu0 0.0
    %2394 = vmatpush2.msra.mxu0 0.0
    %2395 = vmatprep.mubr.f32.mxu0 0.0
    %2396 = vmatmul.mubr.f32.gmra.mxu0 %v2329
    %v2397 = vpop.f32.mrf.mxu0
    %v2398 = vadd.f32 %v142, %v2397
    %v2399 = vpop.f32.mrf.mxu0
    %2400 = vdwg.mxu0
    %v2401 = vmax.f32 %v2398, 0.0
    %s2402 = scalar_lea.vmem [#allocation7], 3072
    %v2403 = vld [vmem:[%s2402] sm:$0xff]
    %v2404 = vld [vmem:[%s2402 + $0x8] sm:$0xff]
    %v2405 = vld [vmem:[%s2402 + $0x10] sm:$0xff]
    %v2406 = vld [vmem:[%s2402 + $0x18] sm:$0xff]
    %v2407 = vld [vmem:[%s2402 + $0x20] sm:$0xff]
    %v2408 = vld [vmem:[%s2402 + $0x28] sm:$0xff]
    %v2409 = vld [vmem:[%s2402 + $0x30] sm:$0xff]
    %v2410 = vld [vmem:[%s2402 + $0x38] sm:$0xff]
    %v2411 = vld [vmem:[%s2402 + $0x40] sm:$0xff]
    %v2412 = vld [vmem:[%s2402 + $0x48] sm:$0xff]
    %v2413 = vld [vmem:[%s2402 + $0x50] sm:$0xff]
    %v2414 = vld [vmem:[%s2402 + $0x58] sm:$0xff]
    %v2415 = vld [vmem:[%s2402 + $0x60] sm:$0xff]
    %v2416 = vld [vmem:[%s2402 + $0x68] sm:$0xff]
    %v2417 = vld [vmem:[%s2402 + $0x70] sm:$0xff]
    %v2418 = vld [vmem:[%s2402 + $0x78] sm:$0xff]
    %v2419 = vld [vmem:[%s2402 + $0x80] sm:$0xff]
    %v2420 = vld [vmem:[%s2402 + $0x88] sm:$0xff]
    %v2421 = vld [vmem:[%s2402 + $0x90] sm:$0xff]
    %v2422 = vld [vmem:[%s2402 + $0x98] sm:$0xff]
    %v2423 = vld [vmem:[%s2402 + $0xa0] sm:$0xff]
    %v2424 = vld [vmem:[%s2402 + $0xa8] sm:$0xff]
    %v2425 = vld [vmem:[%s2402 + $0xb0] sm:$0xff]
    %v2426 = vld [vmem:[%s2402 + $0xb8] sm:$0xff]
    %v2427 = vld [vmem:[%s2402 + $0xc0] sm:$0xff]
    %v2428 = vld [vmem:[%s2402 + $0xc8] sm:$0xff]
    %v2429 = vld [vmem:[%s2402 + $0xd0] sm:$0xff]
    %v2430 = vld [vmem:[%s2402 + $0xd8] sm:$0xff]
    %v2431 = vld [vmem:[%s2402 + $0xe0] sm:$0xff]
    %v2432 = vld [vmem:[%s2402 + $0xe8] sm:$0xff]
    %v2433 = vld [vmem:[%s2402 + $0xf0] sm:$0xff]
    %v2434 = vld [vmem:[%s2402 + $0xf8] sm:$0xff]
    %2435 = vmatprep.subr.mxu0 %v2434
    %2436 = vmatpush1.msra.mxu0 %v2433
    %2437 = vmatprep.subr.mxu0 %v2432
    %2438 = vmatpush1.msra.mxu0 %v2431
    %2439 = vmatprep.subr.mxu0 %v2430
    %2440 = vmatpush1.msra.mxu0 %v2429
    %2441 = vmatprep.subr.mxu0 %v2428
    %2442 = vmatpush1.msra.mxu0 %v2427
    %2443 = vmatprep.subr.mxu0 %v2426
    %2444 = vmatpush1.msra.mxu0 %v2425
    %2445 = vmatprep.subr.mxu0 %v2424
    %2446 = vmatpush1.msra.mxu0 %v2423
    %2447 = vmatprep.subr.mxu0 %v2422
    %2448 = vmatpush1.msra.mxu0 %v2421
    %2449 = vmatprep.subr.mxu0 %v2420
    %2450 = vmatpush1.msra.mxu0 %v2419
    %2451 = vmatprep.subr.mxu0 %v2418
    %2452 = vmatpush1.msra.mxu0 %v2417
    %2453 = vmatprep.subr.mxu0 %v2416
    %2454 = vmatpush1.msra.mxu0 %v2415
    %2455 = vmatprep.subr.mxu0 %v2414
    %2456 = vmatpush1.msra.mxu0 %v2413
    %2457 = vmatprep.subr.mxu0 %v2412
    %2458 = vmatpush1.msra.mxu0 %v2411
    %2459 = vmatprep.subr.mxu0 %v2410
    %2460 = vmatpush1.msra.mxu0 %v2409
    %2461 = vmatprep.subr.mxu0 %v2408
    %2462 = vmatpush1.msra.mxu0 %v2407
    %2463 = vmatprep.subr.mxu0 %v2406
    %2464 = vmatpush1.msra.mxu0 %v2405
    %2465 = vmatprep.subr.mxu0 %v2404
    %2466 = vmatpush1.msra.mxu0 %v2403
    %2467 = vmatprep.subr.mxu0 0.0
    %2468 = vmatpush2.msra.mxu0 0.0
    %2469 = vmatprep.subr.mxu0 0.0
    %2470 = vmatpush2.msra.mxu0 0.0
    %2471 = vmatprep.subr.mxu0 0.0
    %2472 = vmatpush2.msra.mxu0 0.0
    %2473 = vmatprep.subr.mxu0 0.0
    %2474 = vmatpush2.msra.mxu0 0.0
    %2475 = vmatprep.subr.mxu0 0.0
    %2476 = vmatpush2.msra.mxu0 0.0
    %2477 = vmatprep.subr.mxu0 0.0
    %2478 = vmatpush2.msra.mxu0 0.0
    %2479 = vmatprep.subr.mxu0 0.0
    %2480 = vmatpush2.msra.mxu0 0.0
    %2481 = vmatprep.subr.mxu0 0.0
    %2482 = vmatpush2.msra.mxu0 0.0
    %2483 = vmatprep.subr.mxu0 0.0
    %2484 = vmatpush2.msra.mxu0 0.0
    %2485 = vmatprep.subr.mxu0 0.0
    %2486 = vmatpush2.msra.mxu0 0.0
    %2487 = vmatprep.subr.mxu0 0.0
    %2488 = vmatpush2.msra.mxu0 0.0
    %2489 = vmatprep.subr.mxu0 0.0
    %2490 = vmatpush2.msra.mxu0 0.0
    %2491 = vmatprep.subr.mxu0 0.0
    %2492 = vmatpush2.msra.mxu0 0.0
    %2493 = vmatprep.subr.mxu0 0.0
    %2494 = vmatpush2.msra.mxu0 0.0
    %2495 = vmatprep.subr.mxu0 0.0
    %2496 = vmatpush2.msra.mxu0 0.0
    %2497 = vmatprep.subr.mxu0 0.0
    %2498 = vmatpush2.msra.mxu0 0.0
    %2499 = vmatprep.mubr.f32.mxu0 0.0
    %2500 = vmatmul.mubr.f32.gmra.mxu0 %v2401
    %v2501 = vpop.f32.mrf.mxu0
    %v2502 = vadd.f32 0.0, %v2501
    %v2503 = vpop.f32.mrf.mxu0
    %v2504 = vadd.f32 0.0, %v2503
    %2505 = vdwg.mxu0
    %v2506 = vadd.f32 %v2324, %v2502
    %v2507 = vadd.f32 %v2325, %v2504
    %s2508 = scalar_lea.vmem %s0, 104
    %v2509 = vld [vmem:[%s2508] sm:$0xff]
    %v2511 = vsel %vm144, %v2509, 0
    %2513 = vmatprep.subr.mxu0 0.0
    %2514 = vmatpush1.msra.mxu0 0.0
    %2515 = vmatprep.subr.mxu0 0.0
    %2516 = vmatpush1.msra.mxu0 0.0
    %2517 = vmatprep.subr.mxu0 0.0
    %2518 = vmatpush1.msra.mxu0 0.0
    %2519 = vmatprep.subr.mxu0 0.0
    %2520 = vmatpush1.msra.mxu0 0.0
    %2521 = vmatprep.subr.mxu0 0.0
    %2522 = vmatpush1.msra.mxu0 0.0
    %2523 = vmatprep.subr.mxu0 0.0
    %2524 = vmatpush1.msra.mxu0 0.0
    %2525 = vmatprep.subr.mxu0 0.0
    %2526 = vmatpush1.msra.mxu0 0.0
    %2527 = vmatprep.subr.mxu0 0.0
    %2528 = vmatpush1.msra.mxu0 0.0
    %2529 = vmatprep.subr.mxu0 0.0
    %2530 = vmatpush1.msra.mxu0 0.0
    %2531 = vmatprep.subr.mxu0 0.0
    %2532 = vmatpush1.msra.mxu0 0.0
    %2533 = vmatprep.subr.mxu0 0.0
    %2534 = vmatpush1.msra.mxu0 0.0
    %2535 = vmatprep.subr.mxu0 0.0
    %2536 = vmatpush1.msra.mxu0 0.0
    %2537 = vmatprep.subr.mxu0 0.0
    %2538 = vmatpush1.msra.mxu0 0.0
    %2539 = vmatprep.subr.mxu0 0.0
    %2540 = vmatpush1.msra.mxu0 0.0
    %2541 = vmatprep.subr.mxu0 0.0
    %2542 = vmatpush1.msra.mxu0 0.0
    %2543 = vmatprep.subr.mxu0 0.0
    %2544 = vmatpush1.msra.mxu0 %v150
    %2545 = vmatprep.subr.mxu0 0.0
    %2546 = vmatpush2.msra.mxu0 0.0
    %2547 = vmatprep.subr.mxu0 0.0
    %2548 = vmatpush2.msra.mxu0 0.0
    %2549 = vmatprep.subr.mxu0 0.0
    %2550 = vmatpush2.msra.mxu0 0.0
    %2551 = vmatprep.subr.mxu0 0.0
    %2552 = vmatpush2.msra.mxu0 0.0
    %2553 = vmatprep.subr.mxu0 0.0
    %2554 = vmatpush2.msra.mxu0 0.0
    %2555 = vmatprep.subr.mxu0 0.0
    %2556 = vmatpush2.msra.mxu0 0.0
    %2557 = vmatprep.subr.mxu0 0.0
    %2558 = vmatpush2.msra.mxu0 0.0
    %2559 = vmatprep.subr.mxu0 0.0
    %2560 = vmatpush2.msra.mxu0 0.0
    %2561 = vmatprep.subr.mxu0 0.0
    %2562 = vmatpush2.msra.mxu0 0.0
    %2563 = vmatprep.subr.mxu0 0.0
    %2564 = vmatpush2.msra.mxu0 0.0
    %2565 = vmatprep.subr.mxu0 0.0
    %2566 = vmatpush2.msra.mxu0 0.0
    %2567 = vmatprep.subr.mxu0 0.0
    %2568 = vmatpush2.msra.mxu0 0.0
    %2569 = vmatprep.subr.mxu0 0.0
    %2570 = vmatpush2.msra.mxu0 0.0
    %2571 = vmatprep.subr.mxu0 0.0
    %2572 = vmatpush2.msra.mxu0 0.0
    %2573 = vmatprep.subr.mxu0 0.0
    %2574 = vmatpush2.msra.mxu0 0.0
    %2575 = vmatprep.subr.mxu0 0.0
    %2576 = vmatpush2.msra.mxu0 0.0
    %2577 = vmatprep.mubr.f32.mxu0 0.0
    %2578 = vmatmul.mubr.f32.gmra.mxu0 %v2511
    %v2579 = vpop.f32.mrf.mxu0
    %v2580 = vadd.f32 %v142, %v2579
    %v2581 = vpop.f32.mrf.mxu0
    %2582 = vdwg.mxu0
    %v2583 = vmax.f32 %v2580, 0.0
    %s2584 = scalar_lea.vmem [#allocation7], 3328
    %v2585 = vld [vmem:[%s2584] sm:$0xff]
    %v2586 = vld [vmem:[%s2584 + $0x8] sm:$0xff]
    %v2587 = vld [vmem:[%s2584 + $0x10] sm:$0xff]
    %v2588 = vld [vmem:[%s2584 + $0x18] sm:$0xff]
    %v2589 = vld [vmem:[%s2584 + $0x20] sm:$0xff]
    %v2590 = vld [vmem:[%s2584 + $0x28] sm:$0xff]
    %v2591 = vld [vmem:[%s2584 + $0x30] sm:$0xff]
    %v2592 = vld [vmem:[%s2584 + $0x38] sm:$0xff]
    %v2593 = vld [vmem:[%s2584 + $0x40] sm:$0xff]
    %v2594 = vld [vmem:[%s2584 + $0x48] sm:$0xff]
    %v2595 = vld [vmem:[%s2584 + $0x50] sm:$0xff]
    %v2596 = vld [vmem:[%s2584 + $0x58] sm:$0xff]
    %v2597 = vld [vmem:[%s2584 + $0x60] sm:$0xff]
    %v2598 = vld [vmem:[%s2584 + $0x68] sm:$0xff]
    %v2599 = vld [vmem:[%s2584 + $0x70] sm:$0xff]
    %v2600 = vld [vmem:[%s2584 + $0x78] sm:$0xff]
    %v2601 = vld [vmem:[%s2584 + $0x80] sm:$0xff]
    %v2602 = vld [vmem:[%s2584 + $0x88] sm:$0xff]
    %v2603 = vld [vmem:[%s2584 + $0x90] sm:$0xff]
    %v2604 = vld [vmem:[%s2584 + $0x98] sm:$0xff]
    %v2605 = vld [vmem:[%s2584 + $0xa0] sm:$0xff]
    %v2606 = vld [vmem:[%s2584 + $0xa8] sm:$0xff]
    %v2607 = vld [vmem:[%s2584 + $0xb0] sm:$0xff]
    %v2608 = vld [vmem:[%s2584 + $0xb8] sm:$0xff]
    %v2609 = vld [vmem:[%s2584 + $0xc0] sm:$0xff]
    %v2610 = vld [vmem:[%s2584 + $0xc8] sm:$0xff]
    %v2611 = vld [vmem:[%s2584 + $0xd0] sm:$0xff]
    %v2612 = vld [vmem:[%s2584 + $0xd8] sm:$0xff]
    %v2613 = vld [vmem:[%s2584 + $0xe0] sm:$0xff]
    %v2614 = vld [vmem:[%s2584 + $0xe8] sm:$0xff]
    %v2615 = vld [vmem:[%s2584 + $0xf0] sm:$0xff]
    %v2616 = vld [vmem:[%s2584 + $0xf8] sm:$0xff]
    %2617 = vmatprep.subr.mxu0 %v2616
    %2618 = vmatpush1.msra.mxu0 %v2615
    %2619 = vmatprep.subr.mxu0 %v2614
    %2620 = vmatpush1.msra.mxu0 %v2613
    %2621 = vmatprep.subr.mxu0 %v2612
    %2622 = vmatpush1.msra.mxu0 %v2611
    %2623 = vmatprep.subr.mxu0 %v2610
    %2624 = vmatpush1.msra.mxu0 %v2609
    %2625 = vmatprep.subr.mxu0 %v2608
    %2626 = vmatpush1.msra.mxu0 %v2607
    %2627 = vmatprep.subr.mxu0 %v2606
    %2628 = vmatpush1.msra.mxu0 %v2605
    %2629 = vmatprep.subr.mxu0 %v2604
    %2630 = vmatpush1.msra.mxu0 %v2603
    %2631 = vmatprep.subr.mxu0 %v2602
    %2632 = vmatpush1.msra.mxu0 %v2601
    %2633 = vmatprep.subr.mxu0 %v2600
    %2634 = vmatpush1.msra.mxu0 %v2599
    %2635 = vmatprep.subr.mxu0 %v2598
    %2636 = vmatpush1.msra.mxu0 %v2597
    %2637 = vmatprep.subr.mxu0 %v2596
    %2638 = vmatpush1.msra.mxu0 %v2595
    %2639 = vmatprep.subr.mxu0 %v2594
    %2640 = vmatpush1.msra.mxu0 %v2593
    %2641 = vmatprep.subr.mxu0 %v2592
    %2642 = vmatpush1.msra.mxu0 %v2591
    %2643 = vmatprep.subr.mxu0 %v2590
    %2644 = vmatpush1.msra.mxu0 %v2589
    %2645 = vmatprep.subr.mxu0 %v2588
    %2646 = vmatpush1.msra.mxu0 %v2587
    %2647 = vmatprep.subr.mxu0 %v2586
    %2648 = vmatpush1.msra.mxu0 %v2585
    %2649 = vmatprep.subr.mxu0 0.0
    %2650 = vmatpush2.msra.mxu0 0.0
    %2651 = vmatprep.subr.mxu0 0.0
    %2652 = vmatpush2.msra.mxu0 0.0
    %2653 = vmatprep.subr.mxu0 0.0
    %2654 = vmatpush2.msra.mxu0 0.0
    %2655 = vmatprep.subr.mxu0 0.0
    %2656 = vmatpush2.msra.mxu0 0.0
    %2657 = vmatprep.subr.mxu0 0.0
    %2658 = vmatpush2.msra.mxu0 0.0
    %2659 = vmatprep.subr.mxu0 0.0
    %2660 = vmatpush2.msra.mxu0 0.0
    %2661 = vmatprep.subr.mxu0 0.0
    %2662 = vmatpush2.msra.mxu0 0.0
    %2663 = vmatprep.subr.mxu0 0.0
    %2664 = vmatpush2.msra.mxu0 0.0
    %2665 = vmatprep.subr.mxu0 0.0
    %2666 = vmatpush2.msra.mxu0 0.0
    %2667 = vmatprep.subr.mxu0 0.0
    %2668 = vmatpush2.msra.mxu0 0.0
    %2669 = vmatprep.subr.mxu0 0.0
    %2670 = vmatpush2.msra.mxu0 0.0
    %2671 = vmatprep.subr.mxu0 0.0
    %2672 = vmatpush2.msra.mxu0 0.0
    %2673 = vmatprep.subr.mxu0 0.0
    %2674 = vmatpush2.msra.mxu0 0.0
    %2675 = vmatprep.subr.mxu0 0.0
    %2676 = vmatpush2.msra.mxu0 0.0
    %2677 = vmatprep.subr.mxu0 0.0
    %2678 = vmatpush2.msra.mxu0 0.0
    %2679 = vmatprep.subr.mxu0 0.0
    %2680 = vmatpush2.msra.mxu0 0.0
    %2681 = vmatprep.mubr.f32.mxu0 0.0
    %2682 = vmatmul.mubr.f32.gmra.mxu0 %v2583
    %v2683 = vpop.f32.mrf.mxu0
    %v2684 = vadd.f32 0.0, %v2683
    %v2685 = vpop.f32.mrf.mxu0
    %v2686 = vadd.f32 0.0, %v2685
    %2687 = vdwg.mxu0
    %v2688 = vadd.f32 %v2506, %v2684
    %v2689 = vadd.f32 %v2507, %v2686
    %s2690 = scalar_lea.vmem %s0, 112
    %v2691 = vld [vmem:[%s2690] sm:$0xff]
    %v2693 = vsel %vm144, %v2691, 0
    %2695 = vmatprep.subr.mxu0 0.0
    %2696 = vmatpush1.msra.mxu0 0.0
    %2697 = vmatprep.subr.mxu0 0.0
    %2698 = vmatpush1.msra.mxu0 0.0
    %2699 = vmatprep.subr.mxu0 0.0
    %2700 = vmatpush1.msra.mxu0 0.0
    %2701 = vmatprep.subr.mxu0 0.0
    %2702 = vmatpush1.msra.mxu0 0.0
    %2703 = vmatprep.subr.mxu0 0.0
    %2704 = vmatpush1.msra.mxu0 0.0
    %2705 = vmatprep.subr.mxu0 0.0
    %2706 = vmatpush1.msra.mxu0 0.0
    %2707 = vmatprep.subr.mxu0 0.0
    %2708 = vmatpush1.msra.mxu0 0.0
    %2709 = vmatprep.subr.mxu0 0.0
    %2710 = vmatpush1.msra.mxu0 0.0
    %2711 = vmatprep.subr.mxu0 0.0
    %2712 = vmatpush1.msra.mxu0 0.0
    %2713 = vmatprep.subr.mxu0 0.0
    %2714 = vmatpush1.msra.mxu0 0.0
    %2715 = vmatprep.subr.mxu0 0.0
    %2716 = vmatpush1.msra.mxu0 0.0
    %2717 = vmatprep.subr.mxu0 0.0
    %2718 = vmatpush1.msra.mxu0 0.0
    %2719 = vmatprep.subr.mxu0 0.0
    %2720 = vmatpush1.msra.mxu0 0.0
    %2721 = vmatprep.subr.mxu0 0.0
    %2722 = vmatpush1.msra.mxu0 0.0
    %2723 = vmatprep.subr.mxu0 0.0
    %2724 = vmatpush1.msra.mxu0 0.0
    %2725 = vmatprep.subr.mxu0 0.0
    %2726 = vmatpush1.msra.mxu0 %v150
    %2727 = vmatprep.subr.mxu0 0.0
    %2728 = vmatpush2.msra.mxu0 0.0
    %2729 = vmatprep.subr.mxu0 0.0
    %2730 = vmatpush2.msra.mxu0 0.0
    %2731 = vmatprep.subr.mxu0 0.0
    %2732 = vmatpush2.msra.mxu0 0.0
    %2733 = vmatprep.subr.mxu0 0.0
    %2734 = vmatpush2.msra.mxu0 0.0
    %2735 = vmatprep.subr.mxu0 0.0
    %2736 = vmatpush2.msra.mxu0 0.0
    %2737 = vmatprep.subr.mxu0 0.0
    %2738 = vmatpush2.msra.mxu0 0.0
    %2739 = vmatprep.subr.mxu0 0.0
    %2740 = vmatpush2.msra.mxu0 0.0
    %2741 = vmatprep.subr.mxu0 0.0
    %2742 = vmatpush2.msra.mxu0 0.0
    %2743 = vmatprep.subr.mxu0 0.0
    %2744 = vmatpush2.msra.mxu0 0.0
    %2745 = vmatprep.subr.mxu0 0.0
    %2746 = vmatpush2.msra.mxu0 0.0
    %2747 = vmatprep.subr.mxu0 0.0
    %2748 = vmatpush2.msra.mxu0 0.0
    %2749 = vmatprep.subr.mxu0 0.0
    %2750 = vmatpush2.msra.mxu0 0.0
    %2751 = vmatprep.subr.mxu0 0.0
    %2752 = vmatpush2.msra.mxu0 0.0
    %2753 = vmatprep.subr.mxu0 0.0
    %2754 = vmatpush2.msra.mxu0 0.0
    %2755 = vmatprep.subr.mxu0 0.0
    %2756 = vmatpush2.msra.mxu0 0.0
    %2757 = vmatprep.subr.mxu0 0.0
    %2758 = vmatpush2.msra.mxu0 0.0
    %2759 = vmatprep.mubr.f32.mxu0 0.0
    %2760 = vmatmul.mubr.f32.gmra.mxu0 %v2693
    %v2761 = vpop.f32.mrf.mxu0
    %v2762 = vadd.f32 %v142, %v2761
    %v2763 = vpop.f32.mrf.mxu0
    %2764 = vdwg.mxu0
    %v2765 = vmax.f32 %v2762, 0.0
    %s2766 = scalar_lea.vmem [#allocation7], 3584
    %v2767 = vld [vmem:[%s2766] sm:$0xff]
    %v2768 = vld [vmem:[%s2766 + $0x8] sm:$0xff]
    %v2769 = vld [vmem:[%s2766 + $0x10] sm:$0xff]
    %v2770 = vld [vmem:[%s2766 + $0x18] sm:$0xff]
    %v2771 = vld [vmem:[%s2766 + $0x20] sm:$0xff]
    %v2772 = vld [vmem:[%s2766 + $0x28] sm:$0xff]
    %v2773 = vld [vmem:[%s2766 + $0x30] sm:$0xff]
    %v2774 = vld [vmem:[%s2766 + $0x38] sm:$0xff]
    %v2775 = vld [vmem:[%s2766 + $0x40] sm:$0xff]
    %v2776 = vld [vmem:[%s2766 + $0x48] sm:$0xff]
    %v2777 = vld [vmem:[%s2766 + $0x50] sm:$0xff]
    %v2778 = vld [vmem:[%s2766 + $0x58] sm:$0xff]
    %v2779 = vld [vmem:[%s2766 + $0x60] sm:$0xff]
    %v2780 = vld [vmem:[%s2766 + $0x68] sm:$0xff]
    %v2781 = vld [vmem:[%s2766 + $0x70] sm:$0xff]
    %v2782 = vld [vmem:[%s2766 + $0x78] sm:$0xff]
    %v2783 = vld [vmem:[%s2766 + $0x80] sm:$0xff]
    %v2784 = vld [vmem:[%s2766 + $0x88] sm:$0xff]
    %v2785 = vld [vmem:[%s2766 + $0x90] sm:$0xff]
    %v2786 = vld [vmem:[%s2766 + $0x98] sm:$0xff]
    %v2787 = vld [vmem:[%s2766 + $0xa0] sm:$0xff]
    %v2788 = vld [vmem:[%s2766 + $0xa8] sm:$0xff]
    %v2789 = vld [vmem:[%s2766 + $0xb0] sm:$0xff]
    %v2790 = vld [vmem:[%s2766 + $0xb8] sm:$0xff]
    %v2791 = vld [vmem:[%s2766 + $0xc0] sm:$0xff]
    %v2792 = vld [vmem:[%s2766 + $0xc8] sm:$0xff]
    %v2793 = vld [vmem:[%s2766 + $0xd0] sm:$0xff]
    %v2794 = vld [vmem:[%s2766 + $0xd8] sm:$0xff]
    %v2795 = vld [vmem:[%s2766 + $0xe0] sm:$0xff]
    %v2796 = vld [vmem:[%s2766 + $0xe8] sm:$0xff]
    %v2797 = vld [vmem:[%s2766 + $0xf0] sm:$0xff]
    %v2798 = vld [vmem:[%s2766 + $0xf8] sm:$0xff]
    %2799 = vmatprep.subr.mxu0 %v2798
    %2800 = vmatpush1.msra.mxu0 %v2797
    %2801 = vmatprep.subr.mxu0 %v2796
    %2802 = vmatpush1.msra.mxu0 %v2795
    %2803 = vmatprep.subr.mxu0 %v2794
    %2804 = vmatpush1.msra.mxu0 %v2793
    %2805 = vmatprep.subr.mxu0 %v2792
    %2806 = vmatpush1.msra.mxu0 %v2791
    %2807 = vmatprep.subr.mxu0 %v2790
    %2808 = vmatpush1.msra.mxu0 %v2789
    %2809 = vmatprep.subr.mxu0 %v2788
    %2810 = vmatpush1.msra.mxu0 %v2787
    %2811 = vmatprep.subr.mxu0 %v2786
    %2812 = vmatpush1.msra.mxu0 %v2785
    %2813 = vmatprep.subr.mxu0 %v2784
    %2814 = vmatpush1.msra.mxu0 %v2783
    %2815 = vmatprep.subr.mxu0 %v2782
    %2816 = vmatpush1.msra.mxu0 %v2781
    %2817 = vmatprep.subr.mxu0 %v2780
    %2818 = vmatpush1.msra.mxu0 %v2779
    %2819 = vmatprep.subr.mxu0 %v2778
    %2820 = vmatpush1.msra.mxu0 %v2777
    %2821 = vmatprep.subr.mxu0 %v2776
    %2822 = vmatpush1.msra.mxu0 %v2775
    %2823 = vmatprep.subr.mxu0 %v2774
    %2824 = vmatpush1.msra.mxu0 %v2773
    %2825 = vmatprep.subr.mxu0 %v2772
    %2826 = vmatpush1.msra.mxu0 %v2771
    %2827 = vmatprep.subr.mxu0 %v2770
    %2828 = vmatpush1.msra.mxu0 %v2769
    %2829 = vmatprep.subr.mxu0 %v2768
    %2830 = vmatpush1.msra.mxu0 %v2767
    %2831 = vmatprep.subr.mxu0 0.0
    %2832 = vmatpush2.msra.mxu0 0.0
    %2833 = vmatprep.subr.mxu0 0.0
    %2834 = vmatpush2.msra.mxu0 0.0
    %2835 = vmatprep.subr.mxu0 0.0
    %2836 = vmatpush2.msra.mxu0 0.0
    %2837 = vmatprep.subr.mxu0 0.0
    %2838 = vmatpush2.msra.mxu0 0.0
    %2839 = vmatprep.subr.mxu0 0.0
    %2840 = vmatpush2.msra.mxu0 0.0
    %2841 = vmatprep.subr.mxu0 0.0
    %2842 = vmatpush2.msra.mxu0 0.0
    %2843 = vmatprep.subr.mxu0 0.0
    %2844 = vmatpush2.msra.mxu0 0.0
    %2845 = vmatprep.subr.mxu0 0.0
    %2846 = vmatpush2.msra.mxu0 0.0
    %2847 = vmatprep.subr.mxu0 0.0
    %2848 = vmatpush2.msra.mxu0 0.0
    %2849 = vmatprep.subr.mxu0 0.0
    %2850 = vmatpush2.msra.mxu0 0.0
    %2851 = vmatprep.subr.mxu0 0.0
    %2852 = vmatpush2.msra.mxu0 0.0
    %2853 = vmatprep.subr.mxu0 0.0
    %2854 = vmatpush2.msra.mxu0 0.0
    %2855 = vmatprep.subr.mxu0 0.0
    %2856 = vmatpush2.msra.mxu0 0.0
    %2857 = vmatprep.subr.mxu0 0.0
    %2858 = vmatpush2.msra.mxu0 0.0
    %2859 = vmatprep.subr.mxu0 0.0
    %2860 = vmatpush2.msra.mxu0 0.0
    %2861 = vmatprep.subr.mxu0 0.0
    %2862 = vmatpush2.msra.mxu0 0.0
    %2863 = vmatprep.mubr.f32.mxu0 0.0
    %2864 = vmatmul.mubr.f32.gmra.mxu0 %v2765
    %v2865 = vpop.f32.mrf.mxu0
    %v2866 = vadd.f32 0.0, %v2865
    %v2867 = vpop.f32.mrf.mxu0
    %v2868 = vadd.f32 0.0, %v2867
    %2869 = vdwg.mxu0
    %v2870 = vadd.f32 %v2688, %v2866
    %v2871 = vadd.f32 %v2689, %v2868
    %s2872 = scalar_lea.vmem %s0, 120
    %v2873 = vld [vmem:[%s2872] sm:$0xff]
    %v2875 = vsel %vm144, %v2873, 0
    %2877 = vmatprep.subr.mxu0 0.0
    %2878 = vmatpush1.msra.mxu0 0.0
    %2879 = vmatprep.subr.mxu0 0.0
    %2880 = vmatpush1.msra.mxu0 0.0
    %2881 = vmatprep.subr.mxu0 0.0
    %2882 = vmatpush1.msra.mxu0 0.0
    %2883 = vmatprep.subr.mxu0 0.0
    %2884 = vmatpush1.msra.mxu0 0.0
    %2885 = vmatprep.subr.mxu0 0.0
    %2886 = vmatpush1.msra.mxu0 0.0
    %2887 = vmatprep.subr.mxu0 0.0
    %2888 = vmatpush1.msra.mxu0 0.0
    %2889 = vmatprep.subr.mxu0 0.0
    %2890 = vmatpush1.msra.mxu0 0.0
    %2891 = vmatprep.subr.mxu0 0.0
    %2892 = vmatpush1.msra.mxu0 0.0
    %2893 = vmatprep.subr.mxu0 0.0
    %2894 = vmatpush1.msra.mxu0 0.0
    %2895 = vmatprep.subr.mxu0 0.0
    %2896 = vmatpush1.msra.mxu0 0.0
    %2897 = vmatprep.subr.mxu0 0.0
    %2898 = vmatpush1.msra.mxu0 0.0
    %2899 = vmatprep.subr.mxu0 0.0
    %2900 = vmatpush1.msra.mxu0 0.0
    %2901 = vmatprep.subr.mxu0 0.0
    %2902 = vmatpush1.msra.mxu0 0.0
    %2903 = vmatprep.subr.mxu0 0.0
    %2904 = vmatpush1.msra.mxu0 0.0
    %2905 = vmatprep.subr.mxu0 0.0
    %2906 = vmatpush1.msra.mxu0 0.0
    %2907 = vmatprep.subr.mxu0 0.0
    %2908 = vmatpush1.msra.mxu0 %v150
    %2909 = vmatprep.subr.mxu0 0.0
    %2910 = vmatpush2.msra.mxu0 0.0
    %2911 = vmatprep.subr.mxu0 0.0
    %2912 = vmatpush2.msra.mxu0 0.0
    %2913 = vmatprep.subr.mxu0 0.0
    %2914 = vmatpush2.msra.mxu0 0.0
    %2915 = vmatprep.subr.mxu0 0.0
    %2916 = vmatpush2.msra.mxu0 0.0
    %2917 = vmatprep.subr.mxu0 0.0
    %2918 = vmatpush2.msra.mxu0 0.0
    %2919 = vmatprep.subr.mxu0 0.0
    %2920 = vmatpush2.msra.mxu0 0.0
    %2921 = vmatprep.subr.mxu0 0.0
    %2922 = vmatpush2.msra.mxu0 0.0
    %2923 = vmatprep.subr.mxu0 0.0
    %2924 = vmatpush2.msra.mxu0 0.0
    %2925 = vmatprep.subr.mxu0 0.0
    %2926 = vmatpush2.msra.mxu0 0.0
    %2927 = vmatprep.subr.mxu0 0.0
    %2928 = vmatpush2.msra.mxu0 0.0
    %2929 = vmatprep.subr.mxu0 0.0
    %2930 = vmatpush2.msra.mxu0 0.0
    %2931 = vmatprep.subr.mxu0 0.0
    %2932 = vmatpush2.msra.mxu0 0.0
    %2933 = vmatprep.subr.mxu0 0.0
    %2934 = vmatpush2.msra.mxu0 0.0
    %2935 = vmatprep.subr.mxu0 0.0
    %2936 = vmatpush2.msra.mxu0 0.0
    %2937 = vmatprep.subr.mxu0 0.0
    %2938 = vmatpush2.msra.mxu0 0.0
    %2939 = vmatprep.subr.mxu0 0.0
    %2940 = vmatpush2.msra.mxu0 0.0
    %2941 = vmatprep.mubr.f32.mxu0 0.0
    %2942 = vmatmul.mubr.f32.gmra.mxu0 %v2875
    %v2943 = vpop.f32.mrf.mxu0
    %v2944 = vadd.f32 %v142, %v2943
    %v2945 = vpop.f32.mrf.mxu0
    %2946 = vdwg.mxu0
    %v2947 = vmax.f32 %v2944, 0.0
    %s2948 = scalar_lea.vmem [#allocation7], 3840
    %v2949 = vld [vmem:[%s2948] sm:$0xff]
    %v2950 = vld [vmem:[%s2948 + $0x8] sm:$0xff]
    %v2951 = vld [vmem:[%s2948 + $0x10] sm:$0xff]
    %v2952 = vld [vmem:[%s2948 + $0x18] sm:$0xff]
    %v2953 = vld [vmem:[%s2948 + $0x20] sm:$0xff]
    %v2954 = vld [vmem:[%s2948 + $0x28] sm:$0xff]
    %v2955 = vld [vmem:[%s2948 + $0x30] sm:$0xff]
    %v2956 = vld [vmem:[%s2948 + $0x38] sm:$0xff]
    %v2957 = vld [vmem:[%s2948 + $0x40] sm:$0xff]
    %v2958 = vld [vmem:[%s2948 + $0x48] sm:$0xff]
    %v2959 = vld [vmem:[%s2948 + $0x50] sm:$0xff]
    %v2960 = vld [vmem:[%s2948 + $0x58] sm:$0xff]
    %v2961 = vld [vmem:[%s2948 + $0x60] sm:$0xff]
    %v2962 = vld [vmem:[%s2948 + $0x68] sm:$0xff]
    %v2963 = vld [vmem:[%s2948 + $0x70] sm:$0xff]
    %v2964 = vld [vmem:[%s2948 + $0x78] sm:$0xff]
    %v2965 = vld [vmem:[%s2948 + $0x80] sm:$0xff]
    %v2966 = vld [vmem:[%s2948 + $0x88] sm:$0xff]
    %v2967 = vld [vmem:[%s2948 + $0x90] sm:$0xff]
    %v2968 = vld [vmem:[%s2948 + $0x98] sm:$0xff]
    %v2969 = vld [vmem:[%s2948 + $0xa0] sm:$0xff]
    %v2970 = vld [vmem:[%s2948 + $0xa8] sm:$0xff]
    %v2971 = vld [vmem:[%s2948 + $0xb0] sm:$0xff]
    %v2972 = vld [vmem:[%s2948 + $0xb8] sm:$0xff]
    %v2973 = vld [vmem:[%s2948 + $0xc0] sm:$0xff]
    %v2974 = vld [vmem:[%s2948 + $0xc8] sm:$0xff]
    %v2975 = vld [vmem:[%s2948 + $0xd0] sm:$0xff]
    %v2976 = vld [vmem:[%s2948 + $0xd8] sm:$0xff]
    %v2977 = vld [vmem:[%s2948 + $0xe0] sm:$0xff]
    %v2978 = vld [vmem:[%s2948 + $0xe8] sm:$0xff]
    %v2979 = vld [vmem:[%s2948 + $0xf0] sm:$0xff]
    %v2980 = vld [vmem:[%s2948 + $0xf8] sm:$0xff]
    %2981 = vmatprep.subr.mxu0 %v2980
    %2982 = vmatpush1.msra.mxu0 %v2979
    %2983 = vmatprep.subr.mxu0 %v2978
    %2984 = vmatpush1.msra.mxu0 %v2977
    %2985 = vmatprep.subr.mxu0 %v2976
    %2986 = vmatpush1.msra.mxu0 %v2975
    %2987 = vmatprep.subr.mxu0 %v2974
    %2988 = vmatpush1.msra.mxu0 %v2973
    %2989 = vmatprep.subr.mxu0 %v2972
    %2990 = vmatpush1.msra.mxu0 %v2971
    %2991 = vmatprep.subr.mxu0 %v2970
    %2992 = vmatpush1.msra.mxu0 %v2969
    %2993 = vmatprep.subr.mxu0 %v2968
    %2994 = vmatpush1.msra.mxu0 %v2967
    %2995 = vmatprep.subr.mxu0 %v2966
    %2996 = vmatpush1.msra.mxu0 %v2965
    %2997 = vmatprep.subr.mxu0 %v2964
    %2998 = vmatpush1.msra.mxu0 %v2963
    %2999 = vmatprep.subr.mxu0 %v2962
    %3000 = vmatpush1.msra.mxu0 %v2961
    %3001 = vmatprep.subr.mxu0 %v2960
    %3002 = vmatpush1.msra.mxu0 %v2959
    %3003 = vmatprep.subr.mxu0 %v2958
    %3004 = vmatpush1.msra.mxu0 %v2957
    %3005 = vmatprep.subr.mxu0 %v2956
    %3006 = vmatpush1.msra.mxu0 %v2955
    %3007 = vmatprep.subr.mxu0 %v2954
    %3008 = vmatpush1.msra.mxu0 %v2953
    %3009 = vmatprep.subr.mxu0 %v2952
    %3010 = vmatpush1.msra.mxu0 %v2951
    %3011 = vmatprep.subr.mxu0 %v2950
    %3012 = vmatpush1.msra.mxu0 %v2949
    %3013 = vmatprep.subr.mxu0 0.0
    %3014 = vmatpush2.msra.mxu0 0.0
    %3015 = vmatprep.subr.mxu0 0.0
    %3016 = vmatpush2.msra.mxu0 0.0
    %3017 = vmatprep.subr.mxu0 0.0
    %3018 = vmatpush2.msra.mxu0 0.0
    %3019 = vmatprep.subr.mxu0 0.0
    %3020 = vmatpush2.msra.mxu0 0.0
    %3021 = vmatprep.subr.mxu0 0.0
    %3022 = vmatpush2.msra.mxu0 0.0
    %3023 = vmatprep.subr.mxu0 0.0
    %3024 = vmatpush2.msra.mxu0 0.0
    %3025 = vmatprep.subr.mxu0 0.0
    %3026 = vmatpush2.msra.mxu0 0.0
    %3027 = vmatprep.subr.mxu0 0.0
    %3028 = vmatpush2.msra.mxu0 0.0
    %3029 = vmatprep.subr.mxu0 0.0
    %3030 = vmatpush2.msra.mxu0 0.0
    %3031 = vmatprep.subr.mxu0 0.0
    %3032 = vmatpush2.msra.mxu0 0.0
    %3033 = vmatprep.subr.mxu0 0.0
    %3034 = vmatpush2.msra.mxu0 0.0
    %3035 = vmatprep.subr.mxu0 0.0
    %3036 = vmatpush2.msra.mxu0 0.0
    %3037 = vmatprep.subr.mxu0 0.0
    %3038 = vmatpush2.msra.mxu0 0.0
    %3039 = vmatprep.subr.mxu0 0.0
    %3040 = vmatpush2.msra.mxu0 0.0
    %3041 = vmatprep.subr.mxu0 0.0
    %3042 = vmatpush2.msra.mxu0 0.0
    %3043 = vmatprep.subr.mxu0 0.0
    %3044 = vmatpush2.msra.mxu0 0.0
    %3045 = vmatprep.mubr.f32.mxu0 0.0
    %3046 = vmatmul.mubr.f32.gmra.mxu0 %v2947
    %v3047 = vpop.f32.mrf.mxu0
    %v3048 = vadd.f32 0.0, %v3047
    %v3049 = vpop.f32.mrf.mxu0
    %v3050 = vadd.f32 0.0, %v3049
    %3051 = vdwg.mxu0
    %v3052 = vadd.f32 %v2870, %v3048
    %v3053 = vadd.f32 %v2871, %v3050
    %v3054 = vld [vmem:[#allocation8] sm:$0x3]
    %v3056 = vlaneseq
    %v3057 = vshrl.u32 %v3056, 7
    %v3058 = vsub.s32 0, %v3057
    %v3059 = vrot.slane %v3054, %v3058
    %v3060 = vlaneseq
    %v3061 = vshrl.u32 %v3060, 7
    %v3062 = vsub.s32 1, %v3061
    %v3063 = vrot.slane %v3054, %v3062
    %v3066 = vadd.f32 %v3052, %v3059
    %v3067 = vadd.f32 %v3053, %v3063
    %v3068 = vmax.f32 %v3066, 0.0
    %v3069 = vmax.f32 %v3067, 0.0
    %v3070 = vld [vmem:[#allocation10] sm:$0xff]
    %v3071 = vld [vmem:[#allocation10 + $0x8] sm:$0xff]
    %v3072 = vld [vmem:[#allocation10 + $0x10] sm:$0xff]
    %v3073 = vld [vmem:[#allocation10 + $0x18] sm:$0xff]
    %v3074 = vld [vmem:[#allocation10 + $0x20] sm:$0xff]
    %v3075 = vld [vmem:[#allocation10 + $0x28] sm:$0xff]
    %v3076 = vld [vmem:[#allocation10 + $0x30] sm:$0xff]
    %v3077 = vld [vmem:[#allocation10 + $0x38] sm:$0xff]
    %v3078 = vld [vmem:[#allocation10 + $0x40] sm:$0xff]
    %v3079 = vld [vmem:[#allocation10 + $0x48] sm:$0xff]
    %v3080 = vld [vmem:[#allocation10 + $0x50] sm:$0xff]
    %v3081 = vld [vmem:[#allocation10 + $0x58] sm:$0xff]
    %v3082 = vld [vmem:[#allocation10 + $0x60] sm:$0xff]
    %v3083 = vld [vmem:[#allocation10 + $0x68] sm:$0xff]
    %v3084 = vld [vmem:[#allocation10 + $0x70] sm:$0xff]
    %v3085 = vld [vmem:[#allocation10 + $0x78] sm:$0xff]
    %v3086 = vld [vmem:[#allocation10 + $0x80] sm:$0xff]
    %v3087 = vld [vmem:[#allocation10 + $0x88] sm:$0xff]
    %v3088 = vld [vmem:[#allocation10 + $0x90] sm:$0xff]
    %v3089 = vld [vmem:[#allocation10 + $0x98] sm:$0xff]
    %v3090 = vld [vmem:[#allocation10 + $0xa0] sm:$0xff]
    %v3091 = vld [vmem:[#allocation10 + $0xa8] sm:$0xff]
    %v3092 = vld [vmem:[#allocation10 + $0xb0] sm:$0xff]
    %v3093 = vld [vmem:[#allocation10 + $0xb8] sm:$0xff]
    %v3094 = vld [vmem:[#allocation10 + $0xc0] sm:$0xff]
    %v3095 = vld [vmem:[#allocation10 + $0xc8] sm:$0xff]
    %v3096 = vld [vmem:[#allocation10 + $0xd0] sm:$0xff]
    %v3097 = vld [vmem:[#allocation10 + $0xd8] sm:$0xff]
    %v3098 = vld [vmem:[#allocation10 + $0xe0] sm:$0xff]
    %v3099 = vld [vmem:[#allocation10 + $0xe8] sm:$0xff]
    %v3100 = vld [vmem:[#allocation10 + $0xf0] sm:$0xff]
    %v3101 = vld [vmem:[#allocation10 + $0xf8] sm:$0xff]
    %v3102 = vld [vmem:[#allocation10 + $0x100] sm:$0xff]
    %v3103 = vld [vmem:[#allocation10 + $0x108] sm:$0xff]
    %v3104 = vld [vmem:[#allocation10 + $0x110] sm:$0xff]
    %v3105 = vld [vmem:[#allocation10 + $0x118] sm:$0xff]
    %v3106 = vld [vmem:[#allocation10 + $0x120] sm:$0xff]
    %v3107 = vld [vmem:[#allocation10 + $0x128] sm:$0xff]
    %v3108 = vld [vmem:[#allocation10 + $0x130] sm:$0xff]
    %v3109 = vld [vmem:[#allocation10 + $0x138] sm:$0xff]
    %v3110 = vld [vmem:[#allocation10 + $0x140] sm:$0xff]
    %v3111 = vld [vmem:[#allocation10 + $0x148] sm:$0xff]
    %v3112 = vld [vmem:[#allocation10 + $0x150] sm:$0xff]
    %v3113 = vld [vmem:[#allocation10 + $0x158] sm:$0xff]
    %v3114 = vld [vmem:[#allocation10 + $0x160] sm:$0xff]
    %v3115 = vld [vmem:[#allocation10 + $0x168] sm:$0xff]
    %v3116 = vld [vmem:[#allocation10 + $0x170] sm:$0xff]
    %v3117 = vld [vmem:[#allocation10 + $0x178] sm:$0xff]
    %v3118 = vld [vmem:[#allocation10 + $0x180] sm:$0xff]
    %v3119 = vld [vmem:[#allocation10 + $0x188] sm:$0xff]
    %v3120 = vld [vmem:[#allocation10 + $0x190] sm:$0xff]
    %v3121 = vld [vmem:[#allocation10 + $0x198] sm:$0xff]
    %v3122 = vld [vmem:[#allocation10 + $0x1a0] sm:$0xff]
    %v3123 = vld [vmem:[#allocation10 + $0x1a8] sm:$0xff]
    %v3124 = vld [vmem:[#allocation10 + $0x1b0] sm:$0xff]
    %v3125 = vld [vmem:[#allocation10 + $0x1b8] sm:$0xff]
    %v3126 = vld [vmem:[#allocation10 + $0x1c0] sm:$0xff]
    %v3127 = vld [vmem:[#allocation10 + $0x1c8] sm:$0xff]
    %v3128 = vld [vmem:[#allocation10 + $0x1d0] sm:$0xff]
    %v3129 = vld [vmem:[#allocation10 + $0x1d8] sm:$0xff]
    %v3130 = vld [vmem:[#allocation10 + $0x1e0] sm:$0xff]
    %v3131 = vld [vmem:[#allocation10 + $0x1e8] sm:$0xff]
    %v3132 = vld [vmem:[#allocation10 + $0x1f0] sm:$0xff]
    %v3133 = vld [vmem:[#allocation10 + $0x1f8] sm:$0xff]
    %v3134 = vld [vmem:[#allocation10 + $0x200] sm:$0xff]
    %v3135 = vld [vmem:[#allocation10 + $0x208] sm:$0xff]
    %v3136 = vld [vmem:[#allocation10 + $0x210] sm:$0xff]
    %v3137 = vld [vmem:[#allocation10 + $0x218] sm:$0xff]
    %v3138 = vld [vmem:[#allocation10 + $0x220] sm:$0xff]
    %v3139 = vld [vmem:[#allocation10 + $0x228] sm:$0xff]
    %v3140 = vld [vmem:[#allocation10 + $0x230] sm:$0xff]
    %v3141 = vld [vmem:[#allocation10 + $0x238] sm:$0xff]
    %v3142 = vld [vmem:[#allocation10 + $0x240] sm:$0xff]
    %v3143 = vld [vmem:[#allocation10 + $0x248] sm:$0xff]
    %v3144 = vld [vmem:[#allocation10 + $0x250] sm:$0xff]
    %v3145 = vld [vmem:[#allocation10 + $0x258] sm:$0xff]
    %v3146 = vld [vmem:[#allocation10 + $0x260] sm:$0xff]
    %v3147 = vld [vmem:[#allocation10 + $0x268] sm:$0xff]
    %v3148 = vld [vmem:[#allocation10 + $0x270] sm:$0xff]
    %v3149 = vld [vmem:[#allocation10 + $0x278] sm:$0xff]
    %v3150 = vld [vmem:[#allocation10 + $0x280] sm:$0xff]
    %v3151 = vld [vmem:[#allocation10 + $0x288] sm:$0xff]
    %v3152 = vld [vmem:[#allocation10 + $0x290] sm:$0xff]
    %v3153 = vld [vmem:[#allocation10 + $0x298] sm:$0xff]
    %v3154 = vld [vmem:[#allocation10 + $0x2a0] sm:$0xff]
    %v3155 = vld [vmem:[#allocation10 + $0x2a8] sm:$0xff]
    %v3156 = vld [vmem:[#allocation10 + $0x2b0] sm:$0xff]
    %v3157 = vld [vmem:[#allocation10 + $0x2b8] sm:$0xff]
    %v3158 = vld [vmem:[#allocation10 + $0x2c0] sm:$0xff]
    %v3159 = vld [vmem:[#allocation10 + $0x2c8] sm:$0xff]
    %v3160 = vld [vmem:[#allocation10 + $0x2d0] sm:$0xff]
    %v3161 = vld [vmem:[#allocation10 + $0x2d8] sm:$0xff]
    %v3162 = vld [vmem:[#allocation10 + $0x2e0] sm:$0xff]
    %v3163 = vld [vmem:[#allocation10 + $0x2e8] sm:$0xff]
    %v3164 = vld [vmem:[#allocation10 + $0x2f0] sm:$0xff]
    %v3165 = vld [vmem:[#allocation10 + $0x2f8] sm:$0xff]
    %v3166 = vld [vmem:[#allocation10 + $0x300] sm:$0xff]
    %v3167 = vld [vmem:[#allocation10 + $0x308] sm:$0xff]
    %v3168 = vld [vmem:[#allocation10 + $0x310] sm:$0xff]
    %v3169 = vld [vmem:[#allocation10 + $0x318] sm:$0xff]
    %v3170 = vld [vmem:[#allocation10 + $0x320] sm:$0xff]
    %v3171 = vld [vmem:[#allocation10 + $0x328] sm:$0xff]
    %v3172 = vld [vmem:[#allocation10 + $0x330] sm:$0xff]
    %v3173 = vld [vmem:[#allocation10 + $0x338] sm:$0xff]
    %v3174 = vld [vmem:[#allocation10 + $0x340] sm:$0xff]
    %v3175 = vld [vmem:[#allocation10 + $0x348] sm:$0xff]
    %v3176 = vld [vmem:[#allocation10 + $0x350] sm:$0xff]
    %v3177 = vld [vmem:[#allocation10 + $0x358] sm:$0xff]
    %v3178 = vld [vmem:[#allocation10 + $0x360] sm:$0xff]
    %v3179 = vld [vmem:[#allocation10 + $0x368] sm:$0xff]
    %v3180 = vld [vmem:[#allocation10 + $0x370] sm:$0xff]
    %v3181 = vld [vmem:[#allocation10 + $0x378] sm:$0xff]
    %v3182 = vld [vmem:[#allocation10 + $0x380] sm:$0xff]
    %v3183 = vld [vmem:[#allocation10 + $0x388] sm:$0xff]
    %v3184 = vld [vmem:[#allocation10 + $0x390] sm:$0xff]
    %v3185 = vld [vmem:[#allocation10 + $0x398] sm:$0xff]
    %v3186 = vld [vmem:[#allocation10 + $0x3a0] sm:$0xff]
    %v3187 = vld [vmem:[#allocation10 + $0x3a8] sm:$0xff]
    %v3188 = vld [vmem:[#allocation10 + $0x3b0] sm:$0xff]
    %v3189 = vld [vmem:[#allocation10 + $0x3b8] sm:$0xff]
    %v3190 = vld [vmem:[#allocation10 + $0x3c0] sm:$0xff]
    %v3191 = vld [vmem:[#allocation10 + $0x3c8] sm:$0xff]
    %v3192 = vld [vmem:[#allocation10 + $0x3d0] sm:$0xff]
    %v3193 = vld [vmem:[#allocation10 + $0x3d8] sm:$0xff]
    %v3194 = vld [vmem:[#allocation10 + $0x3e0] sm:$0xff]
    %v3195 = vld [vmem:[#allocation10 + $0x3e8] sm:$0xff]
    %v3196 = vld [vmem:[#allocation10 + $0x3f0] sm:$0xff]
    %v3197 = vld [vmem:[#allocation10 + $0x3f8] sm:$0xff]
    %v3198 = vld [vmem:[#allocation11] sm:$0xf]
    %v3200 = vlaneseq
    %v3201 = vshrl.u32 %v3200, 7
    %v3202 = vsub.s32 0, %v3201
    %v3203 = vrot.slane %v3198, %v3202
    %v3204 = vlaneseq
    %v3205 = vshrl.u32 %v3204, 7
    %v3206 = vsub.s32 1, %v3205
    %v3207 = vrot.slane %v3198, %v3206
    %v3208 = vlaneseq
    %v3209 = vshrl.u32 %v3208, 7
    %v3210 = vsub.s32 2, %v3209
    %v3211 = vrot.slane %v3198, %v3210
    %v3212 = vlaneseq
    %v3213 = vshrl.u32 %v3212, 7
    %v3214 = vsub.s32 3, %v3213
    %v3215 = vrot.slane %v3198, %v3214
    %3220 = vmatprep.subr.mxu0 %v3131
    %3221 = vmatpush1.msra.mxu0 %v3130
    %3222 = vmatprep.subr.mxu0 %v3127
    %3223 = vmatpush1.msra.mxu0 %v3126
    %3224 = vmatprep.subr.mxu0 %v3123
    %3225 = vmatpush1.msra.mxu0 %v3122
    %3226 = vmatprep.subr.mxu0 %v3119
    %3227 = vmatpush1.msra.mxu0 %v3118
    %3228 = vmatprep.subr.mxu0 %v3115
    %3229 = vmatpush1.msra.mxu0 %v3114
    %3230 = vmatprep.subr.mxu0 %v3111
    %3231 = vmatpush1.msra.mxu0 %v3110
    %3232 = vmatprep.subr.mxu0 %v3107
    %3233 = vmatpush1.msra.mxu0 %v3106
    %3234 = vmatprep.subr.mxu0 %v3103
    %3235 = vmatpush1.msra.mxu0 %v3102
    %3236 = vmatprep.subr.mxu0 %v3099
    %3237 = vmatpush1.msra.mxu0 %v3098
    %3238 = vmatprep.subr.mxu0 %v3095
    %3239 = vmatpush1.msra.mxu0 %v3094
    %3240 = vmatprep.subr.mxu0 %v3091
    %3241 = vmatpush1.msra.mxu0 %v3090
    %3242 = vmatprep.subr.mxu0 %v3087
    %3243 = vmatpush1.msra.mxu0 %v3086
    %3244 = vmatprep.subr.mxu0 %v3083
    %3245 = vmatpush1.msra.mxu0 %v3082
    %3246 = vmatprep.subr.mxu0 %v3079
    %3247 = vmatpush1.msra.mxu0 %v3078
    %3248 = vmatprep.subr.mxu0 %v3075
    %3249 = vmatpush1.msra.mxu0 %v3074
    %3250 = vmatprep.subr.mxu0 %v3071
    %3251 = vmatpush1.msra.mxu0 %v3070
    %3252 = vmatprep.subr.mxu0 %v3195
    %3253 = vmatpush2.msra.mxu0 %v3194
    %3254 = vmatprep.subr.mxu0 %v3191
    %3255 = vmatpush2.msra.mxu0 %v3190
    %3256 = vmatprep.subr.mxu0 %v3187
    %3257 = vmatpush2.msra.mxu0 %v3186
    %3258 = vmatprep.subr.mxu0 %v3183
    %3259 = vmatpush2.msra.mxu0 %v3182
    %3260 = vmatprep.subr.mxu0 %v3179
    %3261 = vmatpush2.msra.mxu0 %v3178
    %3262 = vmatprep.subr.mxu0 %v3175
    %3263 = vmatpush2.msra.mxu0 %v3174
    %3264 = vmatprep.subr.mxu0 %v3171
    %3265 = vmatpush2.msra.mxu0 %v3170
    %3266 = vmatprep.subr.mxu0 %v3167
    %3267 = vmatpush2.msra.mxu0 %v3166
    %3268 = vmatprep.subr.mxu0 %v3163
    %3269 = vmatpush2.msra.mxu0 %v3162
    %3270 = vmatprep.subr.mxu0 %v3159
    %3271 = vmatpush2.msra.mxu0 %v3158
    %3272 = vmatprep.subr.mxu0 %v3155
    %3273 = vmatpush2.msra.mxu0 %v3154
    %3274 = vmatprep.subr.mxu0 %v3151
    %3275 = vmatpush2.msra.mxu0 %v3150
    %3276 = vmatprep.subr.mxu0 %v3147
    %3277 = vmatpush2.msra.mxu0 %v3146
    %3278 = vmatprep.subr.mxu0 %v3143
    %3279 = vmatpush2.msra.mxu0 %v3142
    %3280 = vmatprep.subr.mxu0 %v3139
    %3281 = vmatpush2.msra.mxu0 %v3138
    %3282 = vmatprep.subr.mxu0 %v3135
    %3283 = vmatpush2.msra.mxu0 %v3134
    %3284 = vmatprep.mubr.f32.mxu0 %v3069
    %3285 = vmatmul.mubr.f32.gmra.mxu0 %v3068
    %v3286 = vpop.f32.mrf.mxu0
    %v3287 = vadd.f32 %v3203, %v3286
    %v3288 = vpop.f32.mrf.mxu0
    %v3289 = vadd.f32 %v3207, %v3288
    %3290 = vdwg.mxu0
    %3291 = vmatprep.subr.mxu0 %v3133
    %3292 = vmatpush1.msra.mxu0 %v3132
    %3293 = vmatprep.subr.mxu0 %v3129
    %3294 = vmatpush1.msra.mxu0 %v3128
    %3295 = vmatprep.subr.mxu0 %v3125
    %3296 = vmatpush1.msra.mxu0 %v3124
    %3297 = vmatprep.subr.mxu0 %v3121
    %3298 = vmatpush1.msra.mxu0 %v3120
    %3299 = vmatprep.subr.mxu0 %v3117
    %3300 = vmatpush1.msra.mxu0 %v3116
    %3301 = vmatprep.subr.mxu0 %v3113
    %3302 = vmatpush1.msra.mxu0 %v3112
    %3303 = vmatprep.subr.mxu0 %v3109
    %3304 = vmatpush1.msra.mxu0 %v3108
    %3305 = vmatprep.subr.mxu0 %v3105
    %3306 = vmatpush1.msra.mxu0 %v3104
    %3307 = vmatprep.subr.mxu0 %v3101
    %3308 = vmatpush1.msra.mxu0 %v3100
    %3309 = vmatprep.subr.mxu0 %v3097
    %3310 = vmatpush1.msra.mxu0 %v3096
    %3311 = vmatprep.subr.mxu0 %v3093
    %3312 = vmatpush1.msra.mxu0 %v3092
    %3313 = vmatprep.subr.mxu0 %v3089
    %3314 = vmatpush1.msra.mxu0 %v3088
    %3315 = vmatprep.subr.mxu0 %v3085
    %3316 = vmatpush1.msra.mxu0 %v3084
    %3317 = vmatprep.subr.mxu0 %v3081
    %3318 = vmatpush1.msra.mxu0 %v3080
    %3319 = vmatprep.subr.mxu0 %v3077
    %3320 = vmatpush1.msra.mxu0 %v3076
    %3321 = vmatprep.subr.mxu0 %v3073
    %3322 = vmatpush1.msra.mxu0 %v3072
    %3323 = vmatprep.subr.mxu0 %v3197
    %3324 = vmatpush2.msra.mxu0 %v3196
    %3325 = vmatprep.subr.mxu0 %v3193
    %3326 = vmatpush2.msra.mxu0 %v3192
    %3327 = vmatprep.subr.mxu0 %v3189
    %3328 = vmatpush2.msra.mxu0 %v3188
    %3329 = vmatprep.subr.mxu0 %v3185
    %3330 = vmatpush2.msra.mxu0 %v3184
    %3331 = vmatprep.subr.mxu0 %v3181
    %3332 = vmatpush2.msra.mxu0 %v3180
    %3333 = vmatprep.subr.mxu0 %v3177
    %3334 = vmatpush2.msra.mxu0 %v3176
    %3335 = vmatprep.subr.mxu0 %v3173
    %3336 = vmatpush2.msra.mxu0 %v3172
    %3337 = vmatprep.subr.mxu0 %v3169
    %3338 = vmatpush2.msra.mxu0 %v3168
    %3339 = vmatprep.subr.mxu0 %v3165
    %3340 = vmatpush2.msra.mxu0 %v3164
    %3341 = vmatprep.subr.mxu0 %v3161
    %3342 = vmatpush2.msra.mxu0 %v3160
    %3343 = vmatprep.subr.mxu0 %v3157
    %3344 = vmatpush2.msra.mxu0 %v3156
    %3345 = vmatprep.subr.mxu0 %v3153
    %3346 = vmatpush2.msra.mxu0 %v3152
    %3347 = vmatprep.subr.mxu0 %v3149
    %3348 = vmatpush2.msra.mxu0 %v3148
    %3349 = vmatprep.subr.mxu0 %v3145
    %3350 = vmatpush2.msra.mxu0 %v3144
    %3351 = vmatprep.subr.mxu0 %v3141
    %3352 = vmatpush2.msra.mxu0 %v3140
    %3353 = vmatprep.subr.mxu0 %v3137
    %3354 = vmatpush2.msra.mxu0 %v3136
    %3355 = vmatprep.mubr.f32.mxu0 %v3069
    %3356 = vmatmul.mubr.f32.gmra.mxu0 %v3068
    %v3357 = vpop.f32.mrf.mxu0
    %v3358 = vadd.f32 %v3211, %v3357
    %v3359 = vpop.f32.mrf.mxu0
    %v3360 = vadd.f32 %v3215, %v3359
    %3361 = vdwg.mxu0
    %v3362 = vmax.f32 %v3287, 0.0
    %v3363 = vmax.f32 %v3289, 0.0
    %v3364 = vmax.f32 %v3358, 0.0
    %v3365 = vmax.f32 %v3360, 0.0
    %v3366 = vld [vmem:[#allocation13] sm:$0xff]
    %v3367 = vld [vmem:[#allocation13 + $0x8] sm:$0xff]
    %v3368 = vld [vmem:[#allocation13 + $0x10] sm:$0xff]
    %v3369 = vld [vmem:[#allocation13 + $0x18] sm:$0xff]
    %v3370 = vld [vmem:[#allocation13 + $0x20] sm:$0xff]
    %v3371 = vld [vmem:[#allocation13 + $0x28] sm:$0xff]
    %v3372 = vld [vmem:[#allocation13 + $0x30] sm:$0xff]
    %v3373 = vld [vmem:[#allocation13 + $0x38] sm:$0xff]
    %v3374 = vld [vmem:[#allocation13 + $0x40] sm:$0xff]
    %v3375 = vld [vmem:[#allocation13 + $0x48] sm:$0xff]
    %v3376 = vld [vmem:[#allocation13 + $0x50] sm:$0xff]
    %v3377 = vld [vmem:[#allocation13 + $0x58] sm:$0xff]
    %v3378 = vld [vmem:[#allocation13 + $0x60] sm:$0xff]
    %v3379 = vld [vmem:[#allocation13 + $0x68] sm:$0xff]
    %v3380 = vld [vmem:[#allocation13 + $0x70] sm:$0xff]
    %v3381 = vld [vmem:[#allocation13 + $0x78] sm:$0xff]
    %v3382 = vld [vmem:[#allocation13 + $0x80] sm:$0xff]
    %v3383 = vld [vmem:[#allocation13 + $0x88] sm:$0xff]
    %v3384 = vld [vmem:[#allocation13 + $0x90] sm:$0xff]
    %v3385 = vld [vmem:[#allocation13 + $0x98] sm:$0xff]
    %v3386 = vld [vmem:[#allocation13 + $0xa0] sm:$0xff]
    %v3387 = vld [vmem:[#allocation13 + $0xa8] sm:$0xff]
    %v3388 = vld [vmem:[#allocation13 + $0xb0] sm:$0xff]
    %v3389 = vld [vmem:[#allocation13 + $0xb8] sm:$0xff]
    %v3390 = vld [vmem:[#allocation13 + $0xc0] sm:$0xff]
    %v3391 = vld [vmem:[#allocation13 + $0xc8] sm:$0xff]
    %v3392 = vld [vmem:[#allocation13 + $0xd0] sm:$0xff]
    %v3393 = vld [vmem:[#allocation13 + $0xd8] sm:$0xff]
    %v3394 = vld [vmem:[#allocation13 + $0xe0] sm:$0xff]
    %v3395 = vld [vmem:[#allocation13 + $0xe8] sm:$0xff]
    %v3396 = vld [vmem:[#allocation13 + $0xf0] sm:$0xff]
    %v3397 = vld [vmem:[#allocation13 + $0xf8] sm:$0xff]
    %v3398 = vld [vmem:[#allocation13 + $0x100] sm:$0xff]
    %v3399 = vld [vmem:[#allocation13 + $0x108] sm:$0xff]
    %v3400 = vld [vmem:[#allocation13 + $0x110] sm:$0xff]
    %v3401 = vld [vmem:[#allocation13 + $0x118] sm:$0xff]
    %v3402 = vld [vmem:[#allocation13 + $0x120] sm:$0xff]
    %v3403 = vld [vmem:[#allocation13 + $0x128] sm:$0xff]
    %v3404 = vld [vmem:[#allocation13 + $0x130] sm:$0xff]
    %v3405 = vld [vmem:[#allocation13 + $0x138] sm:$0xff]
    %v3406 = vld [vmem:[#allocation13 + $0x140] sm:$0xff]
    %v3407 = vld [vmem:[#allocation13 + $0x148] sm:$0xff]
    %v3408 = vld [vmem:[#allocation13 + $0x150] sm:$0xff]
    %v3409 = vld [vmem:[#allocation13 + $0x158] sm:$0xff]
    %v3410 = vld [vmem:[#allocation13 + $0x160] sm:$0xff]
    %v3411 = vld [vmem:[#allocation13 + $0x168] sm:$0xff]
    %v3412 = vld [vmem:[#allocation13 + $0x170] sm:$0xff]
    %v3413 = vld [vmem:[#allocation13 + $0x178] sm:$0xff]
    %v3414 = vld [vmem:[#allocation13 + $0x180] sm:$0xff]
    %v3415 = vld [vmem:[#allocation13 + $0x188] sm:$0xff]
    %v3416 = vld [vmem:[#allocation13 + $0x190] sm:$0xff]
    %v3417 = vld [vmem:[#allocation13 + $0x198] sm:$0xff]
    %v3418 = vld [vmem:[#allocation13 + $0x1a0] sm:$0xff]
    %v3419 = vld [vmem:[#allocation13 + $0x1a8] sm:$0xff]
    %v3420 = vld [vmem:[#allocation13 + $0x1b0] sm:$0xff]
    %v3421 = vld [vmem:[#allocation13 + $0x1b8] sm:$0xff]
    %v3422 = vld [vmem:[#allocation13 + $0x1c0] sm:$0xff]
    %v3423 = vld [vmem:[#allocation13 + $0x1c8] sm:$0xff]
    %v3424 = vld [vmem:[#allocation13 + $0x1d0] sm:$0xff]
    %v3425 = vld [vmem:[#allocation13 + $0x1d8] sm:$0xff]
    %v3426 = vld [vmem:[#allocation13 + $0x1e0] sm:$0xff]
    %v3427 = vld [vmem:[#allocation13 + $0x1e8] sm:$0xff]
    %v3428 = vld [vmem:[#allocation13 + $0x1f0] sm:$0xff]
    %v3429 = vld [vmem:[#allocation13 + $0x1f8] sm:$0xff]
    %v3430 = vld [vmem:[#allocation14] sm:$0x1]
    %v3432 = vlaneseq
    %v3433 = vshrl.u32 %v3432, 7
    %v3434 = vsub.s32 0, %v3433
    %v3435 = vrot.slane %v3430, %v3434
    %3437 = vmatprep.subr.mxu0 0.0
    %3438 = vmatpush1.msra.mxu0 %v3381
    %3439 = vmatprep.subr.mxu0 0.0
    %3440 = vmatpush1.msra.mxu0 %v3380
    %3441 = vmatprep.subr.mxu0 0.0
    %3442 = vmatpush1.msra.mxu0 %v3379
    %3443 = vmatprep.subr.mxu0 0.0
    %3444 = vmatpush1.msra.mxu0 %v3378
    %3445 = vmatprep.subr.mxu0 0.0
    %3446 = vmatpush1.msra.mxu0 %v3377
    %3447 = vmatprep.subr.mxu0 0.0
    %3448 = vmatpush1.msra.mxu0 %v3376
    %3449 = vmatprep.subr.mxu0 0.0
    %3450 = vmatpush1.msra.mxu0 %v3375
    %3451 = vmatprep.subr.mxu0 0.0
    %3452 = vmatpush1.msra.mxu0 %v3374
    %3453 = vmatprep.subr.mxu0 0.0
    %3454 = vmatpush1.msra.mxu0 %v3373
    %3455 = vmatprep.subr.mxu0 0.0
    %3456 = vmatpush1.msra.mxu0 %v3372
    %3457 = vmatprep.subr.mxu0 0.0
    %3458 = vmatpush1.msra.mxu0 %v3371
    %3459 = vmatprep.subr.mxu0 0.0
    %3460 = vmatpush1.msra.mxu0 %v3370
    %3461 = vmatprep.subr.mxu0 0.0
    %3462 = vmatpush1.msra.mxu0 %v3369
    %3463 = vmatprep.subr.mxu0 0.0
    %3464 = vmatpush1.msra.mxu0 %v3368
    %3465 = vmatprep.subr.mxu0 0.0
    %3466 = vmatpush1.msra.mxu0 %v3367
    %3467 = vmatprep.subr.mxu0 0.0
    %3468 = vmatpush1.msra.mxu0 %v3366
    %3469 = vmatprep.subr.mxu0 0.0
    %3470 = vmatpush2.msra.mxu0 %v3397
    %3471 = vmatprep.subr.mxu0 0.0
    %3472 = vmatpush2.msra.mxu0 %v3396
    %3473 = vmatprep.subr.mxu0 0.0
    %3474 = vmatpush2.msra.mxu0 %v3395
    %3475 = vmatprep.subr.mxu0 0.0
    %3476 = vmatpush2.msra.mxu0 %v3394
    %3477 = vmatprep.subr.mxu0 0.0
    %3478 = vmatpush2.msra.mxu0 %v3393
    %3479 = vmatprep.subr.mxu0 0.0
    %3480 = vmatpush2.msra.mxu0 %v3392
    %3481 = vmatprep.subr.mxu0 0.0
    %3482 = vmatpush2.msra.mxu0 %v3391
    %3483 = vmatprep.subr.mxu0 0.0
    %3484 = vmatpush2.msra.mxu0 %v3390
    %3485 = vmatprep.subr.mxu0 0.0
    %3486 = vmatpush2.msra.mxu0 %v3389
    %3487 = vmatprep.subr.mxu0 0.0
    %3488 = vmatpush2.msra.mxu0 %v3388
    %3489 = vmatprep.subr.mxu0 0.0
    %3490 = vmatpush2.msra.mxu0 %v3387
    %3491 = vmatprep.subr.mxu0 0.0
    %3492 = vmatpush2.msra.mxu0 %v3386
    %3493 = vmatprep.subr.mxu0 0.0
    %3494 = vmatpush2.msra.mxu0 %v3385
    %3495 = vmatprep.subr.mxu0 0.0
    %3496 = vmatpush2.msra.mxu0 %v3384
    %3497 = vmatprep.subr.mxu0 0.0
    %3498 = vmatpush2.msra.mxu0 %v3383
    %3499 = vmatprep.subr.mxu0 0.0
    %3500 = vmatpush2.msra.mxu0 %v3382
    %3501 = vmatprep.mubr.f32.mxu0 %v3363
    %3502 = vmatmul.mubr.f32.gmra.mxu0 %v3362
    %v3503 = vpop.f32.mrf.mxu0
    %v3504 = vadd.f32 %v3435, %v3503
    %v3505 = vpop.f32.mrf.mxu0
    %3506 = vdwg.mxu0
    %3507 = vmatprep.subr.mxu0 0.0
    %3508 = vmatpush1.msra.mxu0 %v3413
    %3509 = vmatprep.subr.mxu0 0.0
    %3510 = vmatpush1.msra.mxu0 %v3412
    %3511 = vmatprep.subr.mxu0 0.0
    %3512 = vmatpush1.msra.mxu0 %v3411
    %3513 = vmatprep.subr.mxu0 0.0
    %3514 = vmatpush1.msra.mxu0 %v3410
    %3515 = vmatprep.subr.mxu0 0.0
    %3516 = vmatpush1.msra.mxu0 %v3409
    %3517 = vmatprep.subr.mxu0 0.0
    %3518 = vmatpush1.msra.mxu0 %v3408
    %3519 = vmatprep.subr.mxu0 0.0
    %3520 = vmatpush1.msra.mxu0 %v3407
    %3521 = vmatprep.subr.mxu0 0.0
    %3522 = vmatpush1.msra.mxu0 %v3406
    %3523 = vmatprep.subr.mxu0 0.0
    %3524 = vmatpush1.msra.mxu0 %v3405
    %3525 = vmatprep.subr.mxu0 0.0
    %3526 = vmatpush1.msra.mxu0 %v3404
    %3527 = vmatprep.subr.mxu0 0.0
    %3528 = vmatpush1.msra.mxu0 %v3403
    %3529 = vmatprep.subr.mxu0 0.0
    %3530 = vmatpush1.msra.mxu0 %v3402
    %3531 = vmatprep.subr.mxu0 0.0
    %3532 = vmatpush1.msra.mxu0 %v3401
    %3533 = vmatprep.subr.mxu0 0.0
    %3534 = vmatpush1.msra.mxu0 %v3400
    %3535 = vmatprep.subr.mxu0 0.0
    %3536 = vmatpush1.msra.mxu0 %v3399
    %3537 = vmatprep.subr.mxu0 0.0
    %3538 = vmatpush1.msra.mxu0 %v3398
    %3539 = vmatprep.subr.mxu0 0.0
    %3540 = vmatpush2.msra.mxu0 %v3429
    %3541 = vmatprep.subr.mxu0 0.0
    %3542 = vmatpush2.msra.mxu0 %v3428
    %3543 = vmatprep.subr.mxu0 0.0
    %3544 = vmatpush2.msra.mxu0 %v3427
    %3545 = vmatprep.subr.mxu0 0.0
    %3546 = vmatpush2.msra.mxu0 %v3426
    %3547 = vmatprep.subr.mxu0 0.0
    %3548 = vmatpush2.msra.mxu0 %v3425
    %3549 = vmatprep.subr.mxu0 0.0
    %3550 = vmatpush2.msra.mxu0 %v3424
    %3551 = vmatprep.subr.mxu0 0.0
    %3552 = vmatpush2.msra.mxu0 %v3423
    %3553 = vmatprep.subr.mxu0 0.0
    %3554 = vmatpush2.msra.mxu0 %v3422
    %3555 = vmatprep.subr.mxu0 0.0
    %3556 = vmatpush2.msra.mxu0 %v3421
    %3557 = vmatprep.subr.mxu0 0.0
    %3558 = vmatpush2.msra.mxu0 %v3420
    %3559 = vmatprep.subr.mxu0 0.0
    %3560 = vmatpush2.msra.mxu0 %v3419
    %3561 = vmatprep.subr.mxu0 0.0
    %3562 = vmatpush2.msra.mxu0 %v3418
    %3563 = vmatprep.subr.mxu0 0.0
    %3564 = vmatpush2.msra.mxu0 %v3417
    %3565 = vmatprep.subr.mxu0 0.0
    %3566 = vmatpush2.msra.mxu0 %v3416
    %3567 = vmatprep.subr.mxu0 0.0
    %3568 = vmatpush2.msra.mxu0 %v3415
    %3569 = vmatprep.subr.mxu0 0.0
    %3570 = vmatpush2.msra.mxu0 %v3414
    %3571 = vmatprep.mubr.f32.mxu0 %v3365
    %3572 = vmatmul.mubr.f32.gmra.mxu0 %v3364
    %v3573 = vpop.f32.mrf.mxu0
    %v3574 = vadd.f32 %v3504, %v3573
    %v3575 = vpop.f32.mrf.mxu0
    %3576 = vdwg.mxu0
    %3577 = vst [vmem:[#allocation16] sm:$0xff] %v3574
    %v3578 = vlaneseq
    %v3579 = vand.u32 %v3578, 127
    %vm3580 = vcmp.ge.s32.totalorder %v3579, 1
    %vm3581 = vcmp.lt.s32.totalorder %v3579, 5
    %vm3582 = vmand %vm3580, %vm3581
    %v3583 = vsel %vm3582, %v3574, -1e+30
    %3584 = vmax.xlane.f32.xlu0 %v3583
    %v3585 = vpop.xlane.xlu0 %3584
    %v3586 = vsub.f32 %v3583, %v3585
    %v3587 = vmul.f32 %v3586, 1.442695
    %v3588 = vpow.pop %v3587
    %3589 = vadd.xlane.f32.xlu0 %v3588
    %v3590 = vpop.xlane.xlu0 %3589
    %v3591 = vrcp.pop %v3590
    %v3592 = vmul.f32 %v3588, %v3591
    %3593 = vst [vmem:[#allocation17] sm:$0xff] %v3592
    // Predicated region
    $region70: #{tpu_custom_call.1} parent=1 // pred_check
      _
    $region71: #{tpu_custom_call.1} parent=1 // pred_check_branch
      %3595 = sbr.rel (0) target = $region73
    $region72: #{tpu_custom_call.1} parent=1 // pred_region
      %s3597 = ssub.s32 128, 128
      %3598 = vsyncadd [#allocation4], %s3597
      %s3600 = sshll.u32 [#allocation16], 4
      %s3601 = int_to_ptr.vmem [resolvable:$true] %s3600
      %3603 = dma.vmem_to_hbm [thread:$0]  %s3601, 128, %s9, [#allocation4]
    $region73: #{tpu_custom_call.1} parent=1 // pred_fallthru
      _
    // Predicated region
    $region74: #{tpu_custom_call.1} parent=1 // pred_check
      _
    $region75: #{tpu_custom_call.1} parent=1 // pred_check_branch
      %3605 = sbr.rel (0) target = $region77
    $region76: #{tpu_custom_call.1} parent=1 // pred_region
      %s3607 = ssub.s32 128, 128
      %3608 = vsyncadd [#allocation18], %s3607
      %s3610 = sshll.u32 [#allocation17], 4
      %s3611 = int_to_ptr.vmem [resolvable:$true] %s3610
      %3613 = dma.vmem_to_hbm [thread:$0]  %s3611, 128, %s10, [#allocation18]
    $region77: #{tpu_custom_call.1} parent=1 // pred_fallthru
      _
    // Predicated region
    $region78: #{tpu_custom_call.1} parent=1 // pred_check
      _
    $region79: #{tpu_custom_call.1} parent=1 // pred_check_branch
      %3615 = sbr.rel (0) target = $region81
    $region80: #{tpu_custom_call.1} parent=1 // pred_region
      %3616 = dma.done [#allocation4], 128
    $region81: #{tpu_custom_call.1} parent=1 // pred_fallthru
      _
    // Predicated region
    $region82: #{tpu_custom_call.1} parent=1 // pred_check
      _
    $region83: #{tpu_custom_call.1} parent=1 // pred_check_branch
      %3618 = sbr.rel (0) target = $region85
    $region84: #{tpu_custom_call.1} parent=1 // pred_region
      %3619 = dma.done [#allocation18], 128
    $region85: #{tpu_custom_call.1} parent=1 // pred_fallthru
      _
    %3620 = vsyncpa [#allocation3], 1
    %3621 = vsyncpa [#allocation6], 1
    %3622 = vsyncpa [#allocation9], 1
    %3623 = vsyncpa [#allocation12], 1
    %3624 = vsyncpa [#allocation15], 1
    %3625 = vsyncpa [#allocation4], 1
    %3626 = vsyncpa [#allocation18], 1

</llo_original>
